<compile_context>
chip_gen: v5e
topology: v5e:2x2
jax: 0.10.0
libtpu: 0.0.40
codegen_flags: <defaults>
</compile_context>

<pallas_src>
import functools

import jax
import jax.numpy as jnp
import numpy as np
from jax import lax
from jax.experimental import pallas as pl
from jax.experimental.pallas import tpu as pltpu

BN_EPS = 0.8
LRELU_SLOPE = 0.2
HIDDEN_DIMS = (128, 256, 512, 1024)


def _generator_kernel(z_ref,
                      w1, b1, g1, be1,
                      w2, b2, g2, be2,
                      w3_hbm, b3, g3, be3,
                      w4_hbm, b4, g4, be4,
                      w5_hbm, b5,
                      out_ref,
                      w3_v, w4_v, w5_v, dma_sem,
                      *, b_real, b_pad):
    # Kick off DMAs of the three large weight matrices (HBM -> VMEM scratch)
    # immediately so they overlap with the first two layers' compute.
    cp3 = pltpu.make_async_copy(w3_hbm, w3_v, dma_sem.at[0])
    cp4 = pltpu.make_async_copy(w4_hbm, w4_v, dma_sem.at[1])
    cp5 = pltpu.make_async_copy(w5_hbm, w5_v, dma_sem.at[2])
    cp3.start()
    cp4.start()
    cp5.start()

    inv_b = jnp.float32(1.0 / b_real)
    if b_real == b_pad:
        def stats(x):
            mean = jnp.sum(x, axis=0, keepdims=True) * inv_b
            ex2 = jnp.sum(x * x, axis=0, keepdims=True) * inv_b
            return mean, ex2 - mean * mean
    else:
        # Padded batch rows must not contribute to BatchNorm statistics.
        row = lax.broadcasted_iota(jnp.int32, (b_pad, 1), 0)
        mask = (row < b_real).astype(jnp.float32)

        def stats(x):
            xm = x * mask
            mean = jnp.sum(xm, axis=0, keepdims=True) * inv_b
            ex2 = jnp.sum(xm * x, axis=0, keepdims=True) * inv_b
            return mean, ex2 - mean * mean

    def linear(x, w, b_ref):
        return jnp.dot(x, w, preferred_element_type=jnp.float32) + b_ref[...]

    def bn_lrelu(x, g_ref, be_ref):
        # BatchNorm1d (training mode, eps=0.8) folded into a single affine.
        mean, var = stats(x)
        scale = g_ref[...] * lax.rsqrt(var + BN_EPS)
        shift = be_ref[...] - mean * scale
        y = x * scale + shift
        return jnp.where(y > 0, y, LRELU_SLOPE * y)  # LeakyReLU(0.2)

    h = bn_lrelu(linear(z_ref[...], w1[...], b1), g1, be1)
    h = bn_lrelu(linear(h, w2[...], b2), g2, be2)
    cp3.wait()
    h = bn_lrelu(linear(h, w3_v[...], b3), g3, be3)
    cp4.wait()
    h = bn_lrelu(linear(h, w4_v[...], b4), g4, be4)
    cp5.wait()
    out_ref[...] = jnp.tanh(linear(h, w5_v[...], b5))


def _round_up(x, m):
    return ((x + m - 1) // m) * m


def generator_forward(z, params, img_shape):
    """z: (B, latent_dim) float32 -> img: (B, *img_shape) float32."""
    B, latent_dim = z.shape
    out_dim = int(np.prod(img_shape))

    # Sublane-align batch (fp32 sublane = 8), lane-align latent (128).
    # Zero padding is mathematically inert: zero latent columns hit
    # zero-padded w1 rows, and padded batch rows are masked out of BN stats.
    b_pad = max(8, _round_up(B, 8))
    k_pad = max(128, _round_up(latent_dim, 128))
    z_p = jnp.pad(z, ((0, b_pad - B), (0, k_pad - latent_dim)))
    w1_p = jnp.pad(params[0]["w"], ((0, k_pad - latent_dim), (0, 0)))

    flat = [z_p, w1_p, params[0]["b"], params[0]["gamma"], params[0]["beta"]]
    for layer in params[1:-1]:
        flat.extend([layer["w"], layer["b"], layer["gamma"], layer["beta"]])
    flat.extend([params[-1]["w"], params[-1]["b"]])

    vmem_spec = pl.BlockSpec(memory_space=pltpu.MemorySpace.VMEM)
    hbm_spec = pl.BlockSpec(memory_space=pl.ANY)
    in_specs = [vmem_spec] * len(flat)
    # Big matrices stay in HBM; they are DMA'd manually inside the kernel so
    # the transfer overlaps with the first layers' compute.
    in_specs[9] = hbm_spec    # w3: (256, 512)
    in_specs[13] = hbm_spec   # w4: (512, 1024)
    in_specs[17] = hbm_spec   # w5: (1024, out_dim)

    w3_shape = params[2]["w"].shape
    w4_shape = params[3]["w"].shape
    w5_shape = params[4]["w"].shape
    scratch_shapes = [
        pltpu.VMEM(w3_shape, jnp.float32),
        pltpu.VMEM(w4_shape, jnp.float32),
        pltpu.VMEM(w5_shape, jnp.float32),
        pltpu.SemaphoreType.DMA((3,)),
    ]

    # VMEM budget: params + manual weight copies + activations, 2x margin,
    # capped well below v7x's 64 MiB physical VMEM.
    param_bytes = sum(int(np.prod(x.shape)) * 4 for x in flat)
    scratch_bytes = 4 * sum(int(np.prod(s)) for s in (w3_shape, w4_shape, w5_shape))
    act_bytes = 4 * b_pad * (k_pad + sum(HIDDEN_DIMS) + out_dim)
    vmem_limit = int(min(max(2 * (param_bytes + scratch_bytes + act_bytes),
                             16 * 1024 * 1024), 48 * 1024 * 1024))

    kernel = functools.partial(_generator_kernel, b_real=B, b_pad=b_pad)
    out_flat = pl.pallas_call(
        kernel,
        out_shape=jax.ShapeDtypeStruct((b_pad, out_dim), jnp.float32),
        in_specs=in_specs,
        out_specs=vmem_spec,
        scratch_shapes=scratch_shapes,
        compiler_params=pltpu.CompilerParams(vmem_limit_bytes=vmem_limit),
    )(*flat)
    return out_flat[:B].reshape((B,) + tuple(img_shape))


def init_params(key, latent_dim, img_shape):
    """Deterministic init mimicking PyTorch Linear default (U[-1/sqrt(fan_in), ...])."""
    dims = [latent_dim, 128, 256, 512, 1024, int(np.prod(img_shape))]
    params = []
    for i in range(len(dims) - 1):
        fan_in, fan_out = dims[i], dims[i + 1]
        key, kw, kb = jax.random.split(key, 3)
        bound = 1.0 / np.sqrt(fan_in)
        w = jax.random.uniform(kw, (fan_in, fan_out), jnp.float32, -bound, bound)
        b = jax.random.uniform(kb, (1, fan_out), jnp.float32, -bound, bound)
        layer = {"w": w, "b": b}
        if i < len(dims) - 2:  # hidden layers have BatchNorm (gamma=1, beta=0 default)
            layer["gamma"] = jnp.ones((1, fan_out), jnp.float32)
            layer["beta"] = jnp.zeros((1, fan_out), jnp.float32)
        params.append(layer)
    return params


def reference_forward(z, params, img_shape):
    """Pure-JAX reference of the same forward pass (for correctness check)."""
    h = z
    for layer in params[:-1]:
        h = h @ layer["w"] + layer["b"]
        mean = jnp.mean(h, axis=0, keepdims=True)
        var = jnp.mean((h - mean) ** 2, axis=0, keepdims=True)
        h = (h - mean) * jax.lax.rsqrt(var + BN_EPS)
        h = h * layer["gamma"] + layer["beta"]
        h = jnp.where(h > 0, h, LRELU_SLOPE * h)
    h = h @ params[-1]["w"] + params[-1]["b"]
    h = jnp.tanh(h)
    return h.reshape((z.shape[0],) + tuple(img_shape))


if __name__ == "__main__":
    key = jax.random.PRNGKey(0)
    latent_dim = 32
    img_shape = (1, 16, 16)   # (C, H, W); prod = 256
    batch = 2

    key, kz, kp = jax.random.split(key, 3)
    z = jax.random.normal(kz, (batch, latent_dim), jnp.float32)
    params = init_params(kp, latent_dim, img_shape)

    img = generator_forward(z, params, img_shape)
    img = jax.block_until_ready(img)

    ref = jax.block_until_ready(reference_forward(z, params, img_shape))
    assert img.shape == (batch,) + img_shape
    np.testing.assert_allclose(np.asarray(img), np.asarray(ref), rtol=1e-4, atol=1e-4)

    print("KERNEL_OK")
</pallas_src>

<mosaic_0001>
module attributes {stable_mosaic.version = 11 : i64} {
  func.func @_generator_kernel(%arg0: memref<8x128xf32, #tpu.memory_space<vmem>>, %arg1: memref<128x128xf32, #tpu.memory_space<vmem>>, %arg2: memref<1x128xf32, #tpu.memory_space<vmem>>, %arg3: memref<1x128xf32, #tpu.memory_space<vmem>>, %arg4: memref<1x128xf32, #tpu.memory_space<vmem>>, %arg5: memref<128x256xf32, #tpu.memory_space<vmem>>, %arg6: memref<1x256xf32, #tpu.memory_space<vmem>>, %arg7: memref<1x256xf32, #tpu.memory_space<vmem>>, %arg8: memref<1x256xf32, #tpu.memory_space<vmem>>, %arg9: memref<256x512xf32, #tpu.memory_space<any>>, %arg10: memref<1x512xf32, #tpu.memory_space<vmem>>, %arg11: memref<1x512xf32, #tpu.memory_space<vmem>>, %arg12: memref<1x512xf32, #tpu.memory_space<vmem>>, %arg13: memref<512x1024xf32, #tpu.memory_space<any>>, %arg14: memref<1x1024xf32, #tpu.memory_space<vmem>>, %arg15: memref<1x1024xf32, #tpu.memory_space<vmem>>, %arg16: memref<1x1024xf32, #tpu.memory_space<vmem>>, %arg17: memref<1024x256xf32, #tpu.memory_space<any>>, %arg18: memref<1x256xf32, #tpu.memory_space<vmem>>, %arg19: memref<8x256xf32, #tpu.memory_space<vmem>>, %arg20: memref<256x512xf32, #tpu.memory_space<vmem>>, %arg21: memref<512x1024xf32, #tpu.memory_space<vmem>>, %arg22: memref<1024x256xf32, #tpu.memory_space<vmem>>, %arg23: memref<3x!tpu.dma_semaphore, #tpu.memory_space<semaphore_mem>>) attributes {dimension_semantics = [], scalar_prefetch = 0 : i64, scratch_operands = 4 : i64, tpu.core_type = #tpu.core_type<tc>} {
    %c0_i32 = arith.constant 0 : i32
    %0 = tpu.memref_slice %arg23[%c0_i32] : memref<3x!tpu.dma_semaphore, #tpu.memory_space<semaphore_mem>> -> memref<1x!tpu.dma_semaphore, #tpu.memory_space<semaphore_mem>>
    %1 = tpu.memref_squeeze %0 : memref<1x!tpu.dma_semaphore, #tpu.memory_space<semaphore_mem>> -> memref<!tpu.dma_semaphore, #tpu.memory_space<semaphore_mem>>
    tpu.enqueue_dma source(%arg9 : memref<256x512xf32, #tpu.memory_space<any>>) target(%arg20 : memref<256x512xf32, #tpu.memory_space<vmem>>) target_semaphore(%1 : memref<!tpu.dma_semaphore, #tpu.memory_space<semaphore_mem>>)
    %c1_i32 = arith.constant 1 : i32
    %2 = tpu.memref_slice %arg23[%c1_i32] : memref<3x!tpu.dma_semaphore, #tpu.memory_space<semaphore_mem>> -> memref<1x!tpu.dma_semaphore, #tpu.memory_space<semaphore_mem>>
    %3 = tpu.memref_squeeze %2 : memref<1x!tpu.dma_semaphore, #tpu.memory_space<semaphore_mem>> -> memref<!tpu.dma_semaphore, #tpu.memory_space<semaphore_mem>>
    tpu.enqueue_dma source(%arg13 : memref<512x1024xf32, #tpu.memory_space<any>>) target(%arg21 : memref<512x1024xf32, #tpu.memory_space<vmem>>) target_semaphore(%3 : memref<!tpu.dma_semaphore, #tpu.memory_space<semaphore_mem>>)
    %c2_i32 = arith.constant 2 : i32
    %4 = tpu.memref_slice %arg23[%c2_i32] : memref<3x!tpu.dma_semaphore, #tpu.memory_space<semaphore_mem>> -> memref<1x!tpu.dma_semaphore, #tpu.memory_space<semaphore_mem>>
    %5 = tpu.memref_squeeze %4 : memref<1x!tpu.dma_semaphore, #tpu.memory_space<semaphore_mem>> -> memref<!tpu.dma_semaphore, #tpu.memory_space<semaphore_mem>>
    tpu.enqueue_dma source(%arg17 : memref<1024x256xf32, #tpu.memory_space<any>>) target(%arg22 : memref<1024x256xf32, #tpu.memory_space<vmem>>) target_semaphore(%5 : memref<!tpu.dma_semaphore, #tpu.memory_space<semaphore_mem>>)
    %6 = tpu.iota {dimensions = array<i32: 0>} : vector<8x1xi32>
    %c2_i32_0 = arith.constant 2 : i32
    %7 = vector.broadcast %c2_i32_0 : i32 to vector<8x1xi32>
    %8 = arith.cmpi slt, %6, %7 : vector<8x1xi32>
    %9 = arith.extui %8 : vector<8x1xi1> to vector<8x1xi32>
    %10 = arith.sitofp %9 : vector<8x1xi32> to vector<8x1xf32>
    %c0 = arith.constant 0 : index
    %c0_1 = arith.constant 0 : index
    %11 = vector.load %arg0[%c0, %c0_1] : memref<8x128xf32, #tpu.memory_space<vmem>>, vector<8x128xf32>
    %c0_2 = arith.constant 0 : index
    %c0_3 = arith.constant 0 : index
    %12 = vector.load %arg1[%c0_2, %c0_3] : memref<128x128xf32, #tpu.memory_space<vmem>>, vector<128x128xf32>
    %cst = arith.constant dense<0.000000e+00> : vector<8x128xf32>
    %13 = tpu.matmul %11, %12, %cst {dimension_numbers = #tpu.dot_dimension_numbers<[1], [0], [0], [1], [0, 0, 1, 1], [], []>} : vector<8x128xf32>, vector<128x128xf32>, vector<8x128xf32> -> vector<8x128xf32>
    %c0_4 = arith.constant 0 : index
    %c0_5 = arith.constant 0 : index
    %14 = vector.load %arg2[%c0_4, %c0_5] : memref<1x128xf32, #tpu.memory_space<vmem>>, vector<1x128xf32>
    %15 = vector.broadcast %14 : vector<1x128xf32> to vector<8x128xf32>
    %16 = arith.addf %13, %15 : vector<8x128xf32>
    %17 = vector.broadcast %10 : vector<8x1xf32> to vector<8x128xf32>
    %18 = arith.mulf %16, %17 : vector<8x128xf32>
    %cst_6 = arith.constant dense<0.000000e+00> : vector<128xf32>
    %19 = vector.multi_reduction <add>, %18, %cst_6 [0] : vector<8x128xf32> to vector<128xf32>
    %20 = vector.shape_cast %19 : vector<128xf32> to vector<1x128xf32>
    %cst_7 = arith.constant 5.000000e-01 : f32
    %21 = vector.broadcast %cst_7 : f32 to vector<1x128xf32>
    %22 = arith.mulf %20, %21 : vector<1x128xf32>
    %23 = arith.mulf %18, %16 : vector<8x128xf32>
    %cst_8 = arith.constant dense<0.000000e+00> : vector<128xf32>
    %24 = vector.multi_reduction <add>, %23, %cst_8 [0] : vector<8x128xf32> to vector<128xf32>
    %25 = vector.shape_cast %24 : vector<128xf32> to vector<1x128xf32>
    %cst_9 = arith.constant 5.000000e-01 : f32
    %26 = vector.broadcast %cst_9 : f32 to vector<1x128xf32>
    %27 = arith.mulf %25, %26 : vector<1x128xf32>
    %28 = arith.mulf %22, %22 : vector<1x128xf32>
    %29 = arith.subf %27, %28 : vector<1x128xf32>
    %c0_10 = arith.constant 0 : index
    %c0_11 = arith.constant 0 : index
    %30 = vector.load %arg3[%c0_10, %c0_11] : memref<1x128xf32, #tpu.memory_space<vmem>>, vector<1x128xf32>
    %cst_12 = arith.constant 8.000000e-01 : f32
    %31 = vector.broadcast %cst_12 : f32 to vector<1x128xf32>
    %32 = arith.addf %29, %31 : vector<1x128xf32>
    %33 = math.rsqrt %32 : vector<1x128xf32>
    %34 = arith.mulf %30, %33 : vector<1x128xf32>
    %c0_13 = arith.constant 0 : index
    %c0_14 = arith.constant 0 : index
    %35 = vector.load %arg4[%c0_13, %c0_14] : memref<1x128xf32, #tpu.memory_space<vmem>>, vector<1x128xf32>
    %36 = arith.mulf %22, %34 : vector<1x128xf32>
    %37 = arith.subf %35, %36 : vector<1x128xf32>
    %38 = vector.broadcast %34 : vector<1x128xf32> to vector<8x128xf32>
    %39 = arith.mulf %16, %38 : vector<8x128xf32>
    %40 = vector.broadcast %37 : vector<1x128xf32> to vector<8x128xf32>
    %41 = arith.addf %39, %40 : vector<8x128xf32>
    %cst_15 = arith.constant 0.000000e+00 : f32
    %42 = vector.broadcast %cst_15 : f32 to vector<8x128xf32>
    %43 = arith.cmpf ogt, %41, %42 : vector<8x128xf32>
    %cst_16 = arith.constant 2.000000e-01 : f32
    %44 = vector.broadcast %cst_16 : f32 to vector<8x128xf32>
    %45 = arith.mulf %44, %41 : vector<8x128xf32>
    %46 = arith.select %43, %41, %45 : vector<8x128xi1>, vector<8x128xf32>
    %c0_17 = arith.constant 0 : index
    %c0_18 = arith.constant 0 : index
    %47 = vector.load %arg5[%c0_17, %c0_18] : memref<128x256xf32, #tpu.memory_space<vmem>>, vector<128x256xf32>
    %cst_19 = arith.constant dense<0.000000e+00> : vector<8x256xf32>
    %48 = tpu.matmul %46, %47, %cst_19 {dimension_numbers = #tpu.dot_dimension_numbers<[1], [0], [0], [1], [0, 0, 1, 1], [], []>} : vector<8x128xf32>, vector<128x256xf32>, vector<8x256xf32> -> vector<8x256xf32>
    %c0_20 = arith.constant 0 : index
    %c0_21 = arith.constant 0 : index
    %49 = vector.load %arg6[%c0_20, %c0_21] : memref<1x256xf32, #tpu.memory_space<vmem>>, vector<1x256xf32>
    %50 = vector.broadcast %49 : vector<1x256xf32> to vector<8x256xf32>
    %51 = arith.addf %48, %50 : vector<8x256xf32>
    %52 = vector.broadcast %10 : vector<8x1xf32> to vector<8x256xf32>
    %53 = arith.mulf %51, %52 : vector<8x256xf32>
    %cst_22 = arith.constant dense<0.000000e+00> : vector<256xf32>
    %54 = vector.multi_reduction <add>, %53, %cst_22 [0] : vector<8x256xf32> to vector<256xf32>
    %55 = vector.shape_cast %54 : vector<256xf32> to vector<1x256xf32>
    %cst_23 = arith.constant 5.000000e-01 : f32
    %56 = vector.broadcast %cst_23 : f32 to vector<1x256xf32>
    %57 = arith.mulf %55, %56 : vector<1x256xf32>
    %58 = arith.mulf %53, %51 : vector<8x256xf32>
    %cst_24 = arith.constant dense<0.000000e+00> : vector<256xf32>
    %59 = vector.multi_reduction <add>, %58, %cst_24 [0] : vector<8x256xf32> to vector<256xf32>
    %60 = vector.shape_cast %59 : vector<256xf32> to vector<1x256xf32>
    %cst_25 = arith.constant 5.000000e-01 : f32
    %61 = vector.broadcast %cst_25 : f32 to vector<1x256xf32>
    %62 = arith.mulf %60, %61 : vector<1x256xf32>
    %63 = arith.mulf %57, %57 : vector<1x256xf32>
    %64 = arith.subf %62, %63 : vector<1x256xf32>
    %c0_26 = arith.constant 0 : index
    %c0_27 = arith.constant 0 : index
    %65 = vector.load %arg7[%c0_26, %c0_27] : memref<1x256xf32, #tpu.memory_space<vmem>>, vector<1x256xf32>
    %cst_28 = arith.constant 8.000000e-01 : f32
    %66 = vector.broadcast %cst_28 : f32 to vector<1x256xf32>
    %67 = arith.addf %64, %66 : vector<1x256xf32>
    %68 = math.rsqrt %67 : vector<1x256xf32>
    %69 = arith.mulf %65, %68 : vector<1x256xf32>
    %c0_29 = arith.constant 0 : index
    %c0_30 = arith.constant 0 : index
    %70 = vector.load %arg8[%c0_29, %c0_30] : memref<1x256xf32, #tpu.memory_space<vmem>>, vector<1x256xf32>
    %71 = arith.mulf %57, %69 : vector<1x256xf32>
    %72 = arith.subf %70, %71 : vector<1x256xf32>
    %73 = vector.broadcast %69 : vector<1x256xf32> to vector<8x256xf32>
    %74 = arith.mulf %51, %73 : vector<8x256xf32>
    %75 = vector.broadcast %72 : vector<1x256xf32> to vector<8x256xf32>
    %76 = arith.addf %74, %75 : vector<8x256xf32>
    %cst_31 = arith.constant 0.000000e+00 : f32
    %77 = vector.broadcast %cst_31 : f32 to vector<8x256xf32>
    %78 = arith.cmpf ogt, %76, %77 : vector<8x256xf32>
    %cst_32 = arith.constant 2.000000e-01 : f32
    %79 = vector.broadcast %cst_32 : f32 to vector<8x256xf32>
    %80 = arith.mulf %79, %76 : vector<8x256xf32>
    %81 = arith.select %78, %76, %80 : vector<8x256xi1>, vector<8x256xf32>
    %c0_i32_33 = arith.constant 0 : i32
    %82 = tpu.memref_slice %arg23[%c0_i32_33] : memref<3x!tpu.dma_semaphore, #tpu.memory_space<semaphore_mem>> -> memref<1x!tpu.dma_semaphore, #tpu.memory_space<semaphore_mem>>
    %83 = tpu.memref_squeeze %82 : memref<1x!tpu.dma_semaphore, #tpu.memory_space<semaphore_mem>> -> memref<!tpu.dma_semaphore, #tpu.memory_space<semaphore_mem>>
    tpu.wait_dma2 semaphore(%83 : memref<!tpu.dma_semaphore, #tpu.memory_space<semaphore_mem>>) src(%arg9 : memref<256x512xf32, #tpu.memory_space<any>>) dst(%arg20 : memref<256x512xf32, #tpu.memory_space<vmem>>)
    %c0_34 = arith.constant 0 : index
    %c0_35 = arith.constant 0 : index
    %84 = vector.load %arg20[%c0_34, %c0_35] : memref<256x512xf32, #tpu.memory_space<vmem>>, vector<256x512xf32>
    %cst_36 = arith.constant dense<0.000000e+00> : vector<8x512xf32>
    %85 = tpu.matmul %81, %84, %cst_36 {dimension_numbers = #tpu.dot_dimension_numbers<[1], [0], [0], [1], [0, 0, 1, 1], [], []>} : vector<8x256xf32>, vector<256x512xf32>, vector<8x512xf32> -> vector<8x512xf32>
    %c0_37 = arith.constant 0 : index
    %c0_38 = arith.constant 0 : index
    %86 = vector.load %arg10[%c0_37, %c0_38] : memref<1x512xf32, #tpu.memory_space<vmem>>, vector<1x512xf32>
    %87 = vector.broadcast %86 : vector<1x512xf32> to vector<8x512xf32>
    %88 = arith.addf %85, %87 : vector<8x512xf32>
    %89 = vector.broadcast %10 : vector<8x1xf32> to vector<8x512xf32>
    %90 = arith.mulf %88, %89 : vector<8x512xf32>
    %cst_39 = arith.constant dense<0.000000e+00> : vector<512xf32>
    %91 = vector.multi_reduction <add>, %90, %cst_39 [0] : vector<8x512xf32> to vector<512xf32>
    %92 = vector.shape_cast %91 : vector<512xf32> to vector<1x512xf32>
    %cst_40 = arith.constant 5.000000e-01 : f32
    %93 = vector.broadcast %cst_40 : f32 to vector<1x512xf32>
    %94 = arith.mulf %92, %93 : vector<1x512xf32>
    %95 = arith.mulf %90, %88 : vector<8x512xf32>
    %cst_41 = arith.constant dense<0.000000e+00> : vector<512xf32>
    %96 = vector.multi_reduction <add>, %95, %cst_41 [0] : vector<8x512xf32> to vector<512xf32>
    %97 = vector.shape_cast %96 : vector<512xf32> to vector<1x512xf32>
    %cst_42 = arith.constant 5.000000e-01 : f32
    %98 = vector.broadcast %cst_42 : f32 to vector<1x512xf32>
    %99 = arith.mulf %97, %98 : vector<1x512xf32>
    %100 = arith.mulf %94, %94 : vector<1x512xf32>
    %101 = arith.subf %99, %100 : vector<1x512xf32>
    %c0_43 = arith.constant 0 : index
    %c0_44 = arith.constant 0 : index
    %102 = vector.load %arg11[%c0_43, %c0_44] : memref<1x512xf32, #tpu.memory_space<vmem>>, vector<1x512xf32>
    %cst_45 = arith.constant 8.000000e-01 : f32
    %103 = vector.broadcast %cst_45 : f32 to vector<1x512xf32>
    %104 = arith.addf %101, %103 : vector<1x512xf32>
    %105 = math.rsqrt %104 : vector<1x512xf32>
    %106 = arith.mulf %102, %105 : vector<1x512xf32>
    %c0_46 = arith.constant 0 : index
    %c0_47 = arith.constant 0 : index
    %107 = vector.load %arg12[%c0_46, %c0_47] : memref<1x512xf32, #tpu.memory_space<vmem>>, vector<1x512xf32>
    %108 = arith.mulf %94, %106 : vector<1x512xf32>
    %109 = arith.subf %107, %108 : vector<1x512xf32>
    %110 = vector.broadcast %106 : vector<1x512xf32> to vector<8x512xf32>
    %111 = arith.mulf %88, %110 : vector<8x512xf32>
    %112 = vector.broadcast %109 : vector<1x512xf32> to vector<8x512xf32>
    %113 = arith.addf %111, %112 : vector<8x512xf32>
    %cst_48 = arith.constant 0.000000e+00 : f32
    %114 = vector.broadcast %cst_48 : f32 to vector<8x512xf32>
    %115 = arith.cmpf ogt, %113, %114 : vector<8x512xf32>
    %cst_49 = arith.constant 2.000000e-01 : f32
    %116 = vector.broadcast %cst_49 : f32 to vector<8x512xf32>
    %117 = arith.mulf %116, %113 : vector<8x512xf32>
    %118 = arith.select %115, %113, %117 : vector<8x512xi1>, vector<8x512xf32>
    %c1_i32_50 = arith.constant 1 : i32
    %119 = tpu.memref_slice %arg23[%c1_i32_50] : memref<3x!tpu.dma_semaphore, #tpu.memory_space<semaphore_mem>> -> memref<1x!tpu.dma_semaphore, #tpu.memory_space<semaphore_mem>>
    %120 = tpu.memref_squeeze %119 : memref<1x!tpu.dma_semaphore, #tpu.memory_space<semaphore_mem>> -> memref<!tpu.dma_semaphore, #tpu.memory_space<semaphore_mem>>
    tpu.wait_dma2 semaphore(%120 : memref<!tpu.dma_semaphore, #tpu.memory_space<semaphore_mem>>) src(%arg13 : memref<512x1024xf32, #tpu.memory_space<any>>) dst(%arg21 : memref<512x1024xf32, #tpu.memory_space<vmem>>)
    %c0_51 = arith.constant 0 : index
    %c0_52 = arith.constant 0 : index
    %121 = vector.load %arg21[%c0_51, %c0_52] : memref<512x1024xf32, #tpu.memory_space<vmem>>, vector<512x1024xf32>
    %cst_53 = arith.constant dense<0.000000e+00> : vector<8x1024xf32>
    %122 = tpu.matmul %118, %121, %cst_53 {dimension_numbers = #tpu.dot_dimension_numbers<[1], [0], [0], [1], [0, 0, 1, 1], [], []>} : vector<8x512xf32>, vector<512x1024xf32>, vector<8x1024xf32> -> vector<8x1024xf32>
    %c0_54 = arith.constant 0 : index
    %c0_55 = arith.constant 0 : index
    %123 = vector.load %arg14[%c0_54, %c0_55] : memref<1x1024xf32, #tpu.memory_space<vmem>>, vector<1x1024xf32>
    %124 = vector.broadcast %123 : vector<1x1024xf32> to vector<8x1024xf32>
    %125 = arith.addf %122, %124 : vector<8x1024xf32>
    %126 = vector.broadcast %10 : vector<8x1xf32> to vector<8x1024xf32>
    %127 = arith.mulf %125, %126 : vector<8x1024xf32>
    %cst_56 = arith.constant dense<0.000000e+00> : vector<1024xf32>
    %128 = vector.multi_reduction <add>, %127, %cst_56 [0] : vector<8x1024xf32> to vector<1024xf32>
    %129 = vector.shape_cast %128 : vector<1024xf32> to vector<1x1024xf32>
    %cst_57 = arith.constant 5.000000e-01 : f32
    %130 = vector.broadcast %cst_57 : f32 to vector<1x1024xf32>
    %131 = arith.mulf %129, %130 : vector<1x1024xf32>
    %132 = arith.mulf %127, %125 : vector<8x1024xf32>
    %cst_58 = arith.constant dense<0.000000e+00> : vector<1024xf32>
    %133 = vector.multi_reduction <add>, %132, %cst_58 [0] : vector<8x1024xf32> to vector<1024xf32>
    %134 = vector.shape_cast %133 : vector<1024xf32> to vector<1x1024xf32>
    %cst_59 = arith.constant 5.000000e-01 : f32
    %135 = vector.broadcast %cst_59 : f32 to vector<1x1024xf32>
    %136 = arith.mulf %134, %135 : vector<1x1024xf32>
    %137 = arith.mulf %131, %131 : vector<1x1024xf32>
    %138 = arith.subf %136, %137 : vector<1x1024xf32>
    %c0_60 = arith.constant 0 : index
    %c0_61 = arith.constant 0 : index
    %139 = vector.load %arg15[%c0_60, %c0_61] : memref<1x1024xf32, #tpu.memory_space<vmem>>, vector<1x1024xf32>
    %cst_62 = arith.constant 8.000000e-01 : f32
    %140 = vector.broadcast %cst_62 : f32 to vector<1x1024xf32>
    %141 = arith.addf %138, %140 : vector<1x1024xf32>
    %142 = math.rsqrt %141 : vector<1x1024xf32>
    %143 = arith.mulf %139, %142 : vector<1x1024xf32>
    %c0_63 = arith.constant 0 : index
    %c0_64 = arith.constant 0 : index
    %144 = vector.load %arg16[%c0_63, %c0_64] : memref<1x1024xf32, #tpu.memory_space<vmem>>, vector<1x1024xf32>
    %145 = arith.mulf %131, %143 : vector<1x1024xf32>
    %146 = arith.subf %144, %145 : vector<1x1024xf32>
    %147 = vector.broadcast %143 : vector<1x1024xf32> to vector<8x1024xf32>
    %148 = arith.mulf %125, %147 : vector<8x1024xf32>
    %149 = vector.broadcast %146 : vector<1x1024xf32> to vector<8x1024xf32>
    %150 = arith.addf %148, %149 : vector<8x1024xf32>
    %cst_65 = arith.constant 0.000000e+00 : f32
    %151 = vector.broadcast %cst_65 : f32 to vector<8x1024xf32>
    %152 = arith.cmpf ogt, %150, %151 : vector<8x1024xf32>
    %cst_66 = arith.constant 2.000000e-01 : f32
    %153 = vector.broadcast %cst_66 : f32 to vector<8x1024xf32>
    %154 = arith.mulf %153, %150 : vector<8x1024xf32>
    %155 = arith.select %152, %150, %154 : vector<8x1024xi1>, vector<8x1024xf32>
    %c2_i32_67 = arith.constant 2 : i32
    %156 = tpu.memref_slice %arg23[%c2_i32_67] : memref<3x!tpu.dma_semaphore, #tpu.memory_space<semaphore_mem>> -> memref<1x!tpu.dma_semaphore, #tpu.memory_space<semaphore_mem>>
    %157 = tpu.memref_squeeze %156 : memref<1x!tpu.dma_semaphore, #tpu.memory_space<semaphore_mem>> -> memref<!tpu.dma_semaphore, #tpu.memory_space<semaphore_mem>>
    tpu.wait_dma2 semaphore(%157 : memref<!tpu.dma_semaphore, #tpu.memory_space<semaphore_mem>>) src(%arg17 : memref<1024x256xf32, #tpu.memory_space<any>>) dst(%arg22 : memref<1024x256xf32, #tpu.memory_space<vmem>>)
    %c0_68 = arith.constant 0 : index
    %c0_69 = arith.constant 0 : index
    %158 = vector.load %arg22[%c0_68, %c0_69] : memref<1024x256xf32, #tpu.memory_space<vmem>>, vector<1024x256xf32>
    %cst_70 = arith.constant dense<0.000000e+00> : vector<8x256xf32>
    %159 = tpu.matmul %155, %158, %cst_70 {dimension_numbers = #tpu.dot_dimension_numbers<[1], [0], [0], [1], [0, 0, 1, 1], [], []>} : vector<8x1024xf32>, vector<1024x256xf32>, vector<8x256xf32> -> vector<8x256xf32>
    %c0_71 = arith.constant 0 : index
    %c0_72 = arith.constant 0 : index
    %160 = vector.load %arg18[%c0_71, %c0_72] : memref<1x256xf32, #tpu.memory_space<vmem>>, vector<1x256xf32>
    %161 = vector.broadcast %160 : vector<1x256xf32> to vector<8x256xf32>
    %162 = arith.addf %159, %161 : vector<8x256xf32>
    %163 = math.tanh %162 : vector<8x256xf32>
    %c0_73 = arith.constant 0 : index
    %c0_74 = arith.constant 0 : index
    %164 = vector.load %arg19[%c0_73, %c0_74] : memref<8x256xf32, #tpu.memory_space<vmem>>, vector<8x256xf32>
    tpu.vector_store %arg19[%c0_73, %c0_74], %163 {strides = array<i32>} : memref<8x256xf32, #tpu.memory_space<vmem>>, vector<8x256xf32>,
    return
  }
}

</mosaic_0001>

<llo_original>
// kernel: tpu_custom_call.1
$region0: #{tpu_custom_call.1}
  #allocation0 [shape = 'u32[]', space=smem, size = 0x4, offset = 0x4, fixed_abs, tag = 'smem constant byte address 0x4 - core index']
  #allocation1 [shape = 'u32[72,128]{1,0:T(1,128)}', space=vmem, size = 0x9000, scoped, tag = 'internal scratch']
  #allocation2 [shape = 'f32[256,512]{1,0:T(8,128)}', space=vmem, size = 0x80000, scoped, tag = 'scratch operand']
  #allocation3 [shape = 'f32[512,1024]{1,0:T(8,128)}', space=vmem, size = 0x200000, scoped, tag = 'scratch operand']
  #allocation4 [shape = 'f32[1024,256]{1,0:T(8,128)}', space=vmem, size = 0x100000, scoped, tag = 'scratch operand']
  #allocation5 [shape = 's32[3]{0}', space=sflag, size = 0xc, scoped, tag = 'scratch operand']
  #allocation33 [shape = 's32[]', space=sflag, size = 0x4, offset = 0, fixed_abs, tag = 'sflag constant byte address 0x0 - dummy sync flag']
  #allocation34 [shape = 's32[]', space=sflag, size = 0x4, offset = 0, fixed_abs, tag = 'sflag constant byte address 0x0 - dummy sync flag']
  #allocation35 [shape = 'u32[]', space=smem, size = 0x4, offset = 0x44, fixed_abs, tag = 'smem constant byte address 0x44 - assertion arg 0']
  #allocation36 [shape = 'u32[]', space=smem, size = 0x4, offset = 0x48, fixed_abs, tag = 'smem constant byte address 0x48 - assertion arg 1']
  #allocation37 [shape = 's32[]', space=sflag, size = 0x4, offset = 0, fixed_abs, tag = 'sflag constant byte address 0x0 - dummy sync flag']
  #allocation38 [shape = 's32[]', space=sflag, size = 0x4, offset = 0, fixed_abs, tag = 'sflag constant byte address 0x0 - dummy sync flag']
  #allocation39 [shape = 's32[]', space=sflag, size = 0x4, offset = 0, fixed_abs, tag = 'sflag constant byte address 0x0 - dummy sync flag']
  #allocation40 [shape = 's32[]', space=sflag, size = 0x4, offset = 0, fixed_abs, tag = 'sflag constant byte address 0x0 - dummy sync flag']
  %s0 = inlined_call_operand.hbm [shape: f32[8,128], index: 0, kind: input, shape index: {}]
  %s1 = inlined_call_operand.hbm [shape: f32[128,128], index: 1, kind: input, shape index: {}]
  %s2 = inlined_call_operand.hbm [shape: f32[1,128], index: 2, kind: input, shape index: {}]
  %s3 = inlined_call_operand.hbm [shape: f32[1,128], index: 3, kind: input, shape index: {}]
  %s4 = inlined_call_operand.hbm [shape: f32[1,128], index: 4, kind: input, shape index: {}]
  %s5 = inlined_call_operand.hbm [shape: f32[128,256], index: 5, kind: input, shape index: {}]
  %s6 = inlined_call_operand.hbm [shape: f32[1,256], index: 6, kind: input, shape index: {}]
  %s7 = inlined_call_operand.hbm [shape: f32[1,256], index: 7, kind: input, shape index: {}]
  %s8 = inlined_call_operand.hbm [shape: f32[1,256], index: 8, kind: input, shape index: {}]
  %s9 = inlined_call_operand.hbm [shape: f32[256,512], index: 9, kind: input, shape index: {}]
  %s10 = inlined_call_operand.hbm [shape: f32[1,512], index: 10, kind: input, shape index: {}]
  %s11 = inlined_call_operand.hbm [shape: f32[1,512], index: 11, kind: input, shape index: {}]
  %s12 = inlined_call_operand.hbm [shape: f32[1,512], index: 12, kind: input, shape index: {}]
  %s13 = inlined_call_operand.hbm [shape: f32[512,1024], index: 13, kind: input, shape index: {}]
  %s14 = inlined_call_operand.hbm [shape: f32[1,1024], index: 14, kind: input, shape index: {}]
  %s15 = inlined_call_operand.hbm [shape: f32[1,1024], index: 15, kind: input, shape index: {}]
  %s16 = inlined_call_operand.hbm [shape: f32[1,1024], index: 16, kind: input, shape index: {}]
  %s17 = inlined_call_operand.hbm [shape: f32[1024,256], index: 17, kind: input, shape index: {}]
  %s18 = inlined_call_operand.hbm [shape: f32[1,256], index: 18, kind: input, shape index: {}]
  %s19 = inlined_call_operand.hbm [shape: f32[8,256], index: 19, kind: output, shape index: {}]
  %s20 = sld [smem:[#allocation0]]
  $region150: #{tpu_custom_call.1} parent=0
    _
  %s22 = ssub.s32 1, %s20
  %s23 = scalar_select 0, %s22, %s20
  $region1: #{tpu_custom_call.1} parent=0
    #allocation6 [shape = 'u8[4096]{0}', space=vmem, size = 0x1000, scoped, tag = 'input window, operand 0, single buffered']
    #allocation7 [shape = 's32[1]{0}', space=sflag, size = 0x4, scoped, tag = 'scoped memory for tpu_custom_call.1']
    #allocation8 [shape = 's32[1]{0}', space=sflag, size = 0x4, scoped, tag = 'scoped memory for tpu_custom_call.1']
    #allocation9 [shape = 'u8[65536]{0}', space=vmem, size = 0x10000, scoped, tag = 'input window, operand 1, single buffered']
    #allocation10 [shape = 's32[1]{0}', space=sflag, size = 0x4, scoped, tag = 'scoped memory for tpu_custom_call.1']
    #allocation11 [shape = 'u8[512]{0}', space=vmem, size = 0x400, scoped, tag = 'input window, operand 2, single buffered']
    #allocation12 [shape = 'u8[512]{0}', space=vmem, size = 0x400, scoped, tag = 'input window, operand 3, single buffered']
    #allocation13 [shape = 's32[1]{0}', space=sflag, size = 0x4, scoped, tag = 'scoped memory for tpu_custom_call.1']
    #allocation14 [shape = 'u8[512]{0}', space=vmem, size = 0x400, scoped, tag = 'input window, operand 4, single buffered']
    #allocation15 [shape = 'u8[131072]{0}', space=vmem, size = 0x20000, scoped, tag = 'input window, operand 5, single buffered']
    #allocation16 [shape = 's32[1]{0}', space=sflag, size = 0x4, scoped, tag = 'scoped memory for tpu_custom_call.1']
    #allocation17 [shape = 'u8[1024]{0}', space=vmem, size = 0x400, scoped, tag = 'input window, operand 6, single buffered']
    #allocation18 [shape = 'u8[1024]{0}', space=vmem, size = 0x400, scoped, tag = 'input window, operand 7, single buffered']
    #allocation19 [shape = 's32[1]{0}', space=sflag, size = 0x4, scoped, tag = 'scoped memory for tpu_custom_call.1']
    #allocation20 [shape = 'u8[1024]{0}', space=vmem, size = 0x400, scoped, tag = 'input window, operand 8, single buffered']
    #allocation21 [shape = 'u8[2048]{0}', space=vmem, size = 0x800, scoped, tag = 'input window, operand 10, single buffered']
    #allocation22 [shape = 's32[1]{0}', space=sflag, size = 0x4, scoped, tag = 'scoped memory for tpu_custom_call.1']
    #allocation23 [shape = 'u8[2048]{0}', space=vmem, size = 0x800, scoped, tag = 'input window, operand 11, single buffered']
    #allocation24 [shape = 'u8[2048]{0}', space=vmem, size = 0x800, scoped, tag = 'input window, operand 12, single buffered']
    #allocation25 [shape = 's32[1]{0}', space=sflag, size = 0x4, scoped, tag = 'scoped memory for tpu_custom_call.1']
    #allocation26 [shape = 'u8[4096]{0}', space=vmem, size = 0x1000, scoped, tag = 'input window, operand 14, single buffered']
    #allocation27 [shape = 'u8[4096]{0}', space=vmem, size = 0x1000, scoped, tag = 'input window, operand 15, single buffered']
    #allocation28 [shape = 's32[1]{0}', space=sflag, size = 0x4, scoped, tag = 'scoped memory for tpu_custom_call.1']
    #allocation29 [shape = 'u8[4096]{0}', space=vmem, size = 0x1000, scoped, tag = 'input window, operand 16, single buffered']
    #allocation30 [shape = 'u8[1024]{0}', space=vmem, size = 0x400, scoped, tag = 'input window, operand 18, single buffered']
    #allocation31 [shape = 's32[1]{0}', space=sflag, size = 0x4, scoped, tag = 'scoped memory for tpu_custom_call.1']
    #allocation32 [shape = 'u8[8192]{0}', space=vmem, size = 0x2000, scoped, tag = 'output window, operand 0, single buffered']
    %24 = vsyncpa [#allocation7], 0
    %25 = vsyncpa [#allocation10], 0
    %26 = vsyncpa [#allocation13], 0
    %27 = vsyncpa [#allocation16], 0
    %28 = vsyncpa [#allocation19], 0
    %29 = vsyncpa [#allocation22], 0
    %30 = vsyncpa [#allocation25], 0
    %31 = vsyncpa [#allocation28], 0
    %32 = vsyncpa [#allocation31], 0
    %33 = vsyncpa [#allocation8], 0
    // Predicated region
    $region2: #{tpu_custom_call.1} parent=1 // pred_check
      _
    $region3: #{tpu_custom_call.1} parent=1 // pred_check_branch
      %35 = sbr.rel (0) target = $region5
    $region4: #{tpu_custom_call.1} parent=1 // pred_region
      %37 = vsyncadd [#allocation7], 0
      %s39 = sshll.u32 %s0, 4
      %s40 = int_to_ptr.hbm [resolvable:$true] %s39
      %s41 = sshll.u32 [#allocation6], 4
      %s42 = int_to_ptr.vmem [resolvable:$true] %s41
      %44 = dma.hbm_to_vmem [thread:$0]  %s40, 128, %s42, [#allocation7]
    $region5: #{tpu_custom_call.1} parent=1 // pred_fallthru
      _
    // Predicated region
    $region6: #{tpu_custom_call.1} parent=1 // pred_check
      _
    $region7: #{tpu_custom_call.1} parent=1 // pred_check_branch
      %46 = sbr.rel (0) target = $region9
    $region8: #{tpu_custom_call.1} parent=1 // pred_region
      %48 = vsyncadd [#allocation10], 0
      %s49 = sshll.u32 %s1, 4
      %s50 = int_to_ptr.hbm [resolvable:$true] %s49
      %s51 = sshll.u32 [#allocation9], 4
      %s52 = int_to_ptr.vmem [resolvable:$true] %s51
      %57 = dma.hbm_to_vmem [thread:$0]  %s50, 2048, %s52, [#allocation10], 128, 128, 8
    $region9: #{tpu_custom_call.1} parent=1 // pred_fallthru
      _
    // Predicated region
    $region10: #{tpu_custom_call.1} parent=1 // pred_check
      _
    $region11: #{tpu_custom_call.1} parent=1 // pred_check_branch
      %59 = sbr.rel (0) target = $region13
    $region12: #{tpu_custom_call.1} parent=1 // pred_region
      %61 = vsyncadd [#allocation10], 0
      %s63 = sshll.u32 %s2, 4
      %s64 = int_to_ptr.hbm [resolvable:$true] %s63
      %s65 = sshll.u32 [#allocation11], 4
      %s66 = int_to_ptr.vmem [resolvable:$true] %s65
      %68 = dma.hbm_to_vmem [thread:$0]  %s64, 16, %s66, [#allocation10]
    $region13: #{tpu_custom_call.1} parent=1 // pred_fallthru
      _
    // Predicated region
    $region14: #{tpu_custom_call.1} parent=1 // pred_check
      _
    $region15: #{tpu_custom_call.1} parent=1 // pred_check_branch
      %70 = sbr.rel (0) target = $region17
    $region16: #{tpu_custom_call.1} parent=1 // pred_region
      %72 = vsyncadd [#allocation13], 0
      %s74 = sshll.u32 %s3, 4
      %s75 = int_to_ptr.hbm [resolvable:$true] %s74
      %s76 = sshll.u32 [#allocation12], 4
      %s77 = int_to_ptr.vmem [resolvable:$true] %s76
      %79 = dma.hbm_to_vmem [thread:$0]  %s75, 16, %s77, [#allocation13]
    $region17: #{tpu_custom_call.1} parent=1 // pred_fallthru
      _
    // Predicated region
    $region18: #{tpu_custom_call.1} parent=1 // pred_check
      _
    $region19: #{tpu_custom_call.1} parent=1 // pred_check_branch
      %81 = sbr.rel (0) target = $region21
    $region20: #{tpu_custom_call.1} parent=1 // pred_region
      %83 = vsyncadd [#allocation13], 0
      %s85 = sshll.u32 %s4, 4
      %s86 = int_to_ptr.hbm [resolvable:$true] %s85
      %s87 = sshll.u32 [#allocation14], 4
      %s88 = int_to_ptr.vmem [resolvable:$true] %s87
      %90 = dma.hbm_to_vmem [thread:$0]  %s86, 16, %s88, [#allocation13]
    $region21: #{tpu_custom_call.1} parent=1 // pred_fallthru
      _
    // Predicated region
    $region22: #{tpu_custom_call.1} parent=1 // pred_check
      _
    $region23: #{tpu_custom_call.1} parent=1 // pred_check_branch
      %92 = sbr.rel (0) target = $region25
    $region24: #{tpu_custom_call.1} parent=1 // pred_region
      %94 = vsyncadd [#allocation16], 0
      %s95 = sshll.u32 %s5, 4
      %s96 = int_to_ptr.hbm [resolvable:$true] %s95
      %s97 = sshll.u32 [#allocation15], 4
      %s98 = int_to_ptr.vmem [resolvable:$true] %s97
      %103 = dma.hbm_to_vmem [thread:$0]  %s96, 4096, %s98, [#allocation16], 256, 256, 16
    $region25: #{tpu_custom_call.1} parent=1 // pred_fallthru
      _
    // Predicated region
    $region26: #{tpu_custom_call.1} parent=1 // pred_check
      _
    $region27: #{tpu_custom_call.1} parent=1 // pred_check_branch
      %105 = sbr.rel (0) target = $region29
    $region28: #{tpu_custom_call.1} parent=1 // pred_region
      %107 = vsyncadd [#allocation16], 0
      %s109 = sshll.u32 %s6, 4
      %s110 = int_to_ptr.hbm [resolvable:$true] %s109
      %s111 = sshll.u32 [#allocation17], 4
      %s112 = int_to_ptr.vmem [resolvable:$true] %s111
      %114 = dma.hbm_to_vmem [thread:$0]  %s110, 32, %s112, [#allocation16]
    $region29: #{tpu_custom_call.1} parent=1 // pred_fallthru
      _
    // Predicated region
    $region30: #{tpu_custom_call.1} parent=1 // pred_check
      _
    $region31: #{tpu_custom_call.1} parent=1 // pred_check_branch
      %116 = sbr.rel (0) target = $region33
    $region32: #{tpu_custom_call.1} parent=1 // pred_region
      %118 = vsyncadd [#allocation19], 0
      %s120 = sshll.u32 %s7, 4
      %s121 = int_to_ptr.hbm [resolvable:$true] %s120
      %s122 = sshll.u32 [#allocation18], 4
      %s123 = int_to_ptr.vmem [resolvable:$true] %s122
      %125 = dma.hbm_to_vmem [thread:$0]  %s121, 32, %s123, [#allocation19]
    $region33: #{tpu_custom_call.1} parent=1 // pred_fallthru
      _
    // Predicated region
    $region34: #{tpu_custom_call.1} parent=1 // pred_check
      _
    $region35: #{tpu_custom_call.1} parent=1 // pred_check_branch
      %127 = sbr.rel (0) target = $region37
    $region36: #{tpu_custom_call.1} parent=1 // pred_region
      %129 = vsyncadd [#allocation19], 0
      %s131 = sshll.u32 %s8, 4
      %s132 = int_to_ptr.hbm [resolvable:$true] %s131
      %s133 = sshll.u32 [#allocation20], 4
      %s134 = int_to_ptr.vmem [resolvable:$true] %s133
      %136 = dma.hbm_to_vmem [thread:$0]  %s132, 32, %s134, [#allocation19]
    $region37: #{tpu_custom_call.1} parent=1 // pred_fallthru
      _
    // Predicated region
    $region38: #{tpu_custom_call.1} parent=1 // pred_check
      _
    $region39: #{tpu_custom_call.1} parent=1 // pred_check_branch
      %138 = sbr.rel (0) target = $region41
    $region40: #{tpu_custom_call.1} parent=1 // pred_region
      %140 = vsyncadd [#allocation22], 0
      %s142 = sshll.u32 %s10, 4
      %s143 = int_to_ptr.hbm [resolvable:$true] %s142
      %s144 = sshll.u32 [#allocation21], 4
      %s145 = int_to_ptr.vmem [resolvable:$true] %s144
      %147 = dma.hbm_to_vmem [thread:$0]  %s143, 64, %s145, [#allocation22]
    $region41: #{tpu_custom_call.1} parent=1 // pred_fallthru
      _
    // Predicated region
    $region42: #{tpu_custom_call.1} parent=1 // pred_check
      _
    $region43: #{tpu_custom_call.1} parent=1 // pred_check_branch
      %149 = sbr.rel (0) target = $region45
    $region44: #{tpu_custom_call.1} parent=1 // pred_region
      %151 = vsyncadd [#allocation22], 0
      %s153 = sshll.u32 %s11, 4
      %s154 = int_to_ptr.hbm [resolvable:$true] %s153
      %s155 = sshll.u32 [#allocation23], 4
      %s156 = int_to_ptr.vmem [resolvable:$true] %s155
      %158 = dma.hbm_to_vmem [thread:$0]  %s154, 64, %s156, [#allocation22]
    $region45: #{tpu_custom_call.1} parent=1 // pred_fallthru
      _
    // Predicated region
    $region46: #{tpu_custom_call.1} parent=1 // pred_check
      _
    $region47: #{tpu_custom_call.1} parent=1 // pred_check_branch
      %160 = sbr.rel (0) target = $region49
    $region48: #{tpu_custom_call.1} parent=1 // pred_region
      %162 = vsyncadd [#allocation25], 0
      %s164 = sshll.u32 %s12, 4
      %s165 = int_to_ptr.hbm [resolvable:$true] %s164
      %s166 = sshll.u32 [#allocation24], 4
      %s167 = int_to_ptr.vmem [resolvable:$true] %s166
      %169 = dma.hbm_to_vmem [thread:$0]  %s165, 64, %s167, [#allocation25]
    $region49: #{tpu_custom_call.1} parent=1 // pred_fallthru
      _
    // Predicated region
    $region50: #{tpu_custom_call.1} parent=1 // pred_check
      _
    $region51: #{tpu_custom_call.1} parent=1 // pred_check_branch
      %171 = sbr.rel (0) target = $region53
    $region52: #{tpu_custom_call.1} parent=1 // pred_region
      %173 = vsyncadd [#allocation25], 0
      %s175 = sshll.u32 %s14, 4
      %s176 = int_to_ptr.hbm [resolvable:$true] %s175
      %s177 = sshll.u32 [#allocation26], 4
      %s178 = int_to_ptr.vmem [resolvable:$true] %s177
      %180 = dma.hbm_to_vmem [thread:$0]  %s176, 128, %s178, [#allocation25]
    $region53: #{tpu_custom_call.1} parent=1 // pred_fallthru
      _
    // Predicated region
    $region54: #{tpu_custom_call.1} parent=1 // pred_check
      _
    $region55: #{tpu_custom_call.1} parent=1 // pred_check_branch
      %182 = sbr.rel (0) target = $region57
    $region56: #{tpu_custom_call.1} parent=1 // pred_region
      %184 = vsyncadd [#allocation28], 0
      %s186 = sshll.u32 %s15, 4
      %s187 = int_to_ptr.hbm [resolvable:$true] %s186
      %s188 = sshll.u32 [#allocation27], 4
      %s189 = int_to_ptr.vmem [resolvable:$true] %s188
      %191 = dma.hbm_to_vmem [thread:$0]  %s187, 128, %s189, [#allocation28]
    $region57: #{tpu_custom_call.1} parent=1 // pred_fallthru
      _
    // Predicated region
    $region58: #{tpu_custom_call.1} parent=1 // pred_check
      _
    $region59: #{tpu_custom_call.1} parent=1 // pred_check_branch
      %193 = sbr.rel (0) target = $region61
    $region60: #{tpu_custom_call.1} parent=1 // pred_region
      %195 = vsyncadd [#allocation28], 0
      %s197 = sshll.u32 %s16, 4
      %s198 = int_to_ptr.hbm [resolvable:$true] %s197
      %s199 = sshll.u32 [#allocation29], 4
      %s200 = int_to_ptr.vmem [resolvable:$true] %s199
      %202 = dma.hbm_to_vmem [thread:$0]  %s198, 128, %s200, [#allocation28]
    $region61: #{tpu_custom_call.1} parent=1 // pred_fallthru
      _
    // Predicated region
    $region62: #{tpu_custom_call.1} parent=1 // pred_check
      _
    $region63: #{tpu_custom_call.1} parent=1 // pred_check_branch
      %204 = sbr.rel (0) target = $region65
    $region64: #{tpu_custom_call.1} parent=1 // pred_region
      %206 = vsyncadd [#allocation31], 0
      %s208 = sshll.u32 %s18, 4
      %s209 = int_to_ptr.hbm [resolvable:$true] %s208
      %s210 = sshll.u32 [#allocation30], 4
      %s211 = int_to_ptr.vmem [resolvable:$true] %s210
      %213 = dma.hbm_to_vmem [thread:$0]  %s209, 32, %s211, [#allocation31]
    $region65: #{tpu_custom_call.1} parent=1 // pred_fallthru
      _
    // Predicated region
    $region66: #{tpu_custom_call.1} parent=1 // pred_check
      _
    $region67: #{tpu_custom_call.1} parent=1 // pred_check_branch
      %215 = sbr.rel (0) target = $region69
    $region68: #{tpu_custom_call.1} parent=1 // pred_region
      %217 = dma.done [#allocation7], 128
    $region69: #{tpu_custom_call.1} parent=1 // pred_fallthru
      _
    // Predicated region
    $region70: #{tpu_custom_call.1} parent=1 // pred_check
      _
    $region71: #{tpu_custom_call.1} parent=1 // pred_check_branch
      %219 = sbr.rel (0) target = $region73
    $region72: #{tpu_custom_call.1} parent=1 // pred_region
      %221 = dma.done [#allocation10], 2048
    $region73: #{tpu_custom_call.1} parent=1 // pred_fallthru
      _
    // Predicated region
    $region74: #{tpu_custom_call.1} parent=1 // pred_check
      _
    $region75: #{tpu_custom_call.1} parent=1 // pred_check_branch
      %223 = sbr.rel (0) target = $region77
    $region76: #{tpu_custom_call.1} parent=1 // pred_region
      %225 = dma.done [#allocation10], 16
    $region77: #{tpu_custom_call.1} parent=1 // pred_fallthru
      _
    // Predicated region
    $region78: #{tpu_custom_call.1} parent=1 // pred_check
      _
    $region79: #{tpu_custom_call.1} parent=1 // pred_check_branch
      %227 = sbr.rel (0) target = $region81
    $region80: #{tpu_custom_call.1} parent=1 // pred_region
      %229 = dma.done [#allocation13], 16
    $region81: #{tpu_custom_call.1} parent=1 // pred_fallthru
      _
    // Predicated region
    $region82: #{tpu_custom_call.1} parent=1 // pred_check
      _
    $region83: #{tpu_custom_call.1} parent=1 // pred_check_branch
      %231 = sbr.rel (0) target = $region85
    $region84: #{tpu_custom_call.1} parent=1 // pred_region
      %233 = dma.done [#allocation13], 16
    $region85: #{tpu_custom_call.1} parent=1 // pred_fallthru
      _
    // Predicated region
    $region86: #{tpu_custom_call.1} parent=1 // pred_check
      _
    $region87: #{tpu_custom_call.1} parent=1 // pred_check_branch
      %235 = sbr.rel (0) target = $region89
    $region88: #{tpu_custom_call.1} parent=1 // pred_region
      %237 = dma.done [#allocation16], 4096
    $region89: #{tpu_custom_call.1} parent=1 // pred_fallthru
      _
    // Predicated region
    $region90: #{tpu_custom_call.1} parent=1 // pred_check
      _
    $region91: #{tpu_custom_call.1} parent=1 // pred_check_branch
      %239 = sbr.rel (0) target = $region93
    $region92: #{tpu_custom_call.1} parent=1 // pred_region
      %241 = dma.done [#allocation16], 32
    $region93: #{tpu_custom_call.1} parent=1 // pred_fallthru
      _
    // Predicated region
    $region94: #{tpu_custom_call.1} parent=1 // pred_check
      _
    $region95: #{tpu_custom_call.1} parent=1 // pred_check_branch
      %243 = sbr.rel (0) target = $region97
    $region96: #{tpu_custom_call.1} parent=1 // pred_region
      %245 = dma.done [#allocation19], 32
    $region97: #{tpu_custom_call.1} parent=1 // pred_fallthru
      _
    // Predicated region
    $region98: #{tpu_custom_call.1} parent=1 // pred_check
      _
    $region99: #{tpu_custom_call.1} parent=1 // pred_check_branch
      %247 = sbr.rel (0) target = $region101
    $region100: #{tpu_custom_call.1} parent=1 // pred_region
      %249 = dma.done [#allocation19], 32
    $region101: #{tpu_custom_call.1} parent=1 // pred_fallthru
      _
    // Predicated region
    $region102: #{tpu_custom_call.1} parent=1 // pred_check
      _
    $region103: #{tpu_custom_call.1} parent=1 // pred_check_branch
      %251 = sbr.rel (0) target = $region105
    $region104: #{tpu_custom_call.1} parent=1 // pred_region
      %253 = dma.done [#allocation22], 64
    $region105: #{tpu_custom_call.1} parent=1 // pred_fallthru
      _
    // Predicated region
    $region106: #{tpu_custom_call.1} parent=1 // pred_check
      _
    $region107: #{tpu_custom_call.1} parent=1 // pred_check_branch
      %255 = sbr.rel (0) target = $region109
    $region108: #{tpu_custom_call.1} parent=1 // pred_region
      %257 = dma.done [#allocation22], 64
    $region109: #{tpu_custom_call.1} parent=1 // pred_fallthru
      _
    // Predicated region
    $region110: #{tpu_custom_call.1} parent=1 // pred_check
      _
    $region111: #{tpu_custom_call.1} parent=1 // pred_check_branch
      %259 = sbr.rel (0) target = $region113
    $region112: #{tpu_custom_call.1} parent=1 // pred_region
      %261 = dma.done [#allocation25], 64
    $region113: #{tpu_custom_call.1} parent=1 // pred_fallthru
      _
    // Predicated region
    $region114: #{tpu_custom_call.1} parent=1 // pred_check
      _
    $region115: #{tpu_custom_call.1} parent=1 // pred_check_branch
      %263 = sbr.rel (0) target = $region117
    $region116: #{tpu_custom_call.1} parent=1 // pred_region
      %265 = dma.done [#allocation25], 128
    $region117: #{tpu_custom_call.1} parent=1 // pred_fallthru
      _
    // Predicated region
    $region118: #{tpu_custom_call.1} parent=1 // pred_check
      _
    $region119: #{tpu_custom_call.1} parent=1 // pred_check_branch
      %267 = sbr.rel (0) target = $region121
    $region120: #{tpu_custom_call.1} parent=1 // pred_region
      %269 = dma.done [#allocation28], 128
    $region121: #{tpu_custom_call.1} parent=1 // pred_fallthru
      _
    // Predicated region
    $region122: #{tpu_custom_call.1} parent=1 // pred_check
      _
    $region123: #{tpu_custom_call.1} parent=1 // pred_check_branch
      %271 = sbr.rel (0) target = $region125
    $region124: #{tpu_custom_call.1} parent=1 // pred_region
      %273 = dma.done [#allocation28], 128
    $region125: #{tpu_custom_call.1} parent=1 // pred_fallthru
      _
    // Predicated region
    $region126: #{tpu_custom_call.1} parent=1 // pred_check
      _
    $region127: #{tpu_custom_call.1} parent=1 // pred_check_branch
      %275 = sbr.rel (0) target = $region129
    $region128: #{tpu_custom_call.1} parent=1 // pred_region
      %277 = dma.done [#allocation31], 32
    $region129: #{tpu_custom_call.1} parent=1 // pred_fallthru
      _
    // Predicated region
    $region130: #{tpu_custom_call.1} parent=1 // pred_check
      _
    $region131: #{tpu_custom_call.1} parent=1 // pred_check_branch
      %279 = sbr.rel target = $region133
    $region132: #{tpu_custom_call.1} parent=1 // pred_region
      %280 = sst [smem:[#allocation35]] [#allocation34]
      %281 = sst [smem:[#allocation36]] [#allocation33]
    $region133: #{tpu_custom_call.1} parent=1 // pred_fallthru
      _
    %283 = shalt.err (0)
    %s285 = sshll.u32 %s9, 4
    %s286 = int_to_ptr.hbm [resolvable:$true] %s285
    %s287 = sshll.u32 [#allocation2], 4
    %s288 = int_to_ptr.vmem [resolvable:$true] %s287
    %290 = dma.hbm_to_vmem [thread:$0]  %s286, 16384, %s288, [#allocation5]
    %s291 = scalar_lea.sflag [#allocation5], 1
    // Predicated region
    $region134: #{tpu_custom_call.1} parent=1 // pred_check
      _
    $region135: #{tpu_custom_call.1} parent=1 // pred_check_branch
      %293 = sbr.rel target = $region137
    $region136: #{tpu_custom_call.1} parent=1 // pred_region
      %294 = sst [smem:[#allocation35]] [#allocation38]
      %295 = sst [smem:[#allocation36]] [#allocation37]
    $region137: #{tpu_custom_call.1} parent=1 // pred_fallthru
      _
    %297 = shalt.err (0)
    %s299 = sshll.u32 %s13, 4
    %s300 = int_to_ptr.hbm [resolvable:$true] %s299
    %s301 = sshll.u32 [#allocation3], 4
    %s302 = int_to_ptr.vmem [resolvable:$true] %s301
    %304 = dma.hbm_to_vmem [thread:$0]  %s300, 65536, %s302, %s291
    %s305 = scalar_lea.sflag [#allocation5], 2
    // Predicated region
    $region138: #{tpu_custom_call.1} parent=1 // pred_check
      _
    $region139: #{tpu_custom_call.1} parent=1 // pred_check_branch
      %307 = sbr.rel target = $region141
    $region140: #{tpu_custom_call.1} parent=1 // pred_region
      %308 = sst [smem:[#allocation35]] [#allocation40]
      %309 = sst [smem:[#allocation36]] [#allocation39]
    $region141: #{tpu_custom_call.1} parent=1 // pred_fallthru
      _
    %311 = shalt.err (0)
    %s313 = sshll.u32 %s17, 4
    %s314 = int_to_ptr.hbm [resolvable:$true] %s313
    %s315 = sshll.u32 [#allocation4], 4
    %s316 = int_to_ptr.vmem [resolvable:$true] %s315
    %318 = dma.hbm_to_vmem [thread:$0]  %s314, 32768, %s316, %s305
    %v319 = vlaneseq
    %v320 = vshrl.u32 %v319, 7
    %vm321 = vcmp.lt.s32.totalorder %v320, 2
    %v322 = vsel %vm321, 1, 0
    %v323 = vcvt.s32.f32 %v322
    %v324 = vld [vmem:[#allocation6] sm:$0xff]
    %v325 = vld [vmem:[#allocation9] sm:$0xff]
    %v326 = vld [vmem:[#allocation9 + $0x8] sm:$0xff]
    %v327 = vld [vmem:[#allocation9 + $0x10] sm:$0xff]
    %v328 = vld [vmem:[#allocation9 + $0x18] sm:$0xff]
    %v329 = vld [vmem:[#allocation9 + $0x20] sm:$0xff]
    %v330 = vld [vmem:[#allocation9 + $0x28] sm:$0xff]
    %v331 = vld [vmem:[#allocation9 + $0x30] sm:$0xff]
    %v332 = vld [vmem:[#allocation9 + $0x38] sm:$0xff]
    %v333 = vld [vmem:[#allocation9 + $0x40] sm:$0xff]
    %v334 = vld [vmem:[#allocation9 + $0x48] sm:$0xff]
    %v335 = vld [vmem:[#allocation9 + $0x50] sm:$0xff]
    %v336 = vld [vmem:[#allocation9 + $0x58] sm:$0xff]
    %v337 = vld [vmem:[#allocation9 + $0x60] sm:$0xff]
    %v338 = vld [vmem:[#allocation9 + $0x68] sm:$0xff]
    %v339 = vld [vmem:[#allocation9 + $0x70] sm:$0xff]
    %v340 = vld [vmem:[#allocation9 + $0x78] sm:$0xff]
    %v341 = vld [vmem:[#allocation11] sm:$0x1]
    %v343 = vperm.slane %v341, 0
    %345 = vmatpush.msra.mxu0 %v340
    %346 = vmatpush.msra.mxu0 %v339
    %347 = vmatpush.msra.mxu0 %v338
    %348 = vmatpush.msra.mxu0 %v337
    %349 = vmatpush.msra.mxu0 %v336
    %350 = vmatpush.msra.mxu0 %v335
    %351 = vmatpush.msra.mxu0 %v334
    %352 = vmatpush.msra.mxu0 %v333
    %353 = vmatpush.msra.mxu0 %v332
    %354 = vmatpush.msra.mxu0 %v331
    %355 = vmatpush.msra.mxu0 %v330
    %356 = vmatpush.msra.mxu0 %v329
    %357 = vmatpush.msra.mxu0 %v328
    %358 = vmatpush.msra.mxu0 %v327
    %359 = vmatpush.msra.mxu0 %v326
    %360 = vmatpush.msra.mxu0 %v325
    %361 = vmatmul.f32.gmra.mxu0 %v324
    %v362 = vpop.f32.mrf.mxu0
    %v363 = vadd.f32 %v343, %v362
    %364 = vdwg.mxu0
    %v365 = vmul.f32 %v363, %v323
    %v366 = vrot.slane %v365, 4
    %v367 = vadd.f32 %v365, %v366
    %v368 = vrot.slane %v367, 2
    %v369 = vadd.f32 %v367, %v368
    %v370 = vrot.slane %v369, 1
    %v371 = vadd.f32 %v369, %v370
    %v372 = vmul.f32 %v371, 0.5
    %v373 = vmul.f32 %v365, %v363
    %v374 = vrot.slane %v373, 4
    %v375 = vadd.f32 %v373, %v374
    %v376 = vrot.slane %v375, 2
    %v377 = vadd.f32 %v375, %v376
    %v378 = vrot.slane %v377, 1
    %v379 = vadd.f32 %v377, %v378
    %v380 = vmul.f32 %v379, 0.5
    %v381 = vmul.f32 %v372, %v372
    %v382 = vsub.f32 %v380, %v381
    %v383 = vld [vmem:[#allocation12] sm:$0x1]
    %v384 = vadd.f32 %v382, 0.8
    %v385 = vrsqrt.pop %v384
    %v386 = vmul.f32 %v385, %v384
    %v387 = vmul.f32 %v386, %v385
    %v388 = vmul.f32 0.5, %v387
    %v389 = vsub.f32 1.5, %v388
    %v390 = vmul.f32 %v385, %v389
    %vm391 = vweird.f32 %v384
    %vm392 = vweird.f32 %v385
    %vm393 = vmor %vm391, %vm392
    %v394 = vsel %vm393, %v385, %v390
    %v395 = vmul.f32 %v383, %v394
    %v396 = vld [vmem:[#allocation14] sm:$0x1]
    %v397 = vmul.f32 %v372, %v395
    %v398 = vsub.f32 %v396, %v397
    %v400 = vperm.slane %v395, 0
    %v402 = vmul.f32 %v363, %v400
    %v404 = vperm.slane %v398, 0
    %v406 = vadd.f32 %v402, %v404
    %vm407 = vcmp.gt.f32.partialorder %v406, 0.0
    %v408 = vmul.f32 %v406, 0.2
    %v409 = vsel %vm407, %v406, %v408
    %v410 = vld [vmem:[#allocation15] sm:$0xff]
    %v411 = vld [vmem:[#allocation15 + $0x8] sm:$0xff]
    %v412 = vld [vmem:[#allocation15 + $0x10] sm:$0xff]
    %v413 = vld [vmem:[#allocation15 + $0x18] sm:$0xff]
    %v414 = vld [vmem:[#allocation15 + $0x20] sm:$0xff]
    %v415 = vld [vmem:[#allocation15 + $0x28] sm:$0xff]
    %v416 = vld [vmem:[#allocation15 + $0x30] sm:$0xff]
    %v417 = vld [vmem:[#allocation15 + $0x38] sm:$0xff]
    %v418 = vld [vmem:[#allocation15 + $0x40] sm:$0xff]
    %v419 = vld [vmem:[#allocation15 + $0x48] sm:$0xff]
    %v420 = vld [vmem:[#allocation15 + $0x50] sm:$0xff]
    %v421 = vld [vmem:[#allocation15 + $0x58] sm:$0xff]
    %v422 = vld [vmem:[#allocation15 + $0x60] sm:$0xff]
    %v423 = vld [vmem:[#allocation15 + $0x68] sm:$0xff]
    %v424 = vld [vmem:[#allocation15 + $0x70] sm:$0xff]
    %v425 = vld [vmem:[#allocation15 + $0x78] sm:$0xff]
    %v426 = vld [vmem:[#allocation15 + $0x80] sm:$0xff]
    %v427 = vld [vmem:[#allocation15 + $0x88] sm:$0xff]
    %v428 = vld [vmem:[#allocation15 + $0x90] sm:$0xff]
    %v429 = vld [vmem:[#allocation15 + $0x98] sm:$0xff]
    %v430 = vld [vmem:[#allocation15 + $0xa0] sm:$0xff]
    %v431 = vld [vmem:[#allocation15 + $0xa8] sm:$0xff]
    %v432 = vld [vmem:[#allocation15 + $0xb0] sm:$0xff]
    %v433 = vld [vmem:[#allocation15 + $0xb8] sm:$0xff]
    %v434 = vld [vmem:[#allocation15 + $0xc0] sm:$0xff]
    %v435 = vld [vmem:[#allocation15 + $0xc8] sm:$0xff]
    %v436 = vld [vmem:[#allocation15 + $0xd0] sm:$0xff]
    %v437 = vld [vmem:[#allocation15 + $0xd8] sm:$0xff]
    %v438 = vld [vmem:[#allocation15 + $0xe0] sm:$0xff]
    %v439 = vld [vmem:[#allocation15 + $0xe8] sm:$0xff]
    %v440 = vld [vmem:[#allocation15 + $0xf0] sm:$0xff]
    %v441 = vld [vmem:[#allocation15 + $0xf8] sm:$0xff]
    %v442 = vld [vmem:[#allocation17] sm:$0x3]
    %v444 = vperm.slane %v442, 0
    %v445 = vperm.slane %v442, 1
    %448 = vmatpush.msra.mxu0 %v440
    %449 = vmatpush.msra.mxu0 %v438
    %450 = vmatpush.msra.mxu0 %v436
    %451 = vmatpush.msra.mxu0 %v434
    %452 = vmatpush.msra.mxu0 %v432
    %453 = vmatpush.msra.mxu0 %v430
    %454 = vmatpush.msra.mxu0 %v428
    %455 = vmatpush.msra.mxu0 %v426
    %456 = vmatpush.msra.mxu0 %v424
    %457 = vmatpush.msra.mxu0 %v422
    %458 = vmatpush.msra.mxu0 %v420
    %459 = vmatpush.msra.mxu0 %v418
    %460 = vmatpush.msra.mxu0 %v416
    %461 = vmatpush.msra.mxu0 %v414
    %462 = vmatpush.msra.mxu0 %v412
    %463 = vmatpush.msra.mxu0 %v410
    %464 = vmatmul.f32.gmra.mxu0 %v409
    %v465 = vpop.f32.mrf.mxu0
    %v466 = vadd.f32 %v444, %v465
    %467 = vdwg.mxu0
    %468 = vmatpush.msra.mxu0 %v441
    %469 = vmatpush.msra.mxu0 %v439
    %470 = vmatpush.msra.mxu0 %v437
    %471 = vmatpush.msra.mxu0 %v435
    %472 = vmatpush.msra.mxu0 %v433
    %473 = vmatpush.msra.mxu0 %v431
    %474 = vmatpush.msra.mxu0 %v429
    %475 = vmatpush.msra.mxu0 %v427
    %476 = vmatpush.msra.mxu0 %v425
    %477 = vmatpush.msra.mxu0 %v423
    %478 = vmatpush.msra.mxu0 %v421
    %479 = vmatpush.msra.mxu0 %v419
    %480 = vmatpush.msra.mxu0 %v417
    %481 = vmatpush.msra.mxu0 %v415
    %482 = vmatpush.msra.mxu0 %v413
    %483 = vmatpush.msra.mxu0 %v411
    %484 = vmatmul.f32.gmra.mxu0 %v409
    %v485 = vpop.f32.mrf.mxu0
    %v486 = vadd.f32 %v445, %v485
    %487 = vdwg.mxu0
    %v488 = vmul.f32 %v466, %v323
    %v489 = vmul.f32 %v486, %v323
    %v490 = vrot.slane %v488, 4
    %v491 = vadd.f32 %v488, %v490
    %v492 = vrot.slane %v491, 2
    %v493 = vadd.f32 %v491, %v492
    %v494 = vrot.slane %v493, 1
    %v495 = vadd.f32 %v493, %v494
    %v496 = vrot.slane %v489, 4
    %v497 = vadd.f32 %v489, %v496
    %v498 = vrot.slane %v497, 2
    %v499 = vadd.f32 %v497, %v498
    %v500 = vrot.slane %v499, 1
    %v501 = vadd.f32 %v499, %v500
    %v502 = vmul.f32 %v495, 0.5
    %v503 = vmul.f32 %v501, 0.5
    %v504 = vmul.f32 %v488, %v466
    %v505 = vmul.f32 %v489, %v486
    %v506 = vrot.slane %v504, 4
    %v507 = vadd.f32 %v504, %v506
    %v508 = vrot.slane %v507, 2
    %v509 = vadd.f32 %v507, %v508
    %v510 = vrot.slane %v509, 1
    %v511 = vadd.f32 %v509, %v510
    %v512 = vrot.slane %v505, 4
    %v513 = vadd.f32 %v505, %v512
    %v514 = vrot.slane %v513, 2
    %v515 = vadd.f32 %v513, %v514
    %v516 = vrot.slane %v515, 1
    %v517 = vadd.f32 %v515, %v516
    %v518 = vmul.f32 %v511, 0.5
    %v519 = vmul.f32 %v517, 0.5
    %v520 = vmul.f32 %v502, %v502
    %v521 = vmul.f32 %v503, %v503
    %v522 = vsub.f32 %v518, %v520
    %v523 = vsub.f32 %v519, %v521
    %v524 = vld [vmem:[#allocation18] sm:$0x3]
    %v525 = vadd.f32 %v522, 0.8
    %v526 = vadd.f32 %v523, 0.8
    %v527 = vrsqrt.pop %v525
    %v528 = vmul.f32 %v527, %v525
    %v529 = vmul.f32 %v528, %v527
    %v530 = vmul.f32 0.5, %v529
    %v531 = vsub.f32 1.5, %v530
    %v532 = vmul.f32 %v527, %v531
    %vm533 = vweird.f32 %v525
    %vm534 = vweird.f32 %v527
    %vm535 = vmor %vm533, %vm534
    %v536 = vsel %vm535, %v527, %v532
    %v537 = vrsqrt.pop %v526
    %v538 = vmul.f32 %v537, %v526
    %v539 = vmul.f32 %v538, %v537
    %v540 = vmul.f32 0.5, %v539
    %v541 = vsub.f32 1.5, %v540
    %v542 = vmul.f32 %v537, %v541
    %vm543 = vweird.f32 %v526
    %vm544 = vweird.f32 %v537
    %vm545 = vmor %vm543, %vm544
    %v546 = vsel %vm545, %v537, %v542
    %v549 = vrot.slane %v546, 7
    %vm550 = vcmask 1040384
    %v551 = vsel %vm550, %v536, %v549
    %v553 = vmul.f32 %v524, %v551
    %v554 = vld [vmem:[#allocation20] sm:$0x3]
    %v556 = vperm.slane %v553, 0
    %v557 = vperm.slane %v553, 1
    %v560 = vmul.f32 %v502, %v556
    %v561 = vmul.f32 %v503, %v557
    %v564 = vrot.slane %v561, 7
    %v565 = vsel %vm550, %v560, %v564
    %v567 = vsub.f32 %v554, %v565
    %v568 = vmul.f32 %v466, %v556
    %v569 = vmul.f32 %v486, %v557
    %v571 = vperm.slane %v567, 0
    %v572 = vperm.slane %v567, 1
    %v575 = vadd.f32 %v568, %v571
    %v576 = vadd.f32 %v569, %v572
    %vm577 = vcmp.gt.f32.partialorder %v575, 0.0
    %vm578 = vcmp.gt.f32.partialorder %v576, 0.0
    %v579 = vmul.f32 %v575, 0.2
    %v580 = vmul.f32 %v576, 0.2
    %v581 = vsel %vm577, %v575, %v579
    %v582 = vsel %vm578, %v576, %v580
    %s583 = smul.u32 8, 32
    %s584 = smul.u32 %s583, 4
    %s585 = sshll.u32 %s584, 4
    %586 = dma.done [#allocation5], %s585
    %v587 = vld [vmem:[#allocation2] sm:$0xff]
    %v588 = vld [vmem:[#allocation2 + $0x8] sm:$0xff]
    %v589 = vld [vmem:[#allocation2 + $0x10] sm:$0xff]
    %v590 = vld [vmem:[#allocation2 + $0x18] sm:$0xff]
    %v591 = vld [vmem:[#allocation2 + $0x20] sm:$0xff]
    %v592 = vld [vmem:[#allocation2 + $0x28] sm:$0xff]
    %v593 = vld [vmem:[#allocation2 + $0x30] sm:$0xff]
    %v594 = vld [vmem:[#allocation2 + $0x38] sm:$0xff]
    %v595 = vld [vmem:[#allocation2 + $0x40] sm:$0xff]
    %v596 = vld [vmem:[#allocation2 + $0x48] sm:$0xff]
    %v597 = vld [vmem:[#allocation2 + $0x50] sm:$0xff]
    %v598 = vld [vmem:[#allocation2 + $0x58] sm:$0xff]
    %v599 = vld [vmem:[#allocation2 + $0x60] sm:$0xff]
    %v600 = vld [vmem:[#allocation2 + $0x68] sm:$0xff]
    %v601 = vld [vmem:[#allocation2 + $0x70] sm:$0xff]
    %v602 = vld [vmem:[#allocation2 + $0x78] sm:$0xff]
    %v603 = vld [vmem:[#allocation2 + $0x80] sm:$0xff]
    %v604 = vld [vmem:[#allocation2 + $0x88] sm:$0xff]
    %v605 = vld [vmem:[#allocation2 + $0x90] sm:$0xff]
    %v606 = vld [vmem:[#allocation2 + $0x98] sm:$0xff]
    %v607 = vld [vmem:[#allocation2 + $0xa0] sm:$0xff]
    %v608 = vld [vmem:[#allocation2 + $0xa8] sm:$0xff]
    %v609 = vld [vmem:[#allocation2 + $0xb0] sm:$0xff]
    %v610 = vld [vmem:[#allocation2 + $0xb8] sm:$0xff]
    %v611 = vld [vmem:[#allocation2 + $0xc0] sm:$0xff]
    %v612 = vld [vmem:[#allocation2 + $0xc8] sm:$0xff]
    %v613 = vld [vmem:[#allocation2 + $0xd0] sm:$0xff]
    %v614 = vld [vmem:[#allocation2 + $0xd8] sm:$0xff]
    %v615 = vld [vmem:[#allocation2 + $0xe0] sm:$0xff]
    %v616 = vld [vmem:[#allocation2 + $0xe8] sm:$0xff]
    %v617 = vld [vmem:[#allocation2 + $0xf0] sm:$0xff]
    %v618 = vld [vmem:[#allocation2 + $0xf8] sm:$0xff]
    %v619 = vld [vmem:[#allocation2 + $0x100] sm:$0xff]
    %v620 = vld [vmem:[#allocation2 + $0x108] sm:$0xff]
    %v621 = vld [vmem:[#allocation2 + $0x110] sm:$0xff]
    %v622 = vld [vmem:[#allocation2 + $0x118] sm:$0xff]
    %v623 = vld [vmem:[#allocation2 + $0x120] sm:$0xff]
    %v624 = vld [vmem:[#allocation2 + $0x128] sm:$0xff]
    %v625 = vld [vmem:[#allocation2 + $0x130] sm:$0xff]
    %v626 = vld [vmem:[#allocation2 + $0x138] sm:$0xff]
    %v627 = vld [vmem:[#allocation2 + $0x140] sm:$0xff]
    %v628 = vld [vmem:[#allocation2 + $0x148] sm:$0xff]
    %v629 = vld [vmem:[#allocation2 + $0x150] sm:$0xff]
    %v630 = vld [vmem:[#allocation2 + $0x158] sm:$0xff]
    %v631 = vld [vmem:[#allocation2 + $0x160] sm:$0xff]
    %v632 = vld [vmem:[#allocation2 + $0x168] sm:$0xff]
    %v633 = vld [vmem:[#allocation2 + $0x170] sm:$0xff]
    %v634 = vld [vmem:[#allocation2 + $0x178] sm:$0xff]
    %v635 = vld [vmem:[#allocation2 + $0x180] sm:$0xff]
    %v636 = vld [vmem:[#allocation2 + $0x188] sm:$0xff]
    %v637 = vld [vmem:[#allocation2 + $0x190] sm:$0xff]
    %v638 = vld [vmem:[#allocation2 + $0x198] sm:$0xff]
    %v639 = vld [vmem:[#allocation2 + $0x1a0] sm:$0xff]
    %v640 = vld [vmem:[#allocation2 + $0x1a8] sm:$0xff]
    %v641 = vld [vmem:[#allocation2 + $0x1b0] sm:$0xff]
    %v642 = vld [vmem:[#allocation2 + $0x1b8] sm:$0xff]
    %v643 = vld [vmem:[#allocation2 + $0x1c0] sm:$0xff]
    %v644 = vld [vmem:[#allocation2 + $0x1c8] sm:$0xff]
    %v645 = vld [vmem:[#allocation2 + $0x1d0] sm:$0xff]
    %v646 = vld [vmem:[#allocation2 + $0x1d8] sm:$0xff]
    %v647 = vld [vmem:[#allocation2 + $0x1e0] sm:$0xff]
    %v648 = vld [vmem:[#allocation2 + $0x1e8] sm:$0xff]
    %v649 = vld [vmem:[#allocation2 + $0x1f0] sm:$0xff]
    %v650 = vld [vmem:[#allocation2 + $0x1f8] sm:$0xff]
    %v651 = vld [vmem:[#allocation2 + $0x200] sm:$0xff]
    %v652 = vld [vmem:[#allocation2 + $0x208] sm:$0xff]
    %v653 = vld [vmem:[#allocation2 + $0x210] sm:$0xff]
    %v654 = vld [vmem:[#allocation2 + $0x218] sm:$0xff]
    %v655 = vld [vmem:[#allocation2 + $0x220] sm:$0xff]
    %v656 = vld [vmem:[#allocation2 + $0x228] sm:$0xff]
    %v657 = vld [vmem:[#allocation2 + $0x230] sm:$0xff]
    %v658 = vld [vmem:[#allocation2 + $0x238] sm:$0xff]
    %v659 = vld [vmem:[#allocation2 + $0x240] sm:$0xff]
    %v660 = vld [vmem:[#allocation2 + $0x248] sm:$0xff]
    %v661 = vld [vmem:[#allocation2 + $0x250] sm:$0xff]
    %v662 = vld [vmem:[#allocation2 + $0x258] sm:$0xff]
    %v663 = vld [vmem:[#allocation2 + $0x260] sm:$0xff]
    %v664 = vld [vmem:[#allocation2 + $0x268] sm:$0xff]
    %v665 = vld [vmem:[#allocation2 + $0x270] sm:$0xff]
    %v666 = vld [vmem:[#allocation2 + $0x278] sm:$0xff]
    %v667 = vld [vmem:[#allocation2 + $0x280] sm:$0xff]
    %v668 = vld [vmem:[#allocation2 + $0x288] sm:$0xff]
    %v669 = vld [vmem:[#allocation2 + $0x290] sm:$0xff]
    %v670 = vld [vmem:[#allocation2 + $0x298] sm:$0xff]
    %v671 = vld [vmem:[#allocation2 + $0x2a0] sm:$0xff]
    %v672 = vld [vmem:[#allocation2 + $0x2a8] sm:$0xff]
    %v673 = vld [vmem:[#allocation2 + $0x2b0] sm:$0xff]
    %v674 = vld [vmem:[#allocation2 + $0x2b8] sm:$0xff]
    %v675 = vld [vmem:[#allocation2 + $0x2c0] sm:$0xff]
    %v676 = vld [vmem:[#allocation2 + $0x2c8] sm:$0xff]
    %v677 = vld [vmem:[#allocation2 + $0x2d0] sm:$0xff]
    %v678 = vld [vmem:[#allocation2 + $0x2d8] sm:$0xff]
    %v679 = vld [vmem:[#allocation2 + $0x2e0] sm:$0xff]
    %v680 = vld [vmem:[#allocation2 + $0x2e8] sm:$0xff]
    %v681 = vld [vmem:[#allocation2 + $0x2f0] sm:$0xff]
    %v682 = vld [vmem:[#allocation2 + $0x2f8] sm:$0xff]
    %v683 = vld [vmem:[#allocation2 + $0x300] sm:$0xff]
    %v684 = vld [vmem:[#allocation2 + $0x308] sm:$0xff]
    %v685 = vld [vmem:[#allocation2 + $0x310] sm:$0xff]
    %v686 = vld [vmem:[#allocation2 + $0x318] sm:$0xff]
    %v687 = vld [vmem:[#allocation2 + $0x320] sm:$0xff]
    %v688 = vld [vmem:[#allocation2 + $0x328] sm:$0xff]
    %v689 = vld [vmem:[#allocation2 + $0x330] sm:$0xff]
    %v690 = vld [vmem:[#allocation2 + $0x338] sm:$0xff]
    %v691 = vld [vmem:[#allocation2 + $0x340] sm:$0xff]
    %v692 = vld [vmem:[#allocation2 + $0x348] sm:$0xff]
    %v693 = vld [vmem:[#allocation2 + $0x350] sm:$0xff]
    %v694 = vld [vmem:[#allocation2 + $0x358] sm:$0xff]
    %v695 = vld [vmem:[#allocation2 + $0x360] sm:$0xff]
    %v696 = vld [vmem:[#allocation2 + $0x368] sm:$0xff]
    %v697 = vld [vmem:[#allocation2 + $0x370] sm:$0xff]
    %v698 = vld [vmem:[#allocation2 + $0x378] sm:$0xff]
    %v699 = vld [vmem:[#allocation2 + $0x380] sm:$0xff]
    %v700 = vld [vmem:[#allocation2 + $0x388] sm:$0xff]
    %v701 = vld [vmem:[#allocation2 + $0x390] sm:$0xff]
    %v702 = vld [vmem:[#allocation2 + $0x398] sm:$0xff]
    %v703 = vld [vmem:[#allocation2 + $0x3a0] sm:$0xff]
    %v704 = vld [vmem:[#allocation2 + $0x3a8] sm:$0xff]
    %v705 = vld [vmem:[#allocation2 + $0x3b0] sm:$0xff]
    %v706 = vld [vmem:[#allocation2 + $0x3b8] sm:$0xff]
    %v707 = vld [vmem:[#allocation2 + $0x3c0] sm:$0xff]
    %v708 = vld [vmem:[#allocation2 + $0x3c8] sm:$0xff]
    %v709 = vld [vmem:[#allocation2 + $0x3d0] sm:$0xff]
    %v710 = vld [vmem:[#allocation2 + $0x3d8] sm:$0xff]
    %v711 = vld [vmem:[#allocation2 + $0x3e0] sm:$0xff]
    %v712 = vld [vmem:[#allocation2 + $0x3e8] sm:$0xff]
    %v713 = vld [vmem:[#allocation2 + $0x3f0] sm:$0xff]
    %v714 = vld [vmem:[#allocation2 + $0x3f8] sm:$0xff]
    %v715 = vld [vmem:[#allocation21] sm:$0xf]
    %v717 = vperm.slane %v715, 0
    %v718 = vperm.slane %v715, 1
    %v719 = vperm.slane %v715, 2
    %v720 = vperm.slane %v715, 3
    %725 = vmatpush.msra.mxu0 %v647
    %726 = vmatpush.msra.mxu0 %v643
    %727 = vmatpush.msra.mxu0 %v639
    %728 = vmatpush.msra.mxu0 %v635
    %729 = vmatpush.msra.mxu0 %v631
    %730 = vmatpush.msra.mxu0 %v627
    %731 = vmatpush.msra.mxu0 %v623
    %732 = vmatpush.msra.mxu0 %v619
    %733 = vmatpush.msra.mxu0 %v615
    %734 = vmatpush.msra.mxu0 %v611
    %735 = vmatpush.msra.mxu0 %v607
    %736 = vmatpush.msra.mxu0 %v603
    %737 = vmatpush.msra.mxu0 %v599
    %738 = vmatpush.msra.mxu0 %v595
    %739 = vmatpush.msra.mxu0 %v591
    %740 = vmatpush.msra.mxu0 %v587
    %741 = vmatmul.f32.gmra.mxu0 %v581
    %v742 = vpop.f32.mrf.mxu0
    %v743 = vadd.f32 %v717, %v742
    %744 = vdwg.mxu0
    %745 = vmatpush.msra.mxu0 %v711
    %746 = vmatpush.msra.mxu0 %v707
    %747 = vmatpush.msra.mxu0 %v703
    %748 = vmatpush.msra.mxu0 %v699
    %749 = vmatpush.msra.mxu0 %v695
    %750 = vmatpush.msra.mxu0 %v691
    %751 = vmatpush.msra.mxu0 %v687
    %752 = vmatpush.msra.mxu0 %v683
    %753 = vmatpush.msra.mxu0 %v679
    %754 = vmatpush.msra.mxu0 %v675
    %755 = vmatpush.msra.mxu0 %v671
    %756 = vmatpush.msra.mxu0 %v667
    %757 = vmatpush.msra.mxu0 %v663
    %758 = vmatpush.msra.mxu0 %v659
    %759 = vmatpush.msra.mxu0 %v655
    %760 = vmatpush.msra.mxu0 %v651
    %761 = vmatmul.f32.gmra.mxu0 %v582
    %v762 = vpop.f32.mrf.mxu0
    %v763 = vadd.f32 %v743, %v762
    %764 = vdwg.mxu0
    %765 = vmatpush.msra.mxu0 %v648
    %766 = vmatpush.msra.mxu0 %v644
    %767 = vmatpush.msra.mxu0 %v640
    %768 = vmatpush.msra.mxu0 %v636
    %769 = vmatpush.msra.mxu0 %v632
    %770 = vmatpush.msra.mxu0 %v628
    %771 = vmatpush.msra.mxu0 %v624
    %772 = vmatpush.msra.mxu0 %v620
    %773 = vmatpush.msra.mxu0 %v616
    %774 = vmatpush.msra.mxu0 %v612
    %775 = vmatpush.msra.mxu0 %v608
    %776 = vmatpush.msra.mxu0 %v604
    %777 = vmatpush.msra.mxu0 %v600
    %778 = vmatpush.msra.mxu0 %v596
    %779 = vmatpush.msra.mxu0 %v592
    %780 = vmatpush.msra.mxu0 %v588
    %781 = vmatmul.f32.gmra.mxu0 %v581
    %v782 = vpop.f32.mrf.mxu0
    %v783 = vadd.f32 %v718, %v782
    %784 = vdwg.mxu0
    %785 = vmatpush.msra.mxu0 %v712
    %786 = vmatpush.msra.mxu0 %v708
    %787 = vmatpush.msra.mxu0 %v704
    %788 = vmatpush.msra.mxu0 %v700
    %789 = vmatpush.msra.mxu0 %v696
    %790 = vmatpush.msra.mxu0 %v692
    %791 = vmatpush.msra.mxu0 %v688
    %792 = vmatpush.msra.mxu0 %v684
    %793 = vmatpush.msra.mxu0 %v680
    %794 = vmatpush.msra.mxu0 %v676
    %795 = vmatpush.msra.mxu0 %v672
    %796 = vmatpush.msra.mxu0 %v668
    %797 = vmatpush.msra.mxu0 %v664
    %798 = vmatpush.msra.mxu0 %v660
    %799 = vmatpush.msra.mxu0 %v656
    %800 = vmatpush.msra.mxu0 %v652
    %801 = vmatmul.f32.gmra.mxu0 %v582
    %v802 = vpop.f32.mrf.mxu0
    %v803 = vadd.f32 %v783, %v802
    %804 = vdwg.mxu0
    %805 = vmatpush.msra.mxu0 %v649
    %806 = vmatpush.msra.mxu0 %v645
    %807 = vmatpush.msra.mxu0 %v641
    %808 = vmatpush.msra.mxu0 %v637
    %809 = vmatpush.msra.mxu0 %v633
    %810 = vmatpush.msra.mxu0 %v629
    %811 = vmatpush.msra.mxu0 %v625
    %812 = vmatpush.msra.mxu0 %v621
    %813 = vmatpush.msra.mxu0 %v617
    %814 = vmatpush.msra.mxu0 %v613
    %815 = vmatpush.msra.mxu0 %v609
    %816 = vmatpush.msra.mxu0 %v605
    %817 = vmatpush.msra.mxu0 %v601
    %818 = vmatpush.msra.mxu0 %v597
    %819 = vmatpush.msra.mxu0 %v593
    %820 = vmatpush.msra.mxu0 %v589
    %821 = vmatmul.f32.gmra.mxu0 %v581
    %v822 = vpop.f32.mrf.mxu0
    %v823 = vadd.f32 %v719, %v822
    %824 = vdwg.mxu0
    %825 = vmatpush.msra.mxu0 %v713
    %826 = vmatpush.msra.mxu0 %v709
    %827 = vmatpush.msra.mxu0 %v705
    %828 = vmatpush.msra.mxu0 %v701
    %829 = vmatpush.msra.mxu0 %v697
    %830 = vmatpush.msra.mxu0 %v693
    %831 = vmatpush.msra.mxu0 %v689
    %832 = vmatpush.msra.mxu0 %v685
    %833 = vmatpush.msra.mxu0 %v681
    %834 = vmatpush.msra.mxu0 %v677
    %835 = vmatpush.msra.mxu0 %v673
    %836 = vmatpush.msra.mxu0 %v669
    %837 = vmatpush.msra.mxu0 %v665
    %838 = vmatpush.msra.mxu0 %v661
    %839 = vmatpush.msra.mxu0 %v657
    %840 = vmatpush.msra.mxu0 %v653
    %841 = vmatmul.f32.gmra.mxu0 %v582
    %v842 = vpop.f32.mrf.mxu0
    %v843 = vadd.f32 %v823, %v842
    %844 = vdwg.mxu0
    %845 = vmatpush.msra.mxu0 %v650
    %846 = vmatpush.msra.mxu0 %v646
    %847 = vmatpush.msra.mxu0 %v642
    %848 = vmatpush.msra.mxu0 %v638
    %849 = vmatpush.msra.mxu0 %v634
    %850 = vmatpush.msra.mxu0 %v630
    %851 = vmatpush.msra.mxu0 %v626
    %852 = vmatpush.msra.mxu0 %v622
    %853 = vmatpush.msra.mxu0 %v618
    %854 = vmatpush.msra.mxu0 %v614
    %855 = vmatpush.msra.mxu0 %v610
    %856 = vmatpush.msra.mxu0 %v606
    %857 = vmatpush.msra.mxu0 %v602
    %858 = vmatpush.msra.mxu0 %v598
    %859 = vmatpush.msra.mxu0 %v594
    %860 = vmatpush.msra.mxu0 %v590
    %861 = vmatmul.f32.gmra.mxu0 %v581
    %v862 = vpop.f32.mrf.mxu0
    %v863 = vadd.f32 %v720, %v862
    %864 = vdwg.mxu0
    %865 = vmatpush.msra.mxu0 %v714
    %866 = vmatpush.msra.mxu0 %v710
    %867 = vmatpush.msra.mxu0 %v706
    %868 = vmatpush.msra.mxu0 %v702
    %869 = vmatpush.msra.mxu0 %v698
    %870 = vmatpush.msra.mxu0 %v694
    %871 = vmatpush.msra.mxu0 %v690
    %872 = vmatpush.msra.mxu0 %v686
    %873 = vmatpush.msra.mxu0 %v682
    %874 = vmatpush.msra.mxu0 %v678
    %875 = vmatpush.msra.mxu0 %v674
    %876 = vmatpush.msra.mxu0 %v670
    %877 = vmatpush.msra.mxu0 %v666
    %878 = vmatpush.msra.mxu0 %v662
    %879 = vmatpush.msra.mxu0 %v658
    %880 = vmatpush.msra.mxu0 %v654
    %881 = vmatmul.f32.gmra.mxu0 %v582
    %v882 = vpop.f32.mrf.mxu0
    %v883 = vadd.f32 %v863, %v882
    %884 = vdwg.mxu0
    %v885 = vmul.f32 %v763, %v323
    %v886 = vmul.f32 %v803, %v323
    %v887 = vmul.f32 %v843, %v323
    %v888 = vmul.f32 %v883, %v323
    %v889 = vrot.slane %v885, 4
    %v890 = vadd.f32 %v885, %v889
    %v891 = vrot.slane %v890, 2
    %v892 = vadd.f32 %v890, %v891
    %v893 = vrot.slane %v892, 1
    %v894 = vadd.f32 %v892, %v893
    %v895 = vrot.slane %v886, 4
    %v896 = vadd.f32 %v886, %v895
    %v897 = vrot.slane %v896, 2
    %v898 = vadd.f32 %v896, %v897
    %v899 = vrot.slane %v898, 1
    %v900 = vadd.f32 %v898, %v899
    %v901 = vrot.slane %v887, 4
    %v902 = vadd.f32 %v887, %v901
    %v903 = vrot.slane %v902, 2
    %v904 = vadd.f32 %v902, %v903
    %v905 = vrot.slane %v904, 1
    %v906 = vadd.f32 %v904, %v905
    %v907 = vrot.slane %v888, 4
    %v908 = vadd.f32 %v888, %v907
    %v909 = vrot.slane %v908, 2
    %v910 = vadd.f32 %v908, %v909
    %v911 = vrot.slane %v910, 1
    %v912 = vadd.f32 %v910, %v911
    %v913 = vmul.f32 %v894, 0.5
    %v914 = vmul.f32 %v900, 0.5
    %v915 = vmul.f32 %v906, 0.5
    %v916 = vmul.f32 %v912, 0.5
    %v917 = vmul.f32 %v885, %v763
    %v918 = vmul.f32 %v886, %v803
    %v919 = vmul.f32 %v887, %v843
    %v920 = vmul.f32 %v888, %v883
    %v921 = vrot.slane %v917, 4
    %v922 = vadd.f32 %v917, %v921
    %v923 = vrot.slane %v922, 2
    %v924 = vadd.f32 %v922, %v923
    %v925 = vrot.slane %v924, 1
    %v926 = vadd.f32 %v924, %v925
    %v927 = vrot.slane %v918, 4
    %v928 = vadd.f32 %v918, %v927
    %v929 = vrot.slane %v928, 2
    %v930 = vadd.f32 %v928, %v929
    %v931 = vrot.slane %v930, 1
    %v932 = vadd.f32 %v930, %v931
    %v933 = vrot.slane %v919, 4
    %v934 = vadd.f32 %v919, %v933
    %v935 = vrot.slane %v934, 2
    %v936 = vadd.f32 %v934, %v935
    %v937 = vrot.slane %v936, 1
    %v938 = vadd.f32 %v936, %v937
    %v939 = vrot.slane %v920, 4
    %v940 = vadd.f32 %v920, %v939
    %v941 = vrot.slane %v940, 2
    %v942 = vadd.f32 %v940, %v941
    %v943 = vrot.slane %v942, 1
    %v944 = vadd.f32 %v942, %v943
    %v945 = vmul.f32 %v926, 0.5
    %v946 = vmul.f32 %v932, 0.5
    %v947 = vmul.f32 %v938, 0.5
    %v948 = vmul.f32 %v944, 0.5
    %v949 = vmul.f32 %v913, %v913
    %v950 = vmul.f32 %v914, %v914
    %v951 = vmul.f32 %v915, %v915
    %v952 = vmul.f32 %v916, %v916
    %v953 = vsub.f32 %v945, %v949
    %v954 = vsub.f32 %v946, %v950
    %v955 = vsub.f32 %v947, %v951
    %v956 = vsub.f32 %v948, %v952
    %v957 = vld [vmem:[#allocation23] sm:$0xf]
    %v958 = vadd.f32 %v953, 0.8
    %v959 = vadd.f32 %v954, 0.8
    %v960 = vadd.f32 %v955, 0.8
    %v961 = vadd.f32 %v956, 0.8
    %v962 = vrsqrt.pop %v958
    %v963 = vmul.f32 %v962, %v958
    %v964 = vmul.f32 %v963, %v962
    %v965 = vmul.f32 0.5, %v964
    %v966 = vsub.f32 1.5, %v965
    %v967 = vmul.f32 %v962, %v966
    %vm968 = vweird.f32 %v958
    %vm969 = vweird.f32 %v962
    %vm970 = vmor %vm968, %vm969
    %v971 = vsel %vm970, %v962, %v967
    %v972 = vrsqrt.pop %v959
    %v973 = vmul.f32 %v972, %v959
    %v974 = vmul.f32 %v973, %v972
    %v975 = vmul.f32 0.5, %v974
    %v976 = vsub.f32 1.5, %v975
    %v977 = vmul.f32 %v972, %v976
    %vm978 = vweird.f32 %v959
    %vm979 = vweird.f32 %v972
    %vm980 = vmor %vm978, %vm979
    %v981 = vsel %vm980, %v972, %v977
    %v982 = vrsqrt.pop %v960
    %v983 = vmul.f32 %v982, %v960
    %v984 = vmul.f32 %v983, %v982
    %v985 = vmul.f32 0.5, %v984
    %v986 = vsub.f32 1.5, %v985
    %v987 = vmul.f32 %v982, %v986
    %vm988 = vweird.f32 %v960
    %vm989 = vweird.f32 %v982
    %vm990 = vmor %vm988, %vm989
    %v991 = vsel %vm990, %v982, %v987
    %v992 = vrsqrt.pop %v961
    %v993 = vmul.f32 %v992, %v961
    %v994 = vmul.f32 %v993, %v992
    %v995 = vmul.f32 0.5, %v994
    %v996 = vsub.f32 1.5, %v995
    %v997 = vmul.f32 %v992, %v996
    %vm998 = vweird.f32 %v961
    %vm999 = vweird.f32 %v992
    %vm1000 = vmor %vm998, %vm999
    %v1001 = vsel %vm1000, %v992, %v997
    %v1006 = vrot.slane %v981, 7
    %v1007 = vrot.slane %v991, 6
    %v1008 = vrot.slane %v1001, 5
    %v1009 = vsel %vm550, %v971, %v1006
    %vm1010 = vcmask 1042434
    %v1011 = vsel %vm1010, %v1007, %v1008
    %vm1012 = vcmask 1041408
    %v1013 = vsel %vm1012, %v1009, %v1011
    %v1015 = vmul.f32 %v957, %v1013
    %v1016 = vld [vmem:[#allocation24] sm:$0xf]
    %v1018 = vperm.slane %v1015, 0
    %v1019 = vperm.slane %v1015, 1
    %v1020 = vperm.slane %v1015, 2
    %v1021 = vperm.slane %v1015, 3
    %v1026 = vmul.f32 %v913, %v1018
    %v1027 = vmul.f32 %v914, %v1019
    %v1028 = vmul.f32 %v915, %v1020
    %v1029 = vmul.f32 %v916, %v1021
    %v1034 = vrot.slane %v1027, 7
    %v1035 = vrot.slane %v1028, 6
    %v1036 = vrot.slane %v1029, 5
    %v1037 = vsel %vm550, %v1026, %v1034
    %v1038 = vsel %vm1010, %v1035, %v1036
    %v1039 = vsel %vm1012, %v1037, %v1038
    %v1041 = vsub.f32 %v1016, %v1039
    %v1042 = vmul.f32 %v763, %v1018
    %v1043 = vmul.f32 %v803, %v1019
    %v1044 = vmul.f32 %v843, %v1020
    %v1045 = vmul.f32 %v883, %v1021
    %v1047 = vperm.slane %v1041, 0
    %v1048 = vperm.slane %v1041, 1
    %v1049 = vperm.slane %v1041, 2
    %v1050 = vperm.slane %v1041, 3
    %v1055 = vadd.f32 %v1042, %v1047
    %v1056 = vadd.f32 %v1043, %v1048
    %v1057 = vadd.f32 %v1044, %v1049
    %v1058 = vadd.f32 %v1045, %v1050
    %vm1059 = vcmp.gt.f32.partialorder %v1055, 0.0
    %vm1060 = vcmp.gt.f32.partialorder %v1056, 0.0
    %vm1061 = vcmp.gt.f32.partialorder %v1057, 0.0
    %vm1062 = vcmp.gt.f32.partialorder %v1058, 0.0
    %v1063 = vmul.f32 %v1055, 0.2
    %v1064 = vmul.f32 %v1056, 0.2
    %v1065 = vmul.f32 %v1057, 0.2
    %v1066 = vmul.f32 %v1058, 0.2
    %v1067 = vsel %vm1059, %v1055, %v1063
    %v1068 = vsel %vm1060, %v1056, %v1064
    %v1069 = vsel %vm1061, %v1057, %v1065
    %v1070 = vsel %vm1062, %v1058, %v1066
    %s1071 = smul.u32 8, 64
    %s1072 = smul.u32 %s1071, 8
    %s1073 = sshll.u32 %s1072, 4
    %1074 = dma.done %s291, %s1073
    %v1075 = vld [vmem:[#allocation3] sm:$0xff]
    %v1076 = vld [vmem:[#allocation3 + $0x8] sm:$0xff]
    %v1077 = vld [vmem:[#allocation3 + $0x10] sm:$0xff]
    %v1078 = vld [vmem:[#allocation3 + $0x18] sm:$0xff]
    %v1079 = vld [vmem:[#allocation3 + $0x20] sm:$0xff]
    %v1080 = vld [vmem:[#allocation3 + $0x28] sm:$0xff]
    %v1081 = vld [vmem:[#allocation3 + $0x30] sm:$0xff]
    %v1082 = vld [vmem:[#allocation3 + $0x38] sm:$0xff]
    %v1083 = vld [vmem:[#allocation3 + $0x40] sm:$0xff]
    %v1084 = vld [vmem:[#allocation3 + $0x48] sm:$0xff]
    %v1085 = vld [vmem:[#allocation3 + $0x50] sm:$0xff]
    %v1086 = vld [vmem:[#allocation3 + $0x58] sm:$0xff]
    %v1087 = vld [vmem:[#allocation3 + $0x60] sm:$0xff]
    %v1088 = vld [vmem:[#allocation3 + $0x68] sm:$0xff]
    %v1089 = vld [vmem:[#allocation3 + $0x70] sm:$0xff]
    %v1090 = vld [vmem:[#allocation3 + $0x78] sm:$0xff]
    %v1091 = vld [vmem:[#allocation3 + $0x80] sm:$0xff]
    %v1092 = vld [vmem:[#allocation3 + $0x88] sm:$0xff]
    %v1093 = vld [vmem:[#allocation3 + $0x90] sm:$0xff]
    %v1094 = vld [vmem:[#allocation3 + $0x98] sm:$0xff]
    %v1095 = vld [vmem:[#allocation3 + $0xa0] sm:$0xff]
    %v1096 = vld [vmem:[#allocation3 + $0xa8] sm:$0xff]
    %v1097 = vld [vmem:[#allocation3 + $0xb0] sm:$0xff]
    %v1098 = vld [vmem:[#allocation3 + $0xb8] sm:$0xff]
    %v1099 = vld [vmem:[#allocation3 + $0xc0] sm:$0xff]
    %v1100 = vld [vmem:[#allocation3 + $0xc8] sm:$0xff]
    %v1101 = vld [vmem:[#allocation3 + $0xd0] sm:$0xff]
    %v1102 = vld [vmem:[#allocation3 + $0xd8] sm:$0xff]
    %v1103 = vld [vmem:[#allocation3 + $0xe0] sm:$0xff]
    %v1104 = vld [vmem:[#allocation3 + $0xe8] sm:$0xff]
    %v1105 = vld [vmem:[#allocation3 + $0xf0] sm:$0xff]
    %v1106 = vld [vmem:[#allocation3 + $0xf8] sm:$0xff]
    %v1107 = vld [vmem:[#allocation3 + $0x100] sm:$0xff]
    %v1108 = vld [vmem:[#allocation3 + $0x108] sm:$0xff]
    %v1109 = vld [vmem:[#allocation3 + $0x110] sm:$0xff]
    %v1110 = vld [vmem:[#allocation3 + $0x118] sm:$0xff]
    %v1111 = vld [vmem:[#allocation3 + $0x120] sm:$0xff]
    %v1112 = vld [vmem:[#allocation3 + $0x128] sm:$0xff]
    %v1113 = vld [vmem:[#allocation3 + $0x130] sm:$0xff]
    %v1114 = vld [vmem:[#allocation3 + $0x138] sm:$0xff]
    %v1115 = vld [vmem:[#allocation3 + $0x140] sm:$0xff]
    %v1116 = vld [vmem:[#allocation3 + $0x148] sm:$0xff]
    %v1117 = vld [vmem:[#allocation3 + $0x150] sm:$0xff]
    %v1118 = vld [vmem:[#allocation3 + $0x158] sm:$0xff]
    %v1119 = vld [vmem:[#allocation3 + $0x160] sm:$0xff]
    %v1120 = vld [vmem:[#allocation3 + $0x168] sm:$0xff]
    %v1121 = vld [vmem:[#allocation3 + $0x170] sm:$0xff]
    %v1122 = vld [vmem:[#allocation3 + $0x178] sm:$0xff]
    %v1123 = vld [vmem:[#allocation3 + $0x180] sm:$0xff]
    %v1124 = vld [vmem:[#allocation3 + $0x188] sm:$0xff]
    %v1125 = vld [vmem:[#allocation3 + $0x190] sm:$0xff]
    %v1126 = vld [vmem:[#allocation3 + $0x198] sm:$0xff]
    %v1127 = vld [vmem:[#allocation3 + $0x1a0] sm:$0xff]
    %v1128 = vld [vmem:[#allocation3 + $0x1a8] sm:$0xff]
    %v1129 = vld [vmem:[#allocation3 + $0x1b0] sm:$0xff]
    %v1130 = vld [vmem:[#allocation3 + $0x1b8] sm:$0xff]
    %v1131 = vld [vmem:[#allocation3 + $0x1c0] sm:$0xff]
    %v1132 = vld [vmem:[#allocation3 + $0x1c8] sm:$0xff]
    %v1133 = vld [vmem:[#allocation3 + $0x1d0] sm:$0xff]
    %v1134 = vld [vmem:[#allocation3 + $0x1d8] sm:$0xff]
    %v1135 = vld [vmem:[#allocation3 + $0x1e0] sm:$0xff]
    %v1136 = vld [vmem:[#allocation3 + $0x1e8] sm:$0xff]
    %v1137 = vld [vmem:[#allocation3 + $0x1f0] sm:$0xff]
    %v1138 = vld [vmem:[#allocation3 + $0x1f8] sm:$0xff]
    %v1139 = vld [vmem:[#allocation3 + $0x200] sm:$0xff]
    %v1140 = vld [vmem:[#allocation3 + $0x208] sm:$0xff]
    %v1141 = vld [vmem:[#allocation3 + $0x210] sm:$0xff]
    %v1142 = vld [vmem:[#allocation3 + $0x218] sm:$0xff]
    %v1143 = vld [vmem:[#allocation3 + $0x220] sm:$0xff]
    %v1144 = vld [vmem:[#allocation3 + $0x228] sm:$0xff]
    %v1145 = vld [vmem:[#allocation3 + $0x230] sm:$0xff]
    %v1146 = vld [vmem:[#allocation3 + $0x238] sm:$0xff]
    %v1147 = vld [vmem:[#allocation3 + $0x240] sm:$0xff]
    %v1148 = vld [vmem:[#allocation3 + $0x248] sm:$0xff]
    %v1149 = vld [vmem:[#allocation3 + $0x250] sm:$0xff]
    %v1150 = vld [vmem:[#allocation3 + $0x258] sm:$0xff]
    %v1151 = vld [vmem:[#allocation3 + $0x260] sm:$0xff]
    %v1152 = vld [vmem:[#allocation3 + $0x268] sm:$0xff]
    %v1153 = vld [vmem:[#allocation3 + $0x270] sm:$0xff]
    %v1154 = vld [vmem:[#allocation3 + $0x278] sm:$0xff]
    %v1155 = vld [vmem:[#allocation3 + $0x280] sm:$0xff]
    %v1156 = vld [vmem:[#allocation3 + $0x288] sm:$0xff]
    %v1157 = vld [vmem:[#allocation3 + $0x290] sm:$0xff]
    %v1158 = vld [vmem:[#allocation3 + $0x298] sm:$0xff]
    %v1159 = vld [vmem:[#allocation3 + $0x2a0] sm:$0xff]
    %v1160 = vld [vmem:[#allocation3 + $0x2a8] sm:$0xff]
    %v1161 = vld [vmem:[#allocation3 + $0x2b0] sm:$0xff]
    %v1162 = vld [vmem:[#allocation3 + $0x2b8] sm:$0xff]
    %v1163 = vld [vmem:[#allocation3 + $0x2c0] sm:$0xff]
    %v1164 = vld [vmem:[#allocation3 + $0x2c8] sm:$0xff]
    %v1165 = vld [vmem:[#allocation3 + $0x2d0] sm:$0xff]
    %v1166 = vld [vmem:[#allocation3 + $0x2d8] sm:$0xff]
    %v1167 = vld [vmem:[#allocation3 + $0x2e0] sm:$0xff]
    %v1168 = vld [vmem:[#allocation3 + $0x2e8] sm:$0xff]
    %v1169 = vld [vmem:[#allocation3 + $0x2f0] sm:$0xff]
    %v1170 = vld [vmem:[#allocation3 + $0x2f8] sm:$0xff]
    %v1171 = vld [vmem:[#allocation3 + $0x300] sm:$0xff]
    %v1172 = vld [vmem:[#allocation3 + $0x308] sm:$0xff]
    %v1173 = vld [vmem:[#allocation3 + $0x310] sm:$0xff]
    %v1174 = vld [vmem:[#allocation3 + $0x318] sm:$0xff]
    %v1175 = vld [vmem:[#allocation3 + $0x320] sm:$0xff]
    %v1176 = vld [vmem:[#allocation3 + $0x328] sm:$0xff]
    %v1177 = vld [vmem:[#allocation3 + $0x330] sm:$0xff]
    %v1178 = vld [vmem:[#allocation3 + $0x338] sm:$0xff]
    %v1179 = vld [vmem:[#allocation3 + $0x340] sm:$0xff]
    %v1180 = vld [vmem:[#allocation3 + $0x348] sm:$0xff]
    %v1181 = vld [vmem:[#allocation3 + $0x350] sm:$0xff]
    %v1182 = vld [vmem:[#allocation3 + $0x358] sm:$0xff]
    %v1183 = vld [vmem:[#allocation3 + $0x360] sm:$0xff]
    %v1184 = vld [vmem:[#allocation3 + $0x368] sm:$0xff]
    %v1185 = vld [vmem:[#allocation3 + $0x370] sm:$0xff]
    %v1186 = vld [vmem:[#allocation3 + $0x378] sm:$0xff]
    %v1187 = vld [vmem:[#allocation3 + $0x380] sm:$0xff]
    %v1188 = vld [vmem:[#allocation3 + $0x388] sm:$0xff]
    %v1189 = vld [vmem:[#allocation3 + $0x390] sm:$0xff]
    %v1190 = vld [vmem:[#allocation3 + $0x398] sm:$0xff]
    %v1191 = vld [vmem:[#allocation3 + $0x3a0] sm:$0xff]
    %v1192 = vld [vmem:[#allocation3 + $0x3a8] sm:$0xff]
    %v1193 = vld [vmem:[#allocation3 + $0x3b0] sm:$0xff]
    %v1194 = vld [vmem:[#allocation3 + $0x3b8] sm:$0xff]
    %v1195 = vld [vmem:[#allocation3 + $0x3c0] sm:$0xff]
    %v1196 = vld [vmem:[#allocation3 + $0x3c8] sm:$0xff]
    %v1197 = vld [vmem:[#allocation3 + $0x3d0] sm:$0xff]
    %v1198 = vld [vmem:[#allocation3 + $0x3d8] sm:$0xff]
    %v1199 = vld [vmem:[#allocation3 + $0x3e0] sm:$0xff]
    %v1200 = vld [vmem:[#allocation3 + $0x3e8] sm:$0xff]
    %v1201 = vld [vmem:[#allocation3 + $0x3f0] sm:$0xff]
    %v1202 = vld [vmem:[#allocation3 + $0x3f8] sm:$0xff]
    %v1203 = vld [vmem:[#allocation3 + $0x400] sm:$0xff]
    %v1204 = vld [vmem:[#allocation3 + $0x408] sm:$0xff]
    %v1205 = vld [vmem:[#allocation3 + $0x410] sm:$0xff]
    %v1206 = vld [vmem:[#allocation3 + $0x418] sm:$0xff]
    %v1207 = vld [vmem:[#allocation3 + $0x420] sm:$0xff]
    %v1208 = vld [vmem:[#allocation3 + $0x428] sm:$0xff]
    %v1209 = vld [vmem:[#allocation3 + $0x430] sm:$0xff]
    %v1210 = vld [vmem:[#allocation3 + $0x438] sm:$0xff]
    %v1211 = vld [vmem:[#allocation3 + $0x440] sm:$0xff]
    %v1212 = vld [vmem:[#allocation3 + $0x448] sm:$0xff]
    %v1213 = vld [vmem:[#allocation3 + $0x450] sm:$0xff]
    %v1214 = vld [vmem:[#allocation3 + $0x458] sm:$0xff]
    %v1215 = vld [vmem:[#allocation3 + $0x460] sm:$0xff]
    %v1216 = vld [vmem:[#allocation3 + $0x468] sm:$0xff]
    %v1217 = vld [vmem:[#allocation3 + $0x470] sm:$0xff]
    %v1218 = vld [vmem:[#allocation3 + $0x478] sm:$0xff]
    %v1219 = vld [vmem:[#allocation3 + $0x480] sm:$0xff]
    %v1220 = vld [vmem:[#allocation3 + $0x488] sm:$0xff]
    %v1221 = vld [vmem:[#allocation3 + $0x490] sm:$0xff]
    %v1222 = vld [vmem:[#allocation3 + $0x498] sm:$0xff]
    %v1223 = vld [vmem:[#allocation3 + $0x4a0] sm:$0xff]
    %v1224 = vld [vmem:[#allocation3 + $0x4a8] sm:$0xff]
    %v1225 = vld [vmem:[#allocation3 + $0x4b0] sm:$0xff]
    %v1226 = vld [vmem:[#allocation3 + $0x4b8] sm:$0xff]
    %v1227 = vld [vmem:[#allocation3 + $0x4c0] sm:$0xff]
    %v1228 = vld [vmem:[#allocation3 + $0x4c8] sm:$0xff]
    %v1229 = vld [vmem:[#allocation3 + $0x4d0] sm:$0xff]
    %v1230 = vld [vmem:[#allocation3 + $0x4d8] sm:$0xff]
    %v1231 = vld [vmem:[#allocation3 + $0x4e0] sm:$0xff]
    %v1232 = vld [vmem:[#allocation3 + $0x4e8] sm:$0xff]
    %v1233 = vld [vmem:[#allocation3 + $0x4f0] sm:$0xff]
    %v1234 = vld [vmem:[#allocation3 + $0x4f8] sm:$0xff]
    %v1235 = vld [vmem:[#allocation3 + $0x500] sm:$0xff]
    %v1236 = vld [vmem:[#allocation3 + $0x508] sm:$0xff]
    %v1237 = vld [vmem:[#allocation3 + $0x510] sm:$0xff]
    %v1238 = vld [vmem:[#allocation3 + $0x518] sm:$0xff]
    %v1239 = vld [vmem:[#allocation3 + $0x520] sm:$0xff]
    %v1240 = vld [vmem:[#allocation3 + $0x528] sm:$0xff]
    %v1241 = vld [vmem:[#allocation3 + $0x530] sm:$0xff]
    %v1242 = vld [vmem:[#allocation3 + $0x538] sm:$0xff]
    %v1243 = vld [vmem:[#allocation3 + $0x540] sm:$0xff]
    %v1244 = vld [vmem:[#allocation3 + $0x548] sm:$0xff]
    %v1245 = vld [vmem:[#allocation3 + $0x550] sm:$0xff]
    %v1246 = vld [vmem:[#allocation3 + $0x558] sm:$0xff]
    %v1247 = vld [vmem:[#allocation3 + $0x560] sm:$0xff]
    %v1248 = vld [vmem:[#allocation3 + $0x568] sm:$0xff]
    %v1249 = vld [vmem:[#allocation3 + $0x570] sm:$0xff]
    %v1250 = vld [vmem:[#allocation3 + $0x578] sm:$0xff]
    %v1251 = vld [vmem:[#allocation3 + $0x580] sm:$0xff]
    %v1252 = vld [vmem:[#allocation3 + $0x588] sm:$0xff]
    %v1253 = vld [vmem:[#allocation3 + $0x590] sm:$0xff]
    %v1254 = vld [vmem:[#allocation3 + $0x598] sm:$0xff]
    %v1255 = vld [vmem:[#allocation3 + $0x5a0] sm:$0xff]
    %v1256 = vld [vmem:[#allocation3 + $0x5a8] sm:$0xff]
    %v1257 = vld [vmem:[#allocation3 + $0x5b0] sm:$0xff]
    %v1258 = vld [vmem:[#allocation3 + $0x5b8] sm:$0xff]
    %v1259 = vld [vmem:[#allocation3 + $0x5c0] sm:$0xff]
    %v1260 = vld [vmem:[#allocation3 + $0x5c8] sm:$0xff]
    %v1261 = vld [vmem:[#allocation3 + $0x5d0] sm:$0xff]
    %v1262 = vld [vmem:[#allocation3 + $0x5d8] sm:$0xff]
    %v1263 = vld [vmem:[#allocation3 + $0x5e0] sm:$0xff]
    %v1264 = vld [vmem:[#allocation3 + $0x5e8] sm:$0xff]
    %v1265 = vld [vmem:[#allocation3 + $0x5f0] sm:$0xff]
    %v1266 = vld [vmem:[#allocation3 + $0x5f8] sm:$0xff]
    %v1267 = vld [vmem:[#allocation3 + $0x600] sm:$0xff]
    %v1268 = vld [vmem:[#allocation3 + $0x608] sm:$0xff]
    %v1269 = vld [vmem:[#allocation3 + $0x610] sm:$0xff]
    %v1270 = vld [vmem:[#allocation3 + $0x618] sm:$0xff]
    %v1271 = vld [vmem:[#allocation3 + $0x620] sm:$0xff]
    %v1272 = vld [vmem:[#allocation3 + $0x628] sm:$0xff]
    %v1273 = vld [vmem:[#allocation3 + $0x630] sm:$0xff]
    %v1274 = vld [vmem:[#allocation3 + $0x638] sm:$0xff]
    %v1275 = vld [vmem:[#allocation3 + $0x640] sm:$0xff]
    %v1276 = vld [vmem:[#allocation3 + $0x648] sm:$0xff]
    %v1277 = vld [vmem:[#allocation3 + $0x650] sm:$0xff]
    %v1278 = vld [vmem:[#allocation3 + $0x658] sm:$0xff]
    %v1279 = vld [vmem:[#allocation3 + $0x660] sm:$0xff]
    %v1280 = vld [vmem:[#allocation3 + $0x668] sm:$0xff]
    %v1281 = vld [vmem:[#allocation3 + $0x670] sm:$0xff]
    %v1282 = vld [vmem:[#allocation3 + $0x678] sm:$0xff]
    %v1283 = vld [vmem:[#allocation3 + $0x680] sm:$0xff]
    %v1284 = vld [vmem:[#allocation3 + $0x688] sm:$0xff]
    %v1285 = vld [vmem:[#allocation3 + $0x690] sm:$0xff]
    %v1286 = vld [vmem:[#allocation3 + $0x698] sm:$0xff]
    %v1287 = vld [vmem:[#allocation3 + $0x6a0] sm:$0xff]
    %v1288 = vld [vmem:[#allocation3 + $0x6a8] sm:$0xff]
    %v1289 = vld [vmem:[#allocation3 + $0x6b0] sm:$0xff]
    %v1290 = vld [vmem:[#allocation3 + $0x6b8] sm:$0xff]
    %v1291 = vld [vmem:[#allocation3 + $0x6c0] sm:$0xff]
    %v1292 = vld [vmem:[#allocation3 + $0x6c8] sm:$0xff]
    %v1293 = vld [vmem:[#allocation3 + $0x6d0] sm:$0xff]
    %v1294 = vld [vmem:[#allocation3 + $0x6d8] sm:$0xff]
    %v1295 = vld [vmem:[#allocation3 + $0x6e0] sm:$0xff]
    %v1296 = vld [vmem:[#allocation3 + $0x6e8] sm:$0xff]
    %v1297 = vld [vmem:[#allocation3 + $0x6f0] sm:$0xff]
    %v1298 = vld [vmem:[#allocation3 + $0x6f8] sm:$0xff]
    %v1299 = vld [vmem:[#allocation3 + $0x700] sm:$0xff]
    %v1300 = vld [vmem:[#allocation3 + $0x708] sm:$0xff]
    %v1301 = vld [vmem:[#allocation3 + $0x710] sm:$0xff]
    %v1302 = vld [vmem:[#allocation3 + $0x718] sm:$0xff]
    %v1303 = vld [vmem:[#allocation3 + $0x720] sm:$0xff]
    %v1304 = vld [vmem:[#allocation3 + $0x728] sm:$0xff]
    %v1305 = vld [vmem:[#allocation3 + $0x730] sm:$0xff]
    %v1306 = vld [vmem:[#allocation3 + $0x738] sm:$0xff]
    %v1307 = vld [vmem:[#allocation3 + $0x740] sm:$0xff]
    %v1308 = vld [vmem:[#allocation3 + $0x748] sm:$0xff]
    %v1309 = vld [vmem:[#allocation3 + $0x750] sm:$0xff]
    %v1310 = vld [vmem:[#allocation3 + $0x758] sm:$0xff]
    %v1311 = vld [vmem:[#allocation3 + $0x760] sm:$0xff]
    %v1312 = vld [vmem:[#allocation3 + $0x768] sm:$0xff]
    %v1313 = vld [vmem:[#allocation3 + $0x770] sm:$0xff]
    %v1314 = vld [vmem:[#allocation3 + $0x778] sm:$0xff]
    %v1315 = vld [vmem:[#allocation3 + $0x780] sm:$0xff]
    %v1316 = vld [vmem:[#allocation3 + $0x788] sm:$0xff]
    %v1317 = vld [vmem:[#allocation3 + $0x790] sm:$0xff]
    %v1318 = vld [vmem:[#allocation3 + $0x798] sm:$0xff]
    %v1319 = vld [vmem:[#allocation3 + $0x7a0] sm:$0xff]
    %v1320 = vld [vmem:[#allocation3 + $0x7a8] sm:$0xff]
    %v1321 = vld [vmem:[#allocation3 + $0x7b0] sm:$0xff]
    %v1322 = vld [vmem:[#allocation3 + $0x7b8] sm:$0xff]
    %v1323 = vld [vmem:[#allocation3 + $0x7c0] sm:$0xff]
    %v1324 = vld [vmem:[#allocation3 + $0x7c8] sm:$0xff]
    %v1325 = vld [vmem:[#allocation3 + $0x7d0] sm:$0xff]
    %v1326 = vld [vmem:[#allocation3 + $0x7d8] sm:$0xff]
    %v1327 = vld [vmem:[#allocation3 + $0x7e0] sm:$0xff]
    %v1328 = vld [vmem:[#allocation3 + $0x7e8] sm:$0xff]
    %v1329 = vld [vmem:[#allocation3 + $0x7f0] sm:$0xff]
    %v1330 = vld [vmem:[#allocation3 + $0x7f8] sm:$0xff]
    %v1331 = vld [vmem:[#allocation3 + $0x800] sm:$0xff]
    %v1332 = vld [vmem:[#allocation3 + $0x808] sm:$0xff]
    %v1333 = vld [vmem:[#allocation3 + $0x810] sm:$0xff]
    %v1334 = vld [vmem:[#allocation3 + $0x818] sm:$0xff]
    %v1335 = vld [vmem:[#allocation3 + $0x820] sm:$0xff]
    %v1336 = vld [vmem:[#allocation3 + $0x828] sm:$0xff]
    %v1337 = vld [vmem:[#allocation3 + $0x830] sm:$0xff]
    %v1338 = vld [vmem:[#allocation3 + $0x838] sm:$0xff]
    %v1339 = vld [vmem:[#allocation3 + $0x840] sm:$0xff]
    %v1340 = vld [vmem:[#allocation3 + $0x848] sm:$0xff]
    %v1341 = vld [vmem:[#allocation3 + $0x850] sm:$0xff]
    %v1342 = vld [vmem:[#allocation3 + $0x858] sm:$0xff]
    %v1343 = vld [vmem:[#allocation3 + $0x860] sm:$0xff]
    %v1344 = vld [vmem:[#allocation3 + $0x868] sm:$0xff]
    %v1345 = vld [vmem:[#allocation3 + $0x870] sm:$0xff]
    %v1346 = vld [vmem:[#allocation3 + $0x878] sm:$0xff]
    %v1347 = vld [vmem:[#allocation3 + $0x880] sm:$0xff]
    %v1348 = vld [vmem:[#allocation3 + $0x888] sm:$0xff]
    %v1349 = vld [vmem:[#allocation3 + $0x890] sm:$0xff]
    %v1350 = vld [vmem:[#allocation3 + $0x898] sm:$0xff]
    %v1351 = vld [vmem:[#allocation3 + $0x8a0] sm:$0xff]
    %v1352 = vld [vmem:[#allocation3 + $0x8a8] sm:$0xff]
    %v1353 = vld [vmem:[#allocation3 + $0x8b0] sm:$0xff]
    %v1354 = vld [vmem:[#allocation3 + $0x8b8] sm:$0xff]
    %v1355 = vld [vmem:[#allocation3 + $0x8c0] sm:$0xff]
    %v1356 = vld [vmem:[#allocation3 + $0x8c8] sm:$0xff]
    %v1357 = vld [vmem:[#allocation3 + $0x8d0] sm:$0xff]
    %v1358 = vld [vmem:[#allocation3 + $0x8d8] sm:$0xff]
    %v1359 = vld [vmem:[#allocation3 + $0x8e0] sm:$0xff]
    %v1360 = vld [vmem:[#allocation3 + $0x8e8] sm:$0xff]
    %v1361 = vld [vmem:[#allocation3 + $0x8f0] sm:$0xff]
    %v1362 = vld [vmem:[#allocation3 + $0x8f8] sm:$0xff]
    %v1363 = vld [vmem:[#allocation3 + $0x900] sm:$0xff]
    %v1364 = vld [vmem:[#allocation3 + $0x908] sm:$0xff]
    %v1365 = vld [vmem:[#allocation3 + $0x910] sm:$0xff]
    %v1366 = vld [vmem:[#allocation3 + $0x918] sm:$0xff]
    %v1367 = vld [vmem:[#allocation3 + $0x920] sm:$0xff]
    %v1368 = vld [vmem:[#allocation3 + $0x928] sm:$0xff]
    %v1369 = vld [vmem:[#allocation3 + $0x930] sm:$0xff]
    %v1370 = vld [vmem:[#allocation3 + $0x938] sm:$0xff]
    %v1371 = vld [vmem:[#allocation3 + $0x940] sm:$0xff]
    %v1372 = vld [vmem:[#allocation3 + $0x948] sm:$0xff]
    %v1373 = vld [vmem:[#allocation3 + $0x950] sm:$0xff]
    %v1374 = vld [vmem:[#allocation3 + $0x958] sm:$0xff]
    %v1375 = vld [vmem:[#allocation3 + $0x960] sm:$0xff]
    %v1376 = vld [vmem:[#allocation3 + $0x968] sm:$0xff]
    %v1377 = vld [vmem:[#allocation3 + $0x970] sm:$0xff]
    %v1378 = vld [vmem:[#allocation3 + $0x978] sm:$0xff]
    %v1379 = vld [vmem:[#allocation3 + $0x980] sm:$0xff]
    %v1380 = vld [vmem:[#allocation3 + $0x988] sm:$0xff]
    %v1381 = vld [vmem:[#allocation3 + $0x990] sm:$0xff]
    %v1382 = vld [vmem:[#allocation3 + $0x998] sm:$0xff]
    %v1383 = vld [vmem:[#allocation3 + $0x9a0] sm:$0xff]
    %v1384 = vld [vmem:[#allocation3 + $0x9a8] sm:$0xff]
    %v1385 = vld [vmem:[#allocation3 + $0x9b0] sm:$0xff]
    %v1386 = vld [vmem:[#allocation3 + $0x9b8] sm:$0xff]
    %v1387 = vld [vmem:[#allocation3 + $0x9c0] sm:$0xff]
    %v1388 = vld [vmem:[#allocation3 + $0x9c8] sm:$0xff]
    %v1389 = vld [vmem:[#allocation3 + $0x9d0] sm:$0xff]
    %v1390 = vld [vmem:[#allocation3 + $0x9d8] sm:$0xff]
    %v1391 = vld [vmem:[#allocation3 + $0x9e0] sm:$0xff]
    %v1392 = vld [vmem:[#allocation3 + $0x9e8] sm:$0xff]
    %v1393 = vld [vmem:[#allocation3 + $0x9f0] sm:$0xff]
    %v1394 = vld [vmem:[#allocation3 + $0x9f8] sm:$0xff]
    %v1395 = vld [vmem:[#allocation3 + $0xa00] sm:$0xff]
    %v1396 = vld [vmem:[#allocation3 + $0xa08] sm:$0xff]
    %v1397 = vld [vmem:[#allocation3 + $0xa10] sm:$0xff]
    %v1398 = vld [vmem:[#allocation3 + $0xa18] sm:$0xff]
    %v1399 = vld [vmem:[#allocation3 + $0xa20] sm:$0xff]
    %v1400 = vld [vmem:[#allocation3 + $0xa28] sm:$0xff]
    %v1401 = vld [vmem:[#allocation3 + $0xa30] sm:$0xff]
    %v1402 = vld [vmem:[#allocation3 + $0xa38] sm:$0xff]
    %v1403 = vld [vmem:[#allocation3 + $0xa40] sm:$0xff]
    %v1404 = vld [vmem:[#allocation3 + $0xa48] sm:$0xff]
    %v1405 = vld [vmem:[#allocation3 + $0xa50] sm:$0xff]
    %v1406 = vld [vmem:[#allocation3 + $0xa58] sm:$0xff]
    %v1407 = vld [vmem:[#allocation3 + $0xa60] sm:$0xff]
    %v1408 = vld [vmem:[#allocation3 + $0xa68] sm:$0xff]
    %v1409 = vld [vmem:[#allocation3 + $0xa70] sm:$0xff]
    %v1410 = vld [vmem:[#allocation3 + $0xa78] sm:$0xff]
    %v1411 = vld [vmem:[#allocation3 + $0xa80] sm:$0xff]
    %v1412 = vld [vmem:[#allocation3 + $0xa88] sm:$0xff]
    %v1413 = vld [vmem:[#allocation3 + $0xa90] sm:$0xff]
    %v1414 = vld [vmem:[#allocation3 + $0xa98] sm:$0xff]
    %v1415 = vld [vmem:[#allocation3 + $0xaa0] sm:$0xff]
    %v1416 = vld [vmem:[#allocation3 + $0xaa8] sm:$0xff]
    %v1417 = vld [vmem:[#allocation3 + $0xab0] sm:$0xff]
    %v1418 = vld [vmem:[#allocation3 + $0xab8] sm:$0xff]
    %v1419 = vld [vmem:[#allocation3 + $0xac0] sm:$0xff]
    %v1420 = vld [vmem:[#allocation3 + $0xac8] sm:$0xff]
    %v1421 = vld [vmem:[#allocation3 + $0xad0] sm:$0xff]
    %v1422 = vld [vmem:[#allocation3 + $0xad8] sm:$0xff]
    %v1423 = vld [vmem:[#allocation3 + $0xae0] sm:$0xff]
    %v1424 = vld [vmem:[#allocation3 + $0xae8] sm:$0xff]
    %v1425 = vld [vmem:[#allocation3 + $0xaf0] sm:$0xff]
    %v1426 = vld [vmem:[#allocation3 + $0xaf8] sm:$0xff]
    %v1427 = vld [vmem:[#allocation3 + $0xb00] sm:$0xff]
    %v1428 = vld [vmem:[#allocation3 + $0xb08] sm:$0xff]
    %v1429 = vld [vmem:[#allocation3 + $0xb10] sm:$0xff]
    %v1430 = vld [vmem:[#allocation3 + $0xb18] sm:$0xff]
    %v1431 = vld [vmem:[#allocation3 + $0xb20] sm:$0xff]
    %v1432 = vld [vmem:[#allocation3 + $0xb28] sm:$0xff]
    %v1433 = vld [vmem:[#allocation3 + $0xb30] sm:$0xff]
    %v1434 = vld [vmem:[#allocation3 + $0xb38] sm:$0xff]
    %v1435 = vld [vmem:[#allocation3 + $0xb40] sm:$0xff]
    %v1436 = vld [vmem:[#allocation3 + $0xb48] sm:$0xff]
    %v1437 = vld [vmem:[#allocation3 + $0xb50] sm:$0xff]
    %v1438 = vld [vmem:[#allocation3 + $0xb58] sm:$0xff]
    %v1439 = vld [vmem:[#allocation3 + $0xb60] sm:$0xff]
    %v1440 = vld [vmem:[#allocation3 + $0xb68] sm:$0xff]
    %v1441 = vld [vmem:[#allocation3 + $0xb70] sm:$0xff]
    %v1442 = vld [vmem:[#allocation3 + $0xb78] sm:$0xff]
    %v1443 = vld [vmem:[#allocation3 + $0xb80] sm:$0xff]
    %v1444 = vld [vmem:[#allocation3 + $0xb88] sm:$0xff]
    %v1445 = vld [vmem:[#allocation3 + $0xb90] sm:$0xff]
    %v1446 = vld [vmem:[#allocation3 + $0xb98] sm:$0xff]
    %v1447 = vld [vmem:[#allocation3 + $0xba0] sm:$0xff]
    %v1448 = vld [vmem:[#allocation3 + $0xba8] sm:$0xff]
    %v1449 = vld [vmem:[#allocation3 + $0xbb0] sm:$0xff]
    %v1450 = vld [vmem:[#allocation3 + $0xbb8] sm:$0xff]
    %v1451 = vld [vmem:[#allocation3 + $0xbc0] sm:$0xff]
    %v1452 = vld [vmem:[#allocation3 + $0xbc8] sm:$0xff]
    %v1453 = vld [vmem:[#allocation3 + $0xbd0] sm:$0xff]
    %v1454 = vld [vmem:[#allocation3 + $0xbd8] sm:$0xff]
    %v1455 = vld [vmem:[#allocation3 + $0xbe0] sm:$0xff]
    %v1456 = vld [vmem:[#allocation3 + $0xbe8] sm:$0xff]
    %v1457 = vld [vmem:[#allocation3 + $0xbf0] sm:$0xff]
    %v1458 = vld [vmem:[#allocation3 + $0xbf8] sm:$0xff]
    %v1459 = vld [vmem:[#allocation3 + $0xc00] sm:$0xff]
    %v1460 = vld [vmem:[#allocation3 + $0xc08] sm:$0xff]
    %v1461 = vld [vmem:[#allocation3 + $0xc10] sm:$0xff]
    %v1462 = vld [vmem:[#allocation3 + $0xc18] sm:$0xff]
    %v1463 = vld [vmem:[#allocation3 + $0xc20] sm:$0xff]
    %v1464 = vld [vmem:[#allocation3 + $0xc28] sm:$0xff]
    %v1465 = vld [vmem:[#allocation3 + $0xc30] sm:$0xff]
    %v1466 = vld [vmem:[#allocation3 + $0xc38] sm:$0xff]
    %v1467 = vld [vmem:[#allocation3 + $0xc40] sm:$0xff]
    %v1468 = vld [vmem:[#allocation3 + $0xc48] sm:$0xff]
    %v1469 = vld [vmem:[#allocation3 + $0xc50] sm:$0xff]
    %v1470 = vld [vmem:[#allocation3 + $0xc58] sm:$0xff]
    %v1471 = vld [vmem:[#allocation3 + $0xc60] sm:$0xff]
    %v1472 = vld [vmem:[#allocation3 + $0xc68] sm:$0xff]
    %v1473 = vld [vmem:[#allocation3 + $0xc70] sm:$0xff]
    %v1474 = vld [vmem:[#allocation3 + $0xc78] sm:$0xff]
    %v1475 = vld [vmem:[#allocation3 + $0xc80] sm:$0xff]
    %v1476 = vld [vmem:[#allocation3 + $0xc88] sm:$0xff]
    %v1477 = vld [vmem:[#allocation3 + $0xc90] sm:$0xff]
    %v1478 = vld [vmem:[#allocation3 + $0xc98] sm:$0xff]
    %v1479 = vld [vmem:[#allocation3 + $0xca0] sm:$0xff]
    %v1480 = vld [vmem:[#allocation3 + $0xca8] sm:$0xff]
    %v1481 = vld [vmem:[#allocation3 + $0xcb0] sm:$0xff]
    %v1482 = vld [vmem:[#allocation3 + $0xcb8] sm:$0xff]
    %v1483 = vld [vmem:[#allocation3 + $0xcc0] sm:$0xff]
    %v1484 = vld [vmem:[#allocation3 + $0xcc8] sm:$0xff]
    %v1485 = vld [vmem:[#allocation3 + $0xcd0] sm:$0xff]
    %v1486 = vld [vmem:[#allocation3 + $0xcd8] sm:$0xff]
    %v1487 = vld [vmem:[#allocation3 + $0xce0] sm:$0xff]
    %v1488 = vld [vmem:[#allocation3 + $0xce8] sm:$0xff]
    %v1489 = vld [vmem:[#allocation3 + $0xcf0] sm:$0xff]
    %v1490 = vld [vmem:[#allocation3 + $0xcf8] sm:$0xff]
    %v1491 = vld [vmem:[#allocation3 + $0xd00] sm:$0xff]
    %v1492 = vld [vmem:[#allocation3 + $0xd08] sm:$0xff]
    %v1493 = vld [vmem:[#allocation3 + $0xd10] sm:$0xff]
    %v1494 = vld [vmem:[#allocation3 + $0xd18] sm:$0xff]
    %v1495 = vld [vmem:[#allocation3 + $0xd20] sm:$0xff]
    %v1496 = vld [vmem:[#allocation3 + $0xd28] sm:$0xff]
    %v1497 = vld [vmem:[#allocation3 + $0xd30] sm:$0xff]
    %v1498 = vld [vmem:[#allocation3 + $0xd38] sm:$0xff]
    %v1499 = vld [vmem:[#allocation3 + $0xd40] sm:$0xff]
    %v1500 = vld [vmem:[#allocation3 + $0xd48] sm:$0xff]
    %v1501 = vld [vmem:[#allocation3 + $0xd50] sm:$0xff]
    %v1502 = vld [vmem:[#allocation3 + $0xd58] sm:$0xff]
    %v1503 = vld [vmem:[#allocation3 + $0xd60] sm:$0xff]
    %v1504 = vld [vmem:[#allocation3 + $0xd68] sm:$0xff]
    %v1505 = vld [vmem:[#allocation3 + $0xd70] sm:$0xff]
    %v1506 = vld [vmem:[#allocation3 + $0xd78] sm:$0xff]
    %v1507 = vld [vmem:[#allocation3 + $0xd80] sm:$0xff]
    %v1508 = vld [vmem:[#allocation3 + $0xd88] sm:$0xff]
    %v1509 = vld [vmem:[#allocation3 + $0xd90] sm:$0xff]
    %v1510 = vld [vmem:[#allocation3 + $0xd98] sm:$0xff]
    %v1511 = vld [vmem:[#allocation3 + $0xda0] sm:$0xff]
    %v1512 = vld [vmem:[#allocation3 + $0xda8] sm:$0xff]
    %v1513 = vld [vmem:[#allocation3 + $0xdb0] sm:$0xff]
    %v1514 = vld [vmem:[#allocation3 + $0xdb8] sm:$0xff]
    %v1515 = vld [vmem:[#allocation3 + $0xdc0] sm:$0xff]
    %v1516 = vld [vmem:[#allocation3 + $0xdc8] sm:$0xff]
    %v1517 = vld [vmem:[#allocation3 + $0xdd0] sm:$0xff]
    %v1518 = vld [vmem:[#allocation3 + $0xdd8] sm:$0xff]
    %v1519 = vld [vmem:[#allocation3 + $0xde0] sm:$0xff]
    %v1520 = vld [vmem:[#allocation3 + $0xde8] sm:$0xff]
    %v1521 = vld [vmem:[#allocation3 + $0xdf0] sm:$0xff]
    %v1522 = vld [vmem:[#allocation3 + $0xdf8] sm:$0xff]
    %v1523 = vld [vmem:[#allocation3 + $0xe00] sm:$0xff]
    %v1524 = vld [vmem:[#allocation3 + $0xe08] sm:$0xff]
    %v1525 = vld [vmem:[#allocation3 + $0xe10] sm:$0xff]
    %v1526 = vld [vmem:[#allocation3 + $0xe18] sm:$0xff]
    %v1527 = vld [vmem:[#allocation3 + $0xe20] sm:$0xff]
    %v1528 = vld [vmem:[#allocation3 + $0xe28] sm:$0xff]
    %v1529 = vld [vmem:[#allocation3 + $0xe30] sm:$0xff]
    %v1530 = vld [vmem:[#allocation3 + $0xe38] sm:$0xff]
    %v1531 = vld [vmem:[#allocation3 + $0xe40] sm:$0xff]
    %v1532 = vld [vmem:[#allocation3 + $0xe48] sm:$0xff]
    %v1533 = vld [vmem:[#allocation3 + $0xe50] sm:$0xff]
    %v1534 = vld [vmem:[#allocation3 + $0xe58] sm:$0xff]
    %v1535 = vld [vmem:[#allocation3 + $0xe60] sm:$0xff]
    %v1536 = vld [vmem:[#allocation3 + $0xe68] sm:$0xff]
    %v1537 = vld [vmem:[#allocation3 + $0xe70] sm:$0xff]
    %v1538 = vld [vmem:[#allocation3 + $0xe78] sm:$0xff]
    %v1539 = vld [vmem:[#allocation3 + $0xe80] sm:$0xff]
    %v1540 = vld [vmem:[#allocation3 + $0xe88] sm:$0xff]
    %v1541 = vld [vmem:[#allocation3 + $0xe90] sm:$0xff]
    %v1542 = vld [vmem:[#allocation3 + $0xe98] sm:$0xff]
    %v1543 = vld [vmem:[#allocation3 + $0xea0] sm:$0xff]
    %v1544 = vld [vmem:[#allocation3 + $0xea8] sm:$0xff]
    %v1545 = vld [vmem:[#allocation3 + $0xeb0] sm:$0xff]
    %v1546 = vld [vmem:[#allocation3 + $0xeb8] sm:$0xff]
    %v1547 = vld [vmem:[#allocation3 + $0xec0] sm:$0xff]
    %v1548 = vld [vmem:[#allocation3 + $0xec8] sm:$0xff]
    %v1549 = vld [vmem:[#allocation3 + $0xed0] sm:$0xff]
    %v1550 = vld [vmem:[#allocation3 + $0xed8] sm:$0xff]
    %v1551 = vld [vmem:[#allocation3 + $0xee0] sm:$0xff]
    %v1552 = vld [vmem:[#allocation3 + $0xee8] sm:$0xff]
    %v1553 = vld [vmem:[#allocation3 + $0xef0] sm:$0xff]
    %v1554 = vld [vmem:[#allocation3 + $0xef8] sm:$0xff]
    %v1555 = vld [vmem:[#allocation3 + $0xf00] sm:$0xff]
    %v1556 = vld [vmem:[#allocation3 + $0xf08] sm:$0xff]
    %v1557 = vld [vmem:[#allocation3 + $0xf10] sm:$0xff]
    %v1558 = vld [vmem:[#allocation3 + $0xf18] sm:$0xff]
    %v1559 = vld [vmem:[#allocation3 + $0xf20] sm:$0xff]
    %v1560 = vld [vmem:[#allocation3 + $0xf28] sm:$0xff]
    %v1561 = vld [vmem:[#allocation3 + $0xf30] sm:$0xff]
    %v1562 = vld [vmem:[#allocation3 + $0xf38] sm:$0xff]
    %v1563 = vld [vmem:[#allocation3 + $0xf40] sm:$0xff]
    %v1564 = vld [vmem:[#allocation3 + $0xf48] sm:$0xff]
    %v1565 = vld [vmem:[#allocation3 + $0xf50] sm:$0xff]
    %v1566 = vld [vmem:[#allocation3 + $0xf58] sm:$0xff]
    %v1567 = vld [vmem:[#allocation3 + $0xf60] sm:$0xff]
    %v1568 = vld [vmem:[#allocation3 + $0xf68] sm:$0xff]
    %v1569 = vld [vmem:[#allocation3 + $0xf70] sm:$0xff]
    %v1570 = vld [vmem:[#allocation3 + $0xf78] sm:$0xff]
    %v1571 = vld [vmem:[#allocation3 + $0xf80] sm:$0xff]
    %v1572 = vld [vmem:[#allocation3 + $0xf88] sm:$0xff]
    %v1573 = vld [vmem:[#allocation3 + $0xf90] sm:$0xff]
    %v1574 = vld [vmem:[#allocation3 + $0xf98] sm:$0xff]
    %v1575 = vld [vmem:[#allocation3 + $0xfa0] sm:$0xff]
    %v1576 = vld [vmem:[#allocation3 + $0xfa8] sm:$0xff]
    %v1577 = vld [vmem:[#allocation3 + $0xfb0] sm:$0xff]
    %v1578 = vld [vmem:[#allocation3 + $0xfb8] sm:$0xff]
    %v1579 = vld [vmem:[#allocation3 + $0xfc0] sm:$0xff]
    %v1580 = vld [vmem:[#allocation3 + $0xfc8] sm:$0xff]
    %v1581 = vld [vmem:[#allocation3 + $0xfd0] sm:$0xff]
    %v1582 = vld [vmem:[#allocation3 + $0xfd8] sm:$0xff]
    %v1583 = vld [vmem:[#allocation3 + $0xfe0] sm:$0xff]
    %v1584 = vld [vmem:[#allocation3 + $0xfe8] sm:$0xff]
    %v1585 = vld [vmem:[#allocation3 + $0xff0] sm:$0xff]
    %v1586 = vld [vmem:[#allocation3 + $0xff8] sm:$0xff]
    %v1587 = vld [vmem:[#allocation26] sm:$0xff]
    %v1589 = vperm.slane %v1587, 0
    %v1590 = vperm.slane %v1587, 1
    %v1591 = vperm.slane %v1587, 2
    %v1592 = vperm.slane %v1587, 3
    %v1593 = vperm.slane %v1587, 4
    %v1594 = vperm.slane %v1587, 5
    %v1595 = vperm.slane %v1587, 6
    %v1596 = vperm.slane %v1587, 7
    %1605 = vmatpush.msra.mxu0 %v1195
    %1606 = vmatpush.msra.mxu0 %v1187
    %1607 = vmatpush.msra.mxu0 %v1179
    %1608 = vmatpush.msra.mxu0 %v1171
    %1609 = vmatpush.msra.mxu0 %v1163
    %1610 = vmatpush.msra.mxu0 %v1155
    %1611 = vmatpush.msra.mxu0 %v1147
    %1612 = vmatpush.msra.mxu0 %v1139
    %1613 = vmatpush.msra.mxu0 %v1131
    %1614 = vmatpush.msra.mxu0 %v1123
    %1615 = vmatpush.msra.mxu0 %v1115
    %1616 = vmatpush.msra.mxu0 %v1107
    %1617 = vmatpush.msra.mxu0 %v1099
    %1618 = vmatpush.msra.mxu0 %v1091
    %1619 = vmatpush.msra.mxu0 %v1083
    %1620 = vmatpush.msra.mxu0 %v1075
    %1621 = vmatmul.f32.gmra.mxu0 %v1067
    %v1622 = vpop.f32.mrf.mxu0
    %v1623 = vadd.f32 %v1589, %v1622
    %1624 = vdwg.mxu0
    %1625 = vmatpush.msra.mxu0 %v1323
    %1626 = vmatpush.msra.mxu0 %v1315
    %1627 = vmatpush.msra.mxu0 %v1307
    %1628 = vmatpush.msra.mxu0 %v1299
    %1629 = vmatpush.msra.mxu0 %v1291
    %1630 = vmatpush.msra.mxu0 %v1283
    %1631 = vmatpush.msra.mxu0 %v1275
    %1632 = vmatpush.msra.mxu0 %v1267
    %1633 = vmatpush.msra.mxu0 %v1259
    %1634 = vmatpush.msra.mxu0 %v1251
    %1635 = vmatpush.msra.mxu0 %v1243
    %1636 = vmatpush.msra.mxu0 %v1235
    %1637 = vmatpush.msra.mxu0 %v1227
    %1638 = vmatpush.msra.mxu0 %v1219
    %1639 = vmatpush.msra.mxu0 %v1211
    %1640 = vmatpush.msra.mxu0 %v1203
    %1641 = vmatmul.f32.gmra.mxu0 %v1068
    %v1642 = vpop.f32.mrf.mxu0
    %v1643 = vadd.f32 %v1623, %v1642
    %1644 = vdwg.mxu0
    %1645 = vmatpush.msra.mxu0 %v1451
    %1646 = vmatpush.msra.mxu0 %v1443
    %1647 = vmatpush.msra.mxu0 %v1435
    %1648 = vmatpush.msra.mxu0 %v1427
    %1649 = vmatpush.msra.mxu0 %v1419
    %1650 = vmatpush.msra.mxu0 %v1411
    %1651 = vmatpush.msra.mxu0 %v1403
    %1652 = vmatpush.msra.mxu0 %v1395
    %1653 = vmatpush.msra.mxu0 %v1387
    %1654 = vmatpush.msra.mxu0 %v1379
    %1655 = vmatpush.msra.mxu0 %v1371
    %1656 = vmatpush.msra.mxu0 %v1363
    %1657 = vmatpush.msra.mxu0 %v1355
    %1658 = vmatpush.msra.mxu0 %v1347
    %1659 = vmatpush.msra.mxu0 %v1339
    %1660 = vmatpush.msra.mxu0 %v1331
    %1661 = vmatmul.f32.gmra.mxu0 %v1069
    %v1662 = vpop.f32.mrf.mxu0
    %v1663 = vadd.f32 %v1643, %v1662
    %1664 = vdwg.mxu0
    %1665 = vmatpush.msra.mxu0 %v1579
    %1666 = vmatpush.msra.mxu0 %v1571
    %1667 = vmatpush.msra.mxu0 %v1563
    %1668 = vmatpush.msra.mxu0 %v1555
    %1669 = vmatpush.msra.mxu0 %v1547
    %1670 = vmatpush.msra.mxu0 %v1539
    %1671 = vmatpush.msra.mxu0 %v1531
    %1672 = vmatpush.msra.mxu0 %v1523
    %1673 = vmatpush.msra.mxu0 %v1515
    %1674 = vmatpush.msra.mxu0 %v1507
    %1675 = vmatpush.msra.mxu0 %v1499
    %1676 = vmatpush.msra.mxu0 %v1491
    %1677 = vmatpush.msra.mxu0 %v1483
    %1678 = vmatpush.msra.mxu0 %v1475
    %1679 = vmatpush.msra.mxu0 %v1467
    %1680 = vmatpush.msra.mxu0 %v1459
    %1681 = vmatmul.f32.gmra.mxu0 %v1070
    %v1682 = vpop.f32.mrf.mxu0
    %v1683 = vadd.f32 %v1663, %v1682
    %1684 = vdwg.mxu0
    %1685 = vmatpush.msra.mxu0 %v1196
    %1686 = vmatpush.msra.mxu0 %v1188
    %1687 = vmatpush.msra.mxu0 %v1180
    %1688 = vmatpush.msra.mxu0 %v1172
    %1689 = vmatpush.msra.mxu0 %v1164
    %1690 = vmatpush.msra.mxu0 %v1156
    %1691 = vmatpush.msra.mxu0 %v1148
    %1692 = vmatpush.msra.mxu0 %v1140
    %1693 = vmatpush.msra.mxu0 %v1132
    %1694 = vmatpush.msra.mxu0 %v1124
    %1695 = vmatpush.msra.mxu0 %v1116
    %1696 = vmatpush.msra.mxu0 %v1108
    %1697 = vmatpush.msra.mxu0 %v1100
    %1698 = vmatpush.msra.mxu0 %v1092
    %1699 = vmatpush.msra.mxu0 %v1084
    %1700 = vmatpush.msra.mxu0 %v1076
    %1701 = vmatmul.f32.gmra.mxu0 %v1067
    %v1702 = vpop.f32.mrf.mxu0
    %v1703 = vadd.f32 %v1590, %v1702
    %1704 = vdwg.mxu0
    %1705 = vmatpush.msra.mxu0 %v1324
    %1706 = vmatpush.msra.mxu0 %v1316
    %1707 = vmatpush.msra.mxu0 %v1308
    %1708 = vmatpush.msra.mxu0 %v1300
    %1709 = vmatpush.msra.mxu0 %v1292
    %1710 = vmatpush.msra.mxu0 %v1284
    %1711 = vmatpush.msra.mxu0 %v1276
    %1712 = vmatpush.msra.mxu0 %v1268
    %1713 = vmatpush.msra.mxu0 %v1260
    %1714 = vmatpush.msra.mxu0 %v1252
    %1715 = vmatpush.msra.mxu0 %v1244
    %1716 = vmatpush.msra.mxu0 %v1236
    %1717 = vmatpush.msra.mxu0 %v1228
    %1718 = vmatpush.msra.mxu0 %v1220
    %1719 = vmatpush.msra.mxu0 %v1212
    %1720 = vmatpush.msra.mxu0 %v1204
    %1721 = vmatmul.f32.gmra.mxu0 %v1068
    %v1722 = vpop.f32.mrf.mxu0
    %v1723 = vadd.f32 %v1703, %v1722
    %1724 = vdwg.mxu0
    %1725 = vmatpush.msra.mxu0 %v1452
    %1726 = vmatpush.msra.mxu0 %v1444
    %1727 = vmatpush.msra.mxu0 %v1436
    %1728 = vmatpush.msra.mxu0 %v1428
    %1729 = vmatpush.msra.mxu0 %v1420
    %1730 = vmatpush.msra.mxu0 %v1412
    %1731 = vmatpush.msra.mxu0 %v1404
    %1732 = vmatpush.msra.mxu0 %v1396
    %1733 = vmatpush.msra.mxu0 %v1388
    %1734 = vmatpush.msra.mxu0 %v1380
    %1735 = vmatpush.msra.mxu0 %v1372
    %1736 = vmatpush.msra.mxu0 %v1364
    %1737 = vmatpush.msra.mxu0 %v1356
    %1738 = vmatpush.msra.mxu0 %v1348
    %1739 = vmatpush.msra.mxu0 %v1340
    %1740 = vmatpush.msra.mxu0 %v1332
    %1741 = vmatmul.f32.gmra.mxu0 %v1069
    %v1742 = vpop.f32.mrf.mxu0
    %v1743 = vadd.f32 %v1723, %v1742
    %1744 = vdwg.mxu0
    %1745 = vmatpush.msra.mxu0 %v1580
    %1746 = vmatpush.msra.mxu0 %v1572
    %1747 = vmatpush.msra.mxu0 %v1564
    %1748 = vmatpush.msra.mxu0 %v1556
    %1749 = vmatpush.msra.mxu0 %v1548
    %1750 = vmatpush.msra.mxu0 %v1540
    %1751 = vmatpush.msra.mxu0 %v1532
    %1752 = vmatpush.msra.mxu0 %v1524
    %1753 = vmatpush.msra.mxu0 %v1516
    %1754 = vmatpush.msra.mxu0 %v1508
    %1755 = vmatpush.msra.mxu0 %v1500
    %1756 = vmatpush.msra.mxu0 %v1492
    %1757 = vmatpush.msra.mxu0 %v1484
    %1758 = vmatpush.msra.mxu0 %v1476
    %1759 = vmatpush.msra.mxu0 %v1468
    %1760 = vmatpush.msra.mxu0 %v1460
    %1761 = vmatmul.f32.gmra.mxu0 %v1070
    %v1762 = vpop.f32.mrf.mxu0
    %v1763 = vadd.f32 %v1743, %v1762
    %1764 = vdwg.mxu0
    %1765 = vmatpush.msra.mxu0 %v1197
    %1766 = vmatpush.msra.mxu0 %v1189
    %1767 = vmatpush.msra.mxu0 %v1181
    %1768 = vmatpush.msra.mxu0 %v1173
    %1769 = vmatpush.msra.mxu0 %v1165
    %1770 = vmatpush.msra.mxu0 %v1157
    %1771 = vmatpush.msra.mxu0 %v1149
    %1772 = vmatpush.msra.mxu0 %v1141
    %1773 = vmatpush.msra.mxu0 %v1133
    %1774 = vmatpush.msra.mxu0 %v1125
    %1775 = vmatpush.msra.mxu0 %v1117
    %1776 = vmatpush.msra.mxu0 %v1109
    %1777 = vmatpush.msra.mxu0 %v1101
    %1778 = vmatpush.msra.mxu0 %v1093
    %1779 = vmatpush.msra.mxu0 %v1085
    %1780 = vmatpush.msra.mxu0 %v1077
    %1781 = vmatmul.f32.gmra.mxu0 %v1067
    %v1782 = vpop.f32.mrf.mxu0
    %v1783 = vadd.f32 %v1591, %v1782
    %1784 = vdwg.mxu0
    %1785 = vmatpush.msra.mxu0 %v1325
    %1786 = vmatpush.msra.mxu0 %v1317
    %1787 = vmatpush.msra.mxu0 %v1309
    %1788 = vmatpush.msra.mxu0 %v1301
    %1789 = vmatpush.msra.mxu0 %v1293
    %1790 = vmatpush.msra.mxu0 %v1285
    %1791 = vmatpush.msra.mxu0 %v1277
    %1792 = vmatpush.msra.mxu0 %v1269
    %1793 = vmatpush.msra.mxu0 %v1261
    %1794 = vmatpush.msra.mxu0 %v1253
    %1795 = vmatpush.msra.mxu0 %v1245
    %1796 = vmatpush.msra.mxu0 %v1237
    %1797 = vmatpush.msra.mxu0 %v1229
    %1798 = vmatpush.msra.mxu0 %v1221
    %1799 = vmatpush.msra.mxu0 %v1213
    %1800 = vmatpush.msra.mxu0 %v1205
    %1801 = vmatmul.f32.gmra.mxu0 %v1068
    %v1802 = vpop.f32.mrf.mxu0
    %v1803 = vadd.f32 %v1783, %v1802
    %1804 = vdwg.mxu0
    %1805 = vmatpush.msra.mxu0 %v1453
    %1806 = vmatpush.msra.mxu0 %v1445
    %1807 = vmatpush.msra.mxu0 %v1437
    %1808 = vmatpush.msra.mxu0 %v1429
    %1809 = vmatpush.msra.mxu0 %v1421
    %1810 = vmatpush.msra.mxu0 %v1413
    %1811 = vmatpush.msra.mxu0 %v1405
    %1812 = vmatpush.msra.mxu0 %v1397
    %1813 = vmatpush.msra.mxu0 %v1389
    %1814 = vmatpush.msra.mxu0 %v1381
    %1815 = vmatpush.msra.mxu0 %v1373
    %1816 = vmatpush.msra.mxu0 %v1365
    %1817 = vmatpush.msra.mxu0 %v1357
    %1818 = vmatpush.msra.mxu0 %v1349
    %1819 = vmatpush.msra.mxu0 %v1341
    %1820 = vmatpush.msra.mxu0 %v1333
    %1821 = vmatmul.f32.gmra.mxu0 %v1069
    %v1822 = vpop.f32.mrf.mxu0
    %v1823 = vadd.f32 %v1803, %v1822
    %1824 = vdwg.mxu0
    %1825 = vmatpush.msra.mxu0 %v1581
    %1826 = vmatpush.msra.mxu0 %v1573
    %1827 = vmatpush.msra.mxu0 %v1565
    %1828 = vmatpush.msra.mxu0 %v1557
    %1829 = vmatpush.msra.mxu0 %v1549
    %1830 = vmatpush.msra.mxu0 %v1541
    %1831 = vmatpush.msra.mxu0 %v1533
    %1832 = vmatpush.msra.mxu0 %v1525
    %1833 = vmatpush.msra.mxu0 %v1517
    %1834 = vmatpush.msra.mxu0 %v1509
    %1835 = vmatpush.msra.mxu0 %v1501
    %1836 = vmatpush.msra.mxu0 %v1493
    %1837 = vmatpush.msra.mxu0 %v1485
    %1838 = vmatpush.msra.mxu0 %v1477
    %1839 = vmatpush.msra.mxu0 %v1469
    %1840 = vmatpush.msra.mxu0 %v1461
    %1841 = vmatmul.f32.gmra.mxu0 %v1070
    %v1842 = vpop.f32.mrf.mxu0
    %v1843 = vadd.f32 %v1823, %v1842
    %1844 = vdwg.mxu0
    %1845 = vmatpush.msra.mxu0 %v1198
    %1846 = vmatpush.msra.mxu0 %v1190
    %1847 = vmatpush.msra.mxu0 %v1182
    %1848 = vmatpush.msra.mxu0 %v1174
    %1849 = vmatpush.msra.mxu0 %v1166
    %1850 = vmatpush.msra.mxu0 %v1158
    %1851 = vmatpush.msra.mxu0 %v1150
    %1852 = vmatpush.msra.mxu0 %v1142
    %1853 = vmatpush.msra.mxu0 %v1134
    %1854 = vmatpush.msra.mxu0 %v1126
    %1855 = vmatpush.msra.mxu0 %v1118
    %1856 = vmatpush.msra.mxu0 %v1110
    %1857 = vmatpush.msra.mxu0 %v1102
    %1858 = vmatpush.msra.mxu0 %v1094
    %1859 = vmatpush.msra.mxu0 %v1086
    %1860 = vmatpush.msra.mxu0 %v1078
    %1861 = vmatmul.f32.gmra.mxu0 %v1067
    %v1862 = vpop.f32.mrf.mxu0
    %v1863 = vadd.f32 %v1592, %v1862
    %1864 = vdwg.mxu0
    %1865 = vmatpush.msra.mxu0 %v1326
    %1866 = vmatpush.msra.mxu0 %v1318
    %1867 = vmatpush.msra.mxu0 %v1310
    %1868 = vmatpush.msra.mxu0 %v1302
    %1869 = vmatpush.msra.mxu0 %v1294
    %1870 = vmatpush.msra.mxu0 %v1286
    %1871 = vmatpush.msra.mxu0 %v1278
    %1872 = vmatpush.msra.mxu0 %v1270
    %1873 = vmatpush.msra.mxu0 %v1262
    %1874 = vmatpush.msra.mxu0 %v1254
    %1875 = vmatpush.msra.mxu0 %v1246
    %1876 = vmatpush.msra.mxu0 %v1238
    %1877 = vmatpush.msra.mxu0 %v1230
    %1878 = vmatpush.msra.mxu0 %v1222
    %1879 = vmatpush.msra.mxu0 %v1214
    %1880 = vmatpush.msra.mxu0 %v1206
    %1881 = vmatmul.f32.gmra.mxu0 %v1068
    %v1882 = vpop.f32.mrf.mxu0
    %v1883 = vadd.f32 %v1863, %v1882
    %1884 = vdwg.mxu0
    %1885 = vmatpush.msra.mxu0 %v1454
    %1886 = vmatpush.msra.mxu0 %v1446
    %1887 = vmatpush.msra.mxu0 %v1438
    %1888 = vmatpush.msra.mxu0 %v1430
    %1889 = vmatpush.msra.mxu0 %v1422
    %1890 = vmatpush.msra.mxu0 %v1414
    %1891 = vmatpush.msra.mxu0 %v1406
    %1892 = vmatpush.msra.mxu0 %v1398
    %1893 = vmatpush.msra.mxu0 %v1390
    %1894 = vmatpush.msra.mxu0 %v1382
    %1895 = vmatpush.msra.mxu0 %v1374
    %1896 = vmatpush.msra.mxu0 %v1366
    %1897 = vmatpush.msra.mxu0 %v1358
    %1898 = vmatpush.msra.mxu0 %v1350
    %1899 = vmatpush.msra.mxu0 %v1342
    %1900 = vmatpush.msra.mxu0 %v1334
    %1901 = vmatmul.f32.gmra.mxu0 %v1069
    %v1902 = vpop.f32.mrf.mxu0
    %v1903 = vadd.f32 %v1883, %v1902
    %1904 = vdwg.mxu0
    %1905 = vmatpush.msra.mxu0 %v1582
    %1906 = vmatpush.msra.mxu0 %v1574
    %1907 = vmatpush.msra.mxu0 %v1566
    %1908 = vmatpush.msra.mxu0 %v1558
    %1909 = vmatpush.msra.mxu0 %v1550
    %1910 = vmatpush.msra.mxu0 %v1542
    %1911 = vmatpush.msra.mxu0 %v1534
    %1912 = vmatpush.msra.mxu0 %v1526
    %1913 = vmatpush.msra.mxu0 %v1518
    %1914 = vmatpush.msra.mxu0 %v1510
    %1915 = vmatpush.msra.mxu0 %v1502
    %1916 = vmatpush.msra.mxu0 %v1494
    %1917 = vmatpush.msra.mxu0 %v1486
    %1918 = vmatpush.msra.mxu0 %v1478
    %1919 = vmatpush.msra.mxu0 %v1470
    %1920 = vmatpush.msra.mxu0 %v1462
    %1921 = vmatmul.f32.gmra.mxu0 %v1070
    %v1922 = vpop.f32.mrf.mxu0
    %v1923 = vadd.f32 %v1903, %v1922
    %1924 = vdwg.mxu0
    %1925 = vmatpush.msra.mxu0 %v1199
    %1926 = vmatpush.msra.mxu0 %v1191
    %1927 = vmatpush.msra.mxu0 %v1183
    %1928 = vmatpush.msra.mxu0 %v1175
    %1929 = vmatpush.msra.mxu0 %v1167
    %1930 = vmatpush.msra.mxu0 %v1159
    %1931 = vmatpush.msra.mxu0 %v1151
    %1932 = vmatpush.msra.mxu0 %v1143
    %1933 = vmatpush.msra.mxu0 %v1135
    %1934 = vmatpush.msra.mxu0 %v1127
    %1935 = vmatpush.msra.mxu0 %v1119
    %1936 = vmatpush.msra.mxu0 %v1111
    %1937 = vmatpush.msra.mxu0 %v1103
    %1938 = vmatpush.msra.mxu0 %v1095
    %1939 = vmatpush.msra.mxu0 %v1087
    %1940 = vmatpush.msra.mxu0 %v1079
    %1941 = vmatmul.f32.gmra.mxu0 %v1067
    %v1942 = vpop.f32.mrf.mxu0
    %v1943 = vadd.f32 %v1593, %v1942
    %1944 = vdwg.mxu0
    %1945 = vmatpush.msra.mxu0 %v1327
    %1946 = vmatpush.msra.mxu0 %v1319
    %1947 = vmatpush.msra.mxu0 %v1311
    %1948 = vmatpush.msra.mxu0 %v1303
    %1949 = vmatpush.msra.mxu0 %v1295
    %1950 = vmatpush.msra.mxu0 %v1287
    %1951 = vmatpush.msra.mxu0 %v1279
    %1952 = vmatpush.msra.mxu0 %v1271
    %1953 = vmatpush.msra.mxu0 %v1263
    %1954 = vmatpush.msra.mxu0 %v1255
    %1955 = vmatpush.msra.mxu0 %v1247
    %1956 = vmatpush.msra.mxu0 %v1239
    %1957 = vmatpush.msra.mxu0 %v1231
    %1958 = vmatpush.msra.mxu0 %v1223
    %1959 = vmatpush.msra.mxu0 %v1215
    %1960 = vmatpush.msra.mxu0 %v1207
    %1961 = vmatmul.f32.gmra.mxu0 %v1068
    %v1962 = vpop.f32.mrf.mxu0
    %v1963 = vadd.f32 %v1943, %v1962
    %1964 = vdwg.mxu0
    %1965 = vmatpush.msra.mxu0 %v1455
    %1966 = vmatpush.msra.mxu0 %v1447
    %1967 = vmatpush.msra.mxu0 %v1439
    %1968 = vmatpush.msra.mxu0 %v1431
    %1969 = vmatpush.msra.mxu0 %v1423
    %1970 = vmatpush.msra.mxu0 %v1415
    %1971 = vmatpush.msra.mxu0 %v1407
    %1972 = vmatpush.msra.mxu0 %v1399
    %1973 = vmatpush.msra.mxu0 %v1391
    %1974 = vmatpush.msra.mxu0 %v1383
    %1975 = vmatpush.msra.mxu0 %v1375
    %1976 = vmatpush.msra.mxu0 %v1367
    %1977 = vmatpush.msra.mxu0 %v1359
    %1978 = vmatpush.msra.mxu0 %v1351
    %1979 = vmatpush.msra.mxu0 %v1343
    %1980 = vmatpush.msra.mxu0 %v1335
    %1981 = vmatmul.f32.gmra.mxu0 %v1069
    %v1982 = vpop.f32.mrf.mxu0
    %v1983 = vadd.f32 %v1963, %v1982
    %1984 = vdwg.mxu0
    %1985 = vmatpush.msra.mxu0 %v1583
    %1986 = vmatpush.msra.mxu0 %v1575
    %1987 = vmatpush.msra.mxu0 %v1567
    %1988 = vmatpush.msra.mxu0 %v1559
    %1989 = vmatpush.msra.mxu0 %v1551
    %1990 = vmatpush.msra.mxu0 %v1543
    %1991 = vmatpush.msra.mxu0 %v1535
    %1992 = vmatpush.msra.mxu0 %v1527
    %1993 = vmatpush.msra.mxu0 %v1519
    %1994 = vmatpush.msra.mxu0 %v1511
    %1995 = vmatpush.msra.mxu0 %v1503
    %1996 = vmatpush.msra.mxu0 %v1495
    %1997 = vmatpush.msra.mxu0 %v1487
    %1998 = vmatpush.msra.mxu0 %v1479
    %1999 = vmatpush.msra.mxu0 %v1471
    %2000 = vmatpush.msra.mxu0 %v1463
    %2001 = vmatmul.f32.gmra.mxu0 %v1070
    %v2002 = vpop.f32.mrf.mxu0
    %v2003 = vadd.f32 %v1983, %v2002
    %2004 = vdwg.mxu0
    %2005 = vmatpush.msra.mxu0 %v1200
    %2006 = vmatpush.msra.mxu0 %v1192
    %2007 = vmatpush.msra.mxu0 %v1184
    %2008 = vmatpush.msra.mxu0 %v1176
    %2009 = vmatpush.msra.mxu0 %v1168
    %2010 = vmatpush.msra.mxu0 %v1160
    %2011 = vmatpush.msra.mxu0 %v1152
    %2012 = vmatpush.msra.mxu0 %v1144
    %2013 = vmatpush.msra.mxu0 %v1136
    %2014 = vmatpush.msra.mxu0 %v1128
    %2015 = vmatpush.msra.mxu0 %v1120
    %2016 = vmatpush.msra.mxu0 %v1112
    %2017 = vmatpush.msra.mxu0 %v1104
    %2018 = vmatpush.msra.mxu0 %v1096
    %2019 = vmatpush.msra.mxu0 %v1088
    %2020 = vmatpush.msra.mxu0 %v1080
    %2021 = vmatmul.f32.gmra.mxu0 %v1067
    %v2022 = vpop.f32.mrf.mxu0
    %v2023 = vadd.f32 %v1594, %v2022
    %2024 = vdwg.mxu0
    %2025 = vmatpush.msra.mxu0 %v1328
    %2026 = vmatpush.msra.mxu0 %v1320
    %2027 = vmatpush.msra.mxu0 %v1312
    %2028 = vmatpush.msra.mxu0 %v1304
    %2029 = vmatpush.msra.mxu0 %v1296
    %2030 = vmatpush.msra.mxu0 %v1288
    %2031 = vmatpush.msra.mxu0 %v1280
    %2032 = vmatpush.msra.mxu0 %v1272
    %2033 = vmatpush.msra.mxu0 %v1264
    %2034 = vmatpush.msra.mxu0 %v1256
    %2035 = vmatpush.msra.mxu0 %v1248
    %2036 = vmatpush.msra.mxu0 %v1240
    %2037 = vmatpush.msra.mxu0 %v1232
    %2038 = vmatpush.msra.mxu0 %v1224
    %2039 = vmatpush.msra.mxu0 %v1216
    %2040 = vmatpush.msra.mxu0 %v1208
    %2041 = vmatmul.f32.gmra.mxu0 %v1068
    %v2042 = vpop.f32.mrf.mxu0
    %v2043 = vadd.f32 %v2023, %v2042
    %2044 = vdwg.mxu0
    %2045 = vmatpush.msra.mxu0 %v1456
    %2046 = vmatpush.msra.mxu0 %v1448
    %2047 = vmatpush.msra.mxu0 %v1440
    %2048 = vmatpush.msra.mxu0 %v1432
    %2049 = vmatpush.msra.mxu0 %v1424
    %2050 = vmatpush.msra.mxu0 %v1416
    %2051 = vmatpush.msra.mxu0 %v1408
    %2052 = vmatpush.msra.mxu0 %v1400
    %2053 = vmatpush.msra.mxu0 %v1392
    %2054 = vmatpush.msra.mxu0 %v1384
    %2055 = vmatpush.msra.mxu0 %v1376
    %2056 = vmatpush.msra.mxu0 %v1368
    %2057 = vmatpush.msra.mxu0 %v1360
    %2058 = vmatpush.msra.mxu0 %v1352
    %2059 = vmatpush.msra.mxu0 %v1344
    %2060 = vmatpush.msra.mxu0 %v1336
    %2061 = vmatmul.f32.gmra.mxu0 %v1069
    %v2062 = vpop.f32.mrf.mxu0
    %v2063 = vadd.f32 %v2043, %v2062
    %2064 = vdwg.mxu0
    %2065 = vmatpush.msra.mxu0 %v1584
    %2066 = vmatpush.msra.mxu0 %v1576
    %2067 = vmatpush.msra.mxu0 %v1568
    %2068 = vmatpush.msra.mxu0 %v1560
    %2069 = vmatpush.msra.mxu0 %v1552
    %2070 = vmatpush.msra.mxu0 %v1544
    %2071 = vmatpush.msra.mxu0 %v1536
    %2072 = vmatpush.msra.mxu0 %v1528
    %2073 = vmatpush.msra.mxu0 %v1520
    %2074 = vmatpush.msra.mxu0 %v1512
    %2075 = vmatpush.msra.mxu0 %v1504
    %2076 = vmatpush.msra.mxu0 %v1496
    %2077 = vmatpush.msra.mxu0 %v1488
    %2078 = vmatpush.msra.mxu0 %v1480
    %2079 = vmatpush.msra.mxu0 %v1472
    %2080 = vmatpush.msra.mxu0 %v1464
    %2081 = vmatmul.f32.gmra.mxu0 %v1070
    %v2082 = vpop.f32.mrf.mxu0
    %v2083 = vadd.f32 %v2063, %v2082
    %2084 = vdwg.mxu0
    %2085 = vmatpush.msra.mxu0 %v1201
    %2086 = vmatpush.msra.mxu0 %v1193
    %2087 = vmatpush.msra.mxu0 %v1185
    %2088 = vmatpush.msra.mxu0 %v1177
    %2089 = vmatpush.msra.mxu0 %v1169
    %2090 = vmatpush.msra.mxu0 %v1161
    %2091 = vmatpush.msra.mxu0 %v1153
    %2092 = vmatpush.msra.mxu0 %v1145
    %2093 = vmatpush.msra.mxu0 %v1137
    %2094 = vmatpush.msra.mxu0 %v1129
    %2095 = vmatpush.msra.mxu0 %v1121
    %2096 = vmatpush.msra.mxu0 %v1113
    %2097 = vmatpush.msra.mxu0 %v1105
    %2098 = vmatpush.msra.mxu0 %v1097
    %2099 = vmatpush.msra.mxu0 %v1089
    %2100 = vmatpush.msra.mxu0 %v1081
    %2101 = vmatmul.f32.gmra.mxu0 %v1067
    %v2102 = vpop.f32.mrf.mxu0
    %v2103 = vadd.f32 %v1595, %v2102
    %2104 = vdwg.mxu0
    %2105 = vmatpush.msra.mxu0 %v1329
    %2106 = vmatpush.msra.mxu0 %v1321
    %2107 = vmatpush.msra.mxu0 %v1313
    %2108 = vmatpush.msra.mxu0 %v1305
    %2109 = vmatpush.msra.mxu0 %v1297
    %2110 = vmatpush.msra.mxu0 %v1289
    %2111 = vmatpush.msra.mxu0 %v1281
    %2112 = vmatpush.msra.mxu0 %v1273
    %2113 = vmatpush.msra.mxu0 %v1265
    %2114 = vmatpush.msra.mxu0 %v1257
    %2115 = vmatpush.msra.mxu0 %v1249
    %2116 = vmatpush.msra.mxu0 %v1241
    %2117 = vmatpush.msra.mxu0 %v1233
    %2118 = vmatpush.msra.mxu0 %v1225
    %2119 = vmatpush.msra.mxu0 %v1217
    %2120 = vmatpush.msra.mxu0 %v1209
    %2121 = vmatmul.f32.gmra.mxu0 %v1068
    %v2122 = vpop.f32.mrf.mxu0
    %v2123 = vadd.f32 %v2103, %v2122
    %2124 = vdwg.mxu0
    %2125 = vmatpush.msra.mxu0 %v1457
    %2126 = vmatpush.msra.mxu0 %v1449
    %2127 = vmatpush.msra.mxu0 %v1441
    %2128 = vmatpush.msra.mxu0 %v1433
    %2129 = vmatpush.msra.mxu0 %v1425
    %2130 = vmatpush.msra.mxu0 %v1417
    %2131 = vmatpush.msra.mxu0 %v1409
    %2132 = vmatpush.msra.mxu0 %v1401
    %2133 = vmatpush.msra.mxu0 %v1393
    %2134 = vmatpush.msra.mxu0 %v1385
    %2135 = vmatpush.msra.mxu0 %v1377
    %2136 = vmatpush.msra.mxu0 %v1369
    %2137 = vmatpush.msra.mxu0 %v1361
    %2138 = vmatpush.msra.mxu0 %v1353
    %2139 = vmatpush.msra.mxu0 %v1345
    %2140 = vmatpush.msra.mxu0 %v1337
    %2141 = vmatmul.f32.gmra.mxu0 %v1069
    %v2142 = vpop.f32.mrf.mxu0
    %v2143 = vadd.f32 %v2123, %v2142
    %2144 = vdwg.mxu0
    %2145 = vmatpush.msra.mxu0 %v1585
    %2146 = vmatpush.msra.mxu0 %v1577
    %2147 = vmatpush.msra.mxu0 %v1569
    %2148 = vmatpush.msra.mxu0 %v1561
    %2149 = vmatpush.msra.mxu0 %v1553
    %2150 = vmatpush.msra.mxu0 %v1545
    %2151 = vmatpush.msra.mxu0 %v1537
    %2152 = vmatpush.msra.mxu0 %v1529
    %2153 = vmatpush.msra.mxu0 %v1521
    %2154 = vmatpush.msra.mxu0 %v1513
    %2155 = vmatpush.msra.mxu0 %v1505
    %2156 = vmatpush.msra.mxu0 %v1497
    %2157 = vmatpush.msra.mxu0 %v1489
    %2158 = vmatpush.msra.mxu0 %v1481
    %2159 = vmatpush.msra.mxu0 %v1473
    %2160 = vmatpush.msra.mxu0 %v1465
    %2161 = vmatmul.f32.gmra.mxu0 %v1070
    %v2162 = vpop.f32.mrf.mxu0
    %v2163 = vadd.f32 %v2143, %v2162
    %2164 = vdwg.mxu0
    %2165 = vmatpush.msra.mxu0 %v1202
    %2166 = vmatpush.msra.mxu0 %v1194
    %2167 = vmatpush.msra.mxu0 %v1186
    %2168 = vmatpush.msra.mxu0 %v1178
    %2169 = vmatpush.msra.mxu0 %v1170
    %2170 = vmatpush.msra.mxu0 %v1162
    %2171 = vmatpush.msra.mxu0 %v1154
    %2172 = vmatpush.msra.mxu0 %v1146
    %2173 = vmatpush.msra.mxu0 %v1138
    %2174 = vmatpush.msra.mxu0 %v1130
    %2175 = vmatpush.msra.mxu0 %v1122
    %2176 = vmatpush.msra.mxu0 %v1114
    %2177 = vmatpush.msra.mxu0 %v1106
    %2178 = vmatpush.msra.mxu0 %v1098
    %2179 = vmatpush.msra.mxu0 %v1090
    %2180 = vmatpush.msra.mxu0 %v1082
    %2181 = vmatmul.f32.gmra.mxu0 %v1067
    %v2182 = vpop.f32.mrf.mxu0
    %v2183 = vadd.f32 %v1596, %v2182
    %2184 = vdwg.mxu0
    %2185 = vmatpush.msra.mxu0 %v1330
    %2186 = vmatpush.msra.mxu0 %v1322
    %2187 = vmatpush.msra.mxu0 %v1314
    %2188 = vmatpush.msra.mxu0 %v1306
    %2189 = vmatpush.msra.mxu0 %v1298
    %2190 = vmatpush.msra.mxu0 %v1290
    %2191 = vmatpush.msra.mxu0 %v1282
    %2192 = vmatpush.msra.mxu0 %v1274
    %2193 = vmatpush.msra.mxu0 %v1266
    %2194 = vmatpush.msra.mxu0 %v1258
    %2195 = vmatpush.msra.mxu0 %v1250
    %2196 = vmatpush.msra.mxu0 %v1242
    %2197 = vmatpush.msra.mxu0 %v1234
    %2198 = vmatpush.msra.mxu0 %v1226
    %2199 = vmatpush.msra.mxu0 %v1218
    %2200 = vmatpush.msra.mxu0 %v1210
    %2201 = vmatmul.f32.gmra.mxu0 %v1068
    %v2202 = vpop.f32.mrf.mxu0
    %v2203 = vadd.f32 %v2183, %v2202
    %2204 = vdwg.mxu0
    %2205 = vmatpush.msra.mxu0 %v1458
    %2206 = vmatpush.msra.mxu0 %v1450
    %2207 = vmatpush.msra.mxu0 %v1442
    %2208 = vmatpush.msra.mxu0 %v1434
    %2209 = vmatpush.msra.mxu0 %v1426
    %2210 = vmatpush.msra.mxu0 %v1418
    %2211 = vmatpush.msra.mxu0 %v1410
    %2212 = vmatpush.msra.mxu0 %v1402
    %2213 = vmatpush.msra.mxu0 %v1394
    %2214 = vmatpush.msra.mxu0 %v1386
    %2215 = vmatpush.msra.mxu0 %v1378
    %2216 = vmatpush.msra.mxu0 %v1370
    %2217 = vmatpush.msra.mxu0 %v1362
    %2218 = vmatpush.msra.mxu0 %v1354
    %2219 = vmatpush.msra.mxu0 %v1346
    %2220 = vmatpush.msra.mxu0 %v1338
    %2221 = vmatmul.f32.gmra.mxu0 %v1069
    %v2222 = vpop.f32.mrf.mxu0
    %v2223 = vadd.f32 %v2203, %v2222
    %2224 = vdwg.mxu0
    %2225 = vmatpush.msra.mxu0 %v1586
    %2226 = vmatpush.msra.mxu0 %v1578
    %2227 = vmatpush.msra.mxu0 %v1570
    %2228 = vmatpush.msra.mxu0 %v1562
    %2229 = vmatpush.msra.mxu0 %v1554
    %2230 = vmatpush.msra.mxu0 %v1546
    %2231 = vmatpush.msra.mxu0 %v1538
    %2232 = vmatpush.msra.mxu0 %v1530
    %2233 = vmatpush.msra.mxu0 %v1522
    %2234 = vmatpush.msra.mxu0 %v1514
    %2235 = vmatpush.msra.mxu0 %v1506
    %2236 = vmatpush.msra.mxu0 %v1498
    %2237 = vmatpush.msra.mxu0 %v1490
    %2238 = vmatpush.msra.mxu0 %v1482
    %2239 = vmatpush.msra.mxu0 %v1474
    %2240 = vmatpush.msra.mxu0 %v1466
    %2241 = vmatmul.f32.gmra.mxu0 %v1070
    %v2242 = vpop.f32.mrf.mxu0
    %v2243 = vadd.f32 %v2223, %v2242
    %2244 = vdwg.mxu0
    %v2245 = vmul.f32 %v1683, %v323
    %v2246 = vmul.f32 %v1763, %v323
    %v2247 = vmul.f32 %v1843, %v323
    %v2248 = vmul.f32 %v1923, %v323
    %v2249 = vmul.f32 %v2003, %v323
    %v2250 = vmul.f32 %v2083, %v323
    %v2251 = vmul.f32 %v2163, %v323
    %v2252 = vmul.f32 %v2243, %v323
    %v2253 = vrot.slane %v2245, 4
    %v2254 = vadd.f32 %v2245, %v2253
    %v2255 = vrot.slane %v2254, 2
    %v2256 = vadd.f32 %v2254, %v2255
    %v2257 = vrot.slane %v2256, 1
    %v2258 = vadd.f32 %v2256, %v2257
    %v2259 = vrot.slane %v2246, 4
    %v2260 = vadd.f32 %v2246, %v2259
    %v2261 = vrot.slane %v2260, 2
    %v2262 = vadd.f32 %v2260, %v2261
    %v2263 = vrot.slane %v2262, 1
    %v2264 = vadd.f32 %v2262, %v2263
    %v2265 = vrot.slane %v2247, 4
    %v2266 = vadd.f32 %v2247, %v2265
    %v2267 = vrot.slane %v2266, 2
    %v2268 = vadd.f32 %v2266, %v2267
    %v2269 = vrot.slane %v2268, 1
    %v2270 = vadd.f32 %v2268, %v2269
    %v2271 = vrot.slane %v2248, 4
    %v2272 = vadd.f32 %v2248, %v2271
    %v2273 = vrot.slane %v2272, 2
    %v2274 = vadd.f32 %v2272, %v2273
    %v2275 = vrot.slane %v2274, 1
    %v2276 = vadd.f32 %v2274, %v2275
    %v2277 = vrot.slane %v2249, 4
    %v2278 = vadd.f32 %v2249, %v2277
    %v2279 = vrot.slane %v2278, 2
    %v2280 = vadd.f32 %v2278, %v2279
    %v2281 = vrot.slane %v2280, 1
    %v2282 = vadd.f32 %v2280, %v2281
    %v2283 = vrot.slane %v2250, 4
    %v2284 = vadd.f32 %v2250, %v2283
    %v2285 = vrot.slane %v2284, 2
    %v2286 = vadd.f32 %v2284, %v2285
    %v2287 = vrot.slane %v2286, 1
    %v2288 = vadd.f32 %v2286, %v2287
    %v2289 = vrot.slane %v2251, 4
    %v2290 = vadd.f32 %v2251, %v2289
    %v2291 = vrot.slane %v2290, 2
    %v2292 = vadd.f32 %v2290, %v2291
    %v2293 = vrot.slane %v2292, 1
    %v2294 = vadd.f32 %v2292, %v2293
    %v2295 = vrot.slane %v2252, 4
    %v2296 = vadd.f32 %v2252, %v2295
    %v2297 = vrot.slane %v2296, 2
    %v2298 = vadd.f32 %v2296, %v2297
    %v2299 = vrot.slane %v2298, 1
    %v2300 = vadd.f32 %v2298, %v2299
    %v2301 = vmul.f32 %v2258, 0.5
    %v2302 = vmul.f32 %v2264, 0.5
    %v2303 = vmul.f32 %v2270, 0.5
    %v2304 = vmul.f32 %v2276, 0.5
    %v2305 = vmul.f32 %v2282, 0.5
    %v2306 = vmul.f32 %v2288, 0.5
    %v2307 = vmul.f32 %v2294, 0.5
    %v2308 = vmul.f32 %v2300, 0.5
    %v2309 = vmul.f32 %v2245, %v1683
    %v2310 = vmul.f32 %v2246, %v1763
    %v2311 = vmul.f32 %v2247, %v1843
    %v2312 = vmul.f32 %v2248, %v1923
    %v2313 = vmul.f32 %v2249, %v2003
    %v2314 = vmul.f32 %v2250, %v2083
    %v2315 = vmul.f32 %v2251, %v2163
    %v2316 = vmul.f32 %v2252, %v2243
    %v2317 = vrot.slane %v2309, 4
    %v2318 = vadd.f32 %v2309, %v2317
    %v2319 = vrot.slane %v2318, 2
    %v2320 = vadd.f32 %v2318, %v2319
    %v2321 = vrot.slane %v2320, 1
    %v2322 = vadd.f32 %v2320, %v2321
    %v2323 = vrot.slane %v2310, 4
    %v2324 = vadd.f32 %v2310, %v2323
    %v2325 = vrot.slane %v2324, 2
    %v2326 = vadd.f32 %v2324, %v2325
    %v2327 = vrot.slane %v2326, 1
    %v2328 = vadd.f32 %v2326, %v2327
    %v2329 = vrot.slane %v2311, 4
    %v2330 = vadd.f32 %v2311, %v2329
    %v2331 = vrot.slane %v2330, 2
    %v2332 = vadd.f32 %v2330, %v2331
    %v2333 = vrot.slane %v2332, 1
    %v2334 = vadd.f32 %v2332, %v2333
    %v2335 = vrot.slane %v2312, 4
    %v2336 = vadd.f32 %v2312, %v2335
    %v2337 = vrot.slane %v2336, 2
    %v2338 = vadd.f32 %v2336, %v2337
    %v2339 = vrot.slane %v2338, 1
    %v2340 = vadd.f32 %v2338, %v2339
    %v2341 = vrot.slane %v2313, 4
    %v2342 = vadd.f32 %v2313, %v2341
    %v2343 = vrot.slane %v2342, 2
    %v2344 = vadd.f32 %v2342, %v2343
    %v2345 = vrot.slane %v2344, 1
    %v2346 = vadd.f32 %v2344, %v2345
    %v2347 = vrot.slane %v2314, 4
    %v2348 = vadd.f32 %v2314, %v2347
    %v2349 = vrot.slane %v2348, 2
    %v2350 = vadd.f32 %v2348, %v2349
    %v2351 = vrot.slane %v2350, 1
    %v2352 = vadd.f32 %v2350, %v2351
    %v2353 = vrot.slane %v2315, 4
    %v2354 = vadd.f32 %v2315, %v2353
    %v2355 = vrot.slane %v2354, 2
    %v2356 = vadd.f32 %v2354, %v2355
    %v2357 = vrot.slane %v2356, 1
    %v2358 = vadd.f32 %v2356, %v2357
    %v2359 = vrot.slane %v2316, 4
    %v2360 = vadd.f32 %v2316, %v2359
    %v2361 = vrot.slane %v2360, 2
    %v2362 = vadd.f32 %v2360, %v2361
    %v2363 = vrot.slane %v2362, 1
    %v2364 = vadd.f32 %v2362, %v2363
    %v2365 = vmul.f32 %v2322, 0.5
    %v2366 = vmul.f32 %v2328, 0.5
    %v2367 = vmul.f32 %v2334, 0.5
    %v2368 = vmul.f32 %v2340, 0.5
    %v2369 = vmul.f32 %v2346, 0.5
    %v2370 = vmul.f32 %v2352, 0.5
    %v2371 = vmul.f32 %v2358, 0.5
    %v2372 = vmul.f32 %v2364, 0.5
    %v2373 = vmul.f32 %v2301, %v2301
    %v2374 = vmul.f32 %v2302, %v2302
    %v2375 = vmul.f32 %v2303, %v2303
    %v2376 = vmul.f32 %v2304, %v2304
    %v2377 = vmul.f32 %v2305, %v2305
    %v2378 = vmul.f32 %v2306, %v2306
    %v2379 = vmul.f32 %v2307, %v2307
    %v2380 = vmul.f32 %v2308, %v2308
    %v2381 = vsub.f32 %v2365, %v2373
    %v2382 = vsub.f32 %v2366, %v2374
    %v2383 = vsub.f32 %v2367, %v2375
    %v2384 = vsub.f32 %v2368, %v2376
    %v2385 = vsub.f32 %v2369, %v2377
    %v2386 = vsub.f32 %v2370, %v2378
    %v2387 = vsub.f32 %v2371, %v2379
    %v2388 = vsub.f32 %v2372, %v2380
    %v2389 = vld [vmem:[#allocation27] sm:$0xff]
    %v2390 = vadd.f32 %v2381, 0.8
    %v2391 = vadd.f32 %v2382, 0.8
    %v2392 = vadd.f32 %v2383, 0.8
    %v2393 = vadd.f32 %v2384, 0.8
    %v2394 = vadd.f32 %v2385, 0.8
    %v2395 = vadd.f32 %v2386, 0.8
    %v2396 = vadd.f32 %v2387, 0.8
    %v2397 = vadd.f32 %v2388, 0.8
    %v2398 = vrsqrt.pop %v2390
    %v2399 = vmul.f32 %v2398, %v2390
    %v2400 = vmul.f32 %v2399, %v2398
    %v2401 = vmul.f32 0.5, %v2400
    %v2402 = vsub.f32 1.5, %v2401
    %v2403 = vmul.f32 %v2398, %v2402
    %vm2404 = vweird.f32 %v2390
    %vm2405 = vweird.f32 %v2398
    %vm2406 = vmor %vm2404, %vm2405
    %v2407 = vsel %vm2406, %v2398, %v2403
    %v2408 = vrsqrt.pop %v2391
    %v2409 = vmul.f32 %v2408, %v2391
    %v2410 = vmul.f32 %v2409, %v2408
    %v2411 = vmul.f32 0.5, %v2410
    %v2412 = vsub.f32 1.5, %v2411
    %v2413 = vmul.f32 %v2408, %v2412
    %vm2414 = vweird.f32 %v2391
    %vm2415 = vweird.f32 %v2408
    %vm2416 = vmor %vm2414, %vm2415
    %v2417 = vsel %vm2416, %v2408, %v2413
    %v2418 = vrsqrt.pop %v2392
    %v2419 = vmul.f32 %v2418, %v2392
    %v2420 = vmul.f32 %v2419, %v2418
    %v2421 = vmul.f32 0.5, %v2420
    %v2422 = vsub.f32 1.5, %v2421
    %v2423 = vmul.f32 %v2418, %v2422
    %vm2424 = vweird.f32 %v2392
    %vm2425 = vweird.f32 %v2418
    %vm2426 = vmor %vm2424, %vm2425
    %v2427 = vsel %vm2426, %v2418, %v2423
    %v2428 = vrsqrt.pop %v2393
    %v2429 = vmul.f32 %v2428, %v2393
    %v2430 = vmul.f32 %v2429, %v2428
    %v2431 = vmul.f32 0.5, %v2430
    %v2432 = vsub.f32 1.5, %v2431
    %v2433 = vmul.f32 %v2428, %v2432
    %vm2434 = vweird.f32 %v2393
    %vm2435 = vweird.f32 %v2428
    %vm2436 = vmor %vm2434, %vm2435
    %v2437 = vsel %vm2436, %v2428, %v2433
    %v2438 = vrsqrt.pop %v2394
    %v2439 = vmul.f32 %v2438, %v2394
    %v2440 = vmul.f32 %v2439, %v2438
    %v2441 = vmul.f32 0.5, %v2440
    %v2442 = vsub.f32 1.5, %v2441
    %v2443 = vmul.f32 %v2438, %v2442
    %vm2444 = vweird.f32 %v2394
    %vm2445 = vweird.f32 %v2438
    %vm2446 = vmor %vm2444, %vm2445
    %v2447 = vsel %vm2446, %v2438, %v2443
    %v2448 = vrsqrt.pop %v2395
    %v2449 = vmul.f32 %v2448, %v2395
    %v2450 = vmul.f32 %v2449, %v2448
    %v2451 = vmul.f32 0.5, %v2450
    %v2452 = vsub.f32 1.5, %v2451
    %v2453 = vmul.f32 %v2448, %v2452
    %vm2454 = vweird.f32 %v2395
    %vm2455 = vweird.f32 %v2448
    %vm2456 = vmor %vm2454, %vm2455
    %v2457 = vsel %vm2456, %v2448, %v2453
    %v2458 = vrsqrt.pop %v2396
    %v2459 = vmul.f32 %v2458, %v2396
    %v2460 = vmul.f32 %v2459, %v2458
    %v2461 = vmul.f32 0.5, %v2460
    %v2462 = vsub.f32 1.5, %v2461
    %v2463 = vmul.f32 %v2458, %v2462
    %vm2464 = vweird.f32 %v2396
    %vm2465 = vweird.f32 %v2458
    %vm2466 = vmor %vm2464, %vm2465
    %v2467 = vsel %vm2466, %v2458, %v2463
    %v2468 = vrsqrt.pop %v2397
    %v2469 = vmul.f32 %v2468, %v2397
    %v2470 = vmul.f32 %v2469, %v2468
    %v2471 = vmul.f32 0.5, %v2470
    %v2472 = vsub.f32 1.5, %v2471
    %v2473 = vmul.f32 %v2468, %v2472
    %vm2474 = vweird.f32 %v2397
    %vm2475 = vweird.f32 %v2468
    %vm2476 = vmor %vm2474, %vm2475
    %v2477 = vsel %vm2476, %v2468, %v2473
    %v2486 = vrot.slane %v2417, 7
    %v2487 = vrot.slane %v2427, 6
    %v2488 = vrot.slane %v2437, 5
    %v2489 = vrot.slane %v2447, 4
    %v2490 = vrot.slane %v2457, 3
    %v2491 = vrot.slane %v2467, 2
    %v2492 = vrot.slane %v2477, 1
    %v2493 = vsel %vm550, %v2407, %v2486
    %v2494 = vsel %vm1010, %v2487, %v2488
    %v2495 = vsel %vm1012, %v2493, %v2494
    %vm2496 = vcmask 1044484
    %v2497 = vsel %vm2496, %v2489, %v2490
    %vm2498 = vcmask 1046534
    %v2499 = vsel %vm2498, %v2491, %v2492
    %vm2500 = vcmask 1045508
    %v2501 = vsel %vm2500, %v2497, %v2499
    %vm2502 = vcmask 1043456
    %v2503 = vsel %vm2502, %v2495, %v2501
    %v2505 = vmul.f32 %v2389, %v2503
    %v2506 = vld [vmem:[#allocation29] sm:$0xff]
    %v2508 = vperm.slane %v2505, 0
    %v2509 = vperm.slane %v2505, 1
    %v2510 = vperm.slane %v2505, 2
    %v2511 = vperm.slane %v2505, 3
    %v2512 = vperm.slane %v2505, 4
    %v2513 = vperm.slane %v2505, 5
    %v2514 = vperm.slane %v2505, 6
    %v2515 = vperm.slane %v2505, 7
    %v2524 = vmul.f32 %v2301, %v2508
    %v2525 = vmul.f32 %v2302, %v2509
    %v2526 = vmul.f32 %v2303, %v2510
    %v2527 = vmul.f32 %v2304, %v2511
    %v2528 = vmul.f32 %v2305, %v2512
    %v2529 = vmul.f32 %v2306, %v2513
    %v2530 = vmul.f32 %v2307, %v2514
    %v2531 = vmul.f32 %v2308, %v2515
    %v2540 = vrot.slane %v2525, 7
    %v2541 = vrot.slane %v2526, 6
    %v2542 = vrot.slane %v2527, 5
    %v2543 = vrot.slane %v2528, 4
    %v2544 = vrot.slane %v2529, 3
    %v2545 = vrot.slane %v2530, 2
    %v2546 = vrot.slane %v2531, 1
    %v2547 = vsel %vm550, %v2524, %v2540
    %v2548 = vsel %vm1010, %v2541, %v2542
    %v2549 = vsel %vm1012, %v2547, %v2548
    %v2550 = vsel %vm2496, %v2543, %v2544
    %v2551 = vsel %vm2498, %v2545, %v2546
    %v2552 = vsel %vm2500, %v2550, %v2551
    %v2553 = vsel %vm2502, %v2549, %v2552
    %v2555 = vsub.f32 %v2506, %v2553
    %v2556 = vmul.f32 %v1683, %v2508
    %v2557 = vmul.f32 %v1763, %v2509
    %v2558 = vmul.f32 %v1843, %v2510
    %v2559 = vmul.f32 %v1923, %v2511
    %v2560 = vmul.f32 %v2003, %v2512
    %v2561 = vmul.f32 %v2083, %v2513
    %v2562 = vmul.f32 %v2163, %v2514
    %v2563 = vmul.f32 %v2243, %v2515
    %v2565 = vperm.slane %v2555, 0
    %v2566 = vperm.slane %v2555, 1
    %v2567 = vperm.slane %v2555, 2
    %v2568 = vperm.slane %v2555, 3
    %v2569 = vperm.slane %v2555, 4
    %v2570 = vperm.slane %v2555, 5
    %v2571 = vperm.slane %v2555, 6
    %v2572 = vperm.slane %v2555, 7
    %v2581 = vadd.f32 %v2556, %v2565
    %v2582 = vadd.f32 %v2557, %v2566
    %v2583 = vadd.f32 %v2558, %v2567
    %v2584 = vadd.f32 %v2559, %v2568
    %v2585 = vadd.f32 %v2560, %v2569
    %v2586 = vadd.f32 %v2561, %v2570
    %v2587 = vadd.f32 %v2562, %v2571
    %v2588 = vadd.f32 %v2563, %v2572
    %vm2589 = vcmp.gt.f32.partialorder %v2581, 0.0
    %vm2590 = vcmp.gt.f32.partialorder %v2582, 0.0
    %vm2591 = vcmp.gt.f32.partialorder %v2583, 0.0
    %vm2592 = vcmp.gt.f32.partialorder %v2584, 0.0
    %vm2593 = vcmp.gt.f32.partialorder %v2585, 0.0
    %vm2594 = vcmp.gt.f32.partialorder %v2586, 0.0
    %vm2595 = vcmp.gt.f32.partialorder %v2587, 0.0
    %vm2596 = vcmp.gt.f32.partialorder %v2588, 0.0
    %v2597 = vmul.f32 %v2581, 0.2
    %v2598 = vmul.f32 %v2582, 0.2
    %v2599 = vmul.f32 %v2583, 0.2
    %v2600 = vmul.f32 %v2584, 0.2
    %v2601 = vmul.f32 %v2585, 0.2
    %v2602 = vmul.f32 %v2586, 0.2
    %v2603 = vmul.f32 %v2587, 0.2
    %v2604 = vmul.f32 %v2588, 0.2
    %v2605 = vsel %vm2589, %v2581, %v2597
    %v2606 = vsel %vm2590, %v2582, %v2598
    %v2607 = vsel %vm2591, %v2583, %v2599
    %v2608 = vsel %vm2592, %v2584, %v2600
    %v2609 = vsel %vm2593, %v2585, %v2601
    %v2610 = vsel %vm2594, %v2586, %v2602
    %v2611 = vsel %vm2595, %v2587, %v2603
    %v2612 = vsel %vm2596, %v2588, %v2604
    %s2613 = smul.u32 8, 128
    %s2614 = smul.u32 %s2613, 2
    %s2615 = sshll.u32 %s2614, 4
    %2616 = dma.done %s305, %s2615
    %v2617 = vld [vmem:[#allocation4] sm:$0xff]
    %v2618 = vld [vmem:[#allocation4 + $0x8] sm:$0xff]
    %v2619 = vld [vmem:[#allocation4 + $0x10] sm:$0xff]
    %v2620 = vld [vmem:[#allocation4 + $0x18] sm:$0xff]
    %v2621 = vld [vmem:[#allocation4 + $0x20] sm:$0xff]
    %v2622 = vld [vmem:[#allocation4 + $0x28] sm:$0xff]
    %v2623 = vld [vmem:[#allocation4 + $0x30] sm:$0xff]
    %v2624 = vld [vmem:[#allocation4 + $0x38] sm:$0xff]
    %v2625 = vld [vmem:[#allocation4 + $0x40] sm:$0xff]
    %v2626 = vld [vmem:[#allocation4 + $0x48] sm:$0xff]
    %v2627 = vld [vmem:[#allocation4 + $0x50] sm:$0xff]
    %v2628 = vld [vmem:[#allocation4 + $0x58] sm:$0xff]
    %v2629 = vld [vmem:[#allocation4 + $0x60] sm:$0xff]
    %v2630 = vld [vmem:[#allocation4 + $0x68] sm:$0xff]
    %v2631 = vld [vmem:[#allocation4 + $0x70] sm:$0xff]
    %v2632 = vld [vmem:[#allocation4 + $0x78] sm:$0xff]
    %v2633 = vld [vmem:[#allocation4 + $0x80] sm:$0xff]
    %v2634 = vld [vmem:[#allocation4 + $0x88] sm:$0xff]
    %v2635 = vld [vmem:[#allocation4 + $0x90] sm:$0xff]
    %v2636 = vld [vmem:[#allocation4 + $0x98] sm:$0xff]
    %v2637 = vld [vmem:[#allocation4 + $0xa0] sm:$0xff]
    %v2638 = vld [vmem:[#allocation4 + $0xa8] sm:$0xff]
    %v2639 = vld [vmem:[#allocation4 + $0xb0] sm:$0xff]
    %v2640 = vld [vmem:[#allocation4 + $0xb8] sm:$0xff]
    %v2641 = vld [vmem:[#allocation4 + $0xc0] sm:$0xff]
    %v2642 = vld [vmem:[#allocation4 + $0xc8] sm:$0xff]
    %v2643 = vld [vmem:[#allocation4 + $0xd0] sm:$0xff]
    %v2644 = vld [vmem:[#allocation4 + $0xd8] sm:$0xff]
    %v2645 = vld [vmem:[#allocation4 + $0xe0] sm:$0xff]
    %v2646 = vld [vmem:[#allocation4 + $0xe8] sm:$0xff]
    %v2647 = vld [vmem:[#allocation4 + $0xf0] sm:$0xff]
    %v2648 = vld [vmem:[#allocation4 + $0xf8] sm:$0xff]
    %v2649 = vld [vmem:[#allocation4 + $0x100] sm:$0xff]
    %v2650 = vld [vmem:[#allocation4 + $0x108] sm:$0xff]
    %v2651 = vld [vmem:[#allocation4 + $0x110] sm:$0xff]
    %v2652 = vld [vmem:[#allocation4 + $0x118] sm:$0xff]
    %v2653 = vld [vmem:[#allocation4 + $0x120] sm:$0xff]
    %v2654 = vld [vmem:[#allocation4 + $0x128] sm:$0xff]
    %v2655 = vld [vmem:[#allocation4 + $0x130] sm:$0xff]
    %v2656 = vld [vmem:[#allocation4 + $0x138] sm:$0xff]
    %v2657 = vld [vmem:[#allocation4 + $0x140] sm:$0xff]
    %v2658 = vld [vmem:[#allocation4 + $0x148] sm:$0xff]
    %v2659 = vld [vmem:[#allocation4 + $0x150] sm:$0xff]
    %v2660 = vld [vmem:[#allocation4 + $0x158] sm:$0xff]
    %v2661 = vld [vmem:[#allocation4 + $0x160] sm:$0xff]
    %v2662 = vld [vmem:[#allocation4 + $0x168] sm:$0xff]
    %v2663 = vld [vmem:[#allocation4 + $0x170] sm:$0xff]
    %v2664 = vld [vmem:[#allocation4 + $0x178] sm:$0xff]
    %v2665 = vld [vmem:[#allocation4 + $0x180] sm:$0xff]
    %v2666 = vld [vmem:[#allocation4 + $0x188] sm:$0xff]
    %v2667 = vld [vmem:[#allocation4 + $0x190] sm:$0xff]
    %v2668 = vld [vmem:[#allocation4 + $0x198] sm:$0xff]
    %v2669 = vld [vmem:[#allocation4 + $0x1a0] sm:$0xff]
    %v2670 = vld [vmem:[#allocation4 + $0x1a8] sm:$0xff]
    %v2671 = vld [vmem:[#allocation4 + $0x1b0] sm:$0xff]
    %v2672 = vld [vmem:[#allocation4 + $0x1b8] sm:$0xff]
    %v2673 = vld [vmem:[#allocation4 + $0x1c0] sm:$0xff]
    %v2674 = vld [vmem:[#allocation4 + $0x1c8] sm:$0xff]
    %v2675 = vld [vmem:[#allocation4 + $0x1d0] sm:$0xff]
    %v2676 = vld [vmem:[#allocation4 + $0x1d8] sm:$0xff]
    %v2677 = vld [vmem:[#allocation4 + $0x1e0] sm:$0xff]
    %v2678 = vld [vmem:[#allocation4 + $0x1e8] sm:$0xff]
    %v2679 = vld [vmem:[#allocation4 + $0x1f0] sm:$0xff]
    %v2680 = vld [vmem:[#allocation4 + $0x1f8] sm:$0xff]
    %v2681 = vld [vmem:[#allocation4 + $0x200] sm:$0xff]
    %v2682 = vld [vmem:[#allocation4 + $0x208] sm:$0xff]
    %v2683 = vld [vmem:[#allocation4 + $0x210] sm:$0xff]
    %v2684 = vld [vmem:[#allocation4 + $0x218] sm:$0xff]
    %v2685 = vld [vmem:[#allocation4 + $0x220] sm:$0xff]
    %v2686 = vld [vmem:[#allocation4 + $0x228] sm:$0xff]
    %v2687 = vld [vmem:[#allocation4 + $0x230] sm:$0xff]
    %v2688 = vld [vmem:[#allocation4 + $0x238] sm:$0xff]
    %v2689 = vld [vmem:[#allocation4 + $0x240] sm:$0xff]
    %v2690 = vld [vmem:[#allocation4 + $0x248] sm:$0xff]
    %v2691 = vld [vmem:[#allocation4 + $0x250] sm:$0xff]
    %v2692 = vld [vmem:[#allocation4 + $0x258] sm:$0xff]
    %v2693 = vld [vmem:[#allocation4 + $0x260] sm:$0xff]
    %v2694 = vld [vmem:[#allocation4 + $0x268] sm:$0xff]
    %v2695 = vld [vmem:[#allocation4 + $0x270] sm:$0xff]
    %v2696 = vld [vmem:[#allocation4 + $0x278] sm:$0xff]
    %v2697 = vld [vmem:[#allocation4 + $0x280] sm:$0xff]
    %v2698 = vld [vmem:[#allocation4 + $0x288] sm:$0xff]
    %v2699 = vld [vmem:[#allocation4 + $0x290] sm:$0xff]
    %v2700 = vld [vmem:[#allocation4 + $0x298] sm:$0xff]
    %v2701 = vld [vmem:[#allocation4 + $0x2a0] sm:$0xff]
    %v2702 = vld [vmem:[#allocation4 + $0x2a8] sm:$0xff]
    %v2703 = vld [vmem:[#allocation4 + $0x2b0] sm:$0xff]
    %v2704 = vld [vmem:[#allocation4 + $0x2b8] sm:$0xff]
    %v2705 = vld [vmem:[#allocation4 + $0x2c0] sm:$0xff]
    %v2706 = vld [vmem:[#allocation4 + $0x2c8] sm:$0xff]
    %v2707 = vld [vmem:[#allocation4 + $0x2d0] sm:$0xff]
    %v2708 = vld [vmem:[#allocation4 + $0x2d8] sm:$0xff]
    %v2709 = vld [vmem:[#allocation4 + $0x2e0] sm:$0xff]
    %v2710 = vld [vmem:[#allocation4 + $0x2e8] sm:$0xff]
    %v2711 = vld [vmem:[#allocation4 + $0x2f0] sm:$0xff]
    %v2712 = vld [vmem:[#allocation4 + $0x2f8] sm:$0xff]
    %v2713 = vld [vmem:[#allocation4 + $0x300] sm:$0xff]
    %v2714 = vld [vmem:[#allocation4 + $0x308] sm:$0xff]
    %v2715 = vld [vmem:[#allocation4 + $0x310] sm:$0xff]
    %v2716 = vld [vmem:[#allocation4 + $0x318] sm:$0xff]
    %v2717 = vld [vmem:[#allocation4 + $0x320] sm:$0xff]
    %v2718 = vld [vmem:[#allocation4 + $0x328] sm:$0xff]
    %v2719 = vld [vmem:[#allocation4 + $0x330] sm:$0xff]
    %v2720 = vld [vmem:[#allocation4 + $0x338] sm:$0xff]
    %v2721 = vld [vmem:[#allocation4 + $0x340] sm:$0xff]
    %v2722 = vld [vmem:[#allocation4 + $0x348] sm:$0xff]
    %v2723 = vld [vmem:[#allocation4 + $0x350] sm:$0xff]
    %v2724 = vld [vmem:[#allocation4 + $0x358] sm:$0xff]
    %v2725 = vld [vmem:[#allocation4 + $0x360] sm:$0xff]
    %v2726 = vld [vmem:[#allocation4 + $0x368] sm:$0xff]
    %v2727 = vld [vmem:[#allocation4 + $0x370] sm:$0xff]
    %v2728 = vld [vmem:[#allocation4 + $0x378] sm:$0xff]
    %v2729 = vld [vmem:[#allocation4 + $0x380] sm:$0xff]
    %v2730 = vld [vmem:[#allocation4 + $0x388] sm:$0xff]
    %v2731 = vld [vmem:[#allocation4 + $0x390] sm:$0xff]
    %v2732 = vld [vmem:[#allocation4 + $0x398] sm:$0xff]
    %v2733 = vld [vmem:[#allocation4 + $0x3a0] sm:$0xff]
    %v2734 = vld [vmem:[#allocation4 + $0x3a8] sm:$0xff]
    %v2735 = vld [vmem:[#allocation4 + $0x3b0] sm:$0xff]
    %v2736 = vld [vmem:[#allocation4 + $0x3b8] sm:$0xff]
    %v2737 = vld [vmem:[#allocation4 + $0x3c0] sm:$0xff]
    %v2738 = vld [vmem:[#allocation4 + $0x3c8] sm:$0xff]
    %v2739 = vld [vmem:[#allocation4 + $0x3d0] sm:$0xff]
    %v2740 = vld [vmem:[#allocation4 + $0x3d8] sm:$0xff]
    %v2741 = vld [vmem:[#allocation4 + $0x3e0] sm:$0xff]
    %v2742 = vld [vmem:[#allocation4 + $0x3e8] sm:$0xff]
    %v2743 = vld [vmem:[#allocation4 + $0x3f0] sm:$0xff]
    %v2744 = vld [vmem:[#allocation4 + $0x3f8] sm:$0xff]
    %v2745 = vld [vmem:[#allocation4 + $0x400] sm:$0xff]
    %v2746 = vld [vmem:[#allocation4 + $0x408] sm:$0xff]
    %v2747 = vld [vmem:[#allocation4 + $0x410] sm:$0xff]
    %v2748 = vld [vmem:[#allocation4 + $0x418] sm:$0xff]
    %v2749 = vld [vmem:[#allocation4 + $0x420] sm:$0xff]
    %v2750 = vld [vmem:[#allocation4 + $0x428] sm:$0xff]
    %v2751 = vld [vmem:[#allocation4 + $0x430] sm:$0xff]
    %v2752 = vld [vmem:[#allocation4 + $0x438] sm:$0xff]
    %v2753 = vld [vmem:[#allocation4 + $0x440] sm:$0xff]
    %v2754 = vld [vmem:[#allocation4 + $0x448] sm:$0xff]
    %v2755 = vld [vmem:[#allocation4 + $0x450] sm:$0xff]
    %v2756 = vld [vmem:[#allocation4 + $0x458] sm:$0xff]
    %v2757 = vld [vmem:[#allocation4 + $0x460] sm:$0xff]
    %v2758 = vld [vmem:[#allocation4 + $0x468] sm:$0xff]
    %v2759 = vld [vmem:[#allocation4 + $0x470] sm:$0xff]
    %v2760 = vld [vmem:[#allocation4 + $0x478] sm:$0xff]
    %v2761 = vld [vmem:[#allocation4 + $0x480] sm:$0xff]
    %v2762 = vld [vmem:[#allocation4 + $0x488] sm:$0xff]
    %v2763 = vld [vmem:[#allocation4 + $0x490] sm:$0xff]
    %v2764 = vld [vmem:[#allocation4 + $0x498] sm:$0xff]
    %v2765 = vld [vmem:[#allocation4 + $0x4a0] sm:$0xff]
    %v2766 = vld [vmem:[#allocation4 + $0x4a8] sm:$0xff]
    %v2767 = vld [vmem:[#allocation4 + $0x4b0] sm:$0xff]
    %v2768 = vld [vmem:[#allocation4 + $0x4b8] sm:$0xff]
    %v2769 = vld [vmem:[#allocation4 + $0x4c0] sm:$0xff]
    %v2770 = vld [vmem:[#allocation4 + $0x4c8] sm:$0xff]
    %v2771 = vld [vmem:[#allocation4 + $0x4d0] sm:$0xff]
    %v2772 = vld [vmem:[#allocation4 + $0x4d8] sm:$0xff]
    %v2773 = vld [vmem:[#allocation4 + $0x4e0] sm:$0xff]
    %v2774 = vld [vmem:[#allocation4 + $0x4e8] sm:$0xff]
    %v2775 = vld [vmem:[#allocation4 + $0x4f0] sm:$0xff]
    %v2776 = vld [vmem:[#allocation4 + $0x4f8] sm:$0xff]
    %v2777 = vld [vmem:[#allocation4 + $0x500] sm:$0xff]
    %v2778 = vld [vmem:[#allocation4 + $0x508] sm:$0xff]
    %v2779 = vld [vmem:[#allocation4 + $0x510] sm:$0xff]
    %v2780 = vld [vmem:[#allocation4 + $0x518] sm:$0xff]
    %v2781 = vld [vmem:[#allocation4 + $0x520] sm:$0xff]
    %v2782 = vld [vmem:[#allocation4 + $0x528] sm:$0xff]
    %v2783 = vld [vmem:[#allocation4 + $0x530] sm:$0xff]
    %v2784 = vld [vmem:[#allocation4 + $0x538] sm:$0xff]
    %v2785 = vld [vmem:[#allocation4 + $0x540] sm:$0xff]
    %v2786 = vld [vmem:[#allocation4 + $0x548] sm:$0xff]
    %v2787 = vld [vmem:[#allocation4 + $0x550] sm:$0xff]
    %v2788 = vld [vmem:[#allocation4 + $0x558] sm:$0xff]
    %v2789 = vld [vmem:[#allocation4 + $0x560] sm:$0xff]
    %v2790 = vld [vmem:[#allocation4 + $0x568] sm:$0xff]
    %v2791 = vld [vmem:[#allocation4 + $0x570] sm:$0xff]
    %v2792 = vld [vmem:[#allocation4 + $0x578] sm:$0xff]
    %v2793 = vld [vmem:[#allocation4 + $0x580] sm:$0xff]
    %v2794 = vld [vmem:[#allocation4 + $0x588] sm:$0xff]
    %v2795 = vld [vmem:[#allocation4 + $0x590] sm:$0xff]
    %v2796 = vld [vmem:[#allocation4 + $0x598] sm:$0xff]
    %v2797 = vld [vmem:[#allocation4 + $0x5a0] sm:$0xff]
    %v2798 = vld [vmem:[#allocation4 + $0x5a8] sm:$0xff]
    %v2799 = vld [vmem:[#allocation4 + $0x5b0] sm:$0xff]
    %v2800 = vld [vmem:[#allocation4 + $0x5b8] sm:$0xff]
    %v2801 = vld [vmem:[#allocation4 + $0x5c0] sm:$0xff]
    %v2802 = vld [vmem:[#allocation4 + $0x5c8] sm:$0xff]
    %v2803 = vld [vmem:[#allocation4 + $0x5d0] sm:$0xff]
    %v2804 = vld [vmem:[#allocation4 + $0x5d8] sm:$0xff]
    %v2805 = vld [vmem:[#allocation4 + $0x5e0] sm:$0xff]
    %v2806 = vld [vmem:[#allocation4 + $0x5e8] sm:$0xff]
    %v2807 = vld [vmem:[#allocation4 + $0x5f0] sm:$0xff]
    %v2808 = vld [vmem:[#allocation4 + $0x5f8] sm:$0xff]
    %v2809 = vld [vmem:[#allocation4 + $0x600] sm:$0xff]
    %v2810 = vld [vmem:[#allocation4 + $0x608] sm:$0xff]
    %v2811 = vld [vmem:[#allocation4 + $0x610] sm:$0xff]
    %v2812 = vld [vmem:[#allocation4 + $0x618] sm:$0xff]
    %v2813 = vld [vmem:[#allocation4 + $0x620] sm:$0xff]
    %v2814 = vld [vmem:[#allocation4 + $0x628] sm:$0xff]
    %v2815 = vld [vmem:[#allocation4 + $0x630] sm:$0xff]
    %v2816 = vld [vmem:[#allocation4 + $0x638] sm:$0xff]
    %v2817 = vld [vmem:[#allocation4 + $0x640] sm:$0xff]
    %v2818 = vld [vmem:[#allocation4 + $0x648] sm:$0xff]
    %v2819 = vld [vmem:[#allocation4 + $0x650] sm:$0xff]
    %v2820 = vld [vmem:[#allocation4 + $0x658] sm:$0xff]
    %v2821 = vld [vmem:[#allocation4 + $0x660] sm:$0xff]
    %v2822 = vld [vmem:[#allocation4 + $0x668] sm:$0xff]
    %v2823 = vld [vmem:[#allocation4 + $0x670] sm:$0xff]
    %v2824 = vld [vmem:[#allocation4 + $0x678] sm:$0xff]
    %v2825 = vld [vmem:[#allocation4 + $0x680] sm:$0xff]
    %v2826 = vld [vmem:[#allocation4 + $0x688] sm:$0xff]
    %v2827 = vld [vmem:[#allocation4 + $0x690] sm:$0xff]
    %v2828 = vld [vmem:[#allocation4 + $0x698] sm:$0xff]
    %v2829 = vld [vmem:[#allocation4 + $0x6a0] sm:$0xff]
    %v2830 = vld [vmem:[#allocation4 + $0x6a8] sm:$0xff]
    %v2831 = vld [vmem:[#allocation4 + $0x6b0] sm:$0xff]
    %v2832 = vld [vmem:[#allocation4 + $0x6b8] sm:$0xff]
    %v2833 = vld [vmem:[#allocation4 + $0x6c0] sm:$0xff]
    %v2834 = vld [vmem:[#allocation4 + $0x6c8] sm:$0xff]
    %v2835 = vld [vmem:[#allocation4 + $0x6d0] sm:$0xff]
    %v2836 = vld [vmem:[#allocation4 + $0x6d8] sm:$0xff]
    %v2837 = vld [vmem:[#allocation4 + $0x6e0] sm:$0xff]
    %v2838 = vld [vmem:[#allocation4 + $0x6e8] sm:$0xff]
    %v2839 = vld [vmem:[#allocation4 + $0x6f0] sm:$0xff]
    %v2840 = vld [vmem:[#allocation4 + $0x6f8] sm:$0xff]
    %v2841 = vld [vmem:[#allocation4 + $0x700] sm:$0xff]
    %v2842 = vld [vmem:[#allocation4 + $0x708] sm:$0xff]
    %v2843 = vld [vmem:[#allocation4 + $0x710] sm:$0xff]
    %v2844 = vld [vmem:[#allocation4 + $0x718] sm:$0xff]
    %v2845 = vld [vmem:[#allocation4 + $0x720] sm:$0xff]
    %v2846 = vld [vmem:[#allocation4 + $0x728] sm:$0xff]
    %v2847 = vld [vmem:[#allocation4 + $0x730] sm:$0xff]
    %v2848 = vld [vmem:[#allocation4 + $0x738] sm:$0xff]
    %v2849 = vld [vmem:[#allocation4 + $0x740] sm:$0xff]
    %v2850 = vld [vmem:[#allocation4 + $0x748] sm:$0xff]
    %v2851 = vld [vmem:[#allocation4 + $0x750] sm:$0xff]
    %v2852 = vld [vmem:[#allocation4 + $0x758] sm:$0xff]
    %v2853 = vld [vmem:[#allocation4 + $0x760] sm:$0xff]
    %v2854 = vld [vmem:[#allocation4 + $0x768] sm:$0xff]
    %v2855 = vld [vmem:[#allocation4 + $0x770] sm:$0xff]
    %v2856 = vld [vmem:[#allocation4 + $0x778] sm:$0xff]
    %v2857 = vld [vmem:[#allocation4 + $0x780] sm:$0xff]
    %v2858 = vld [vmem:[#allocation4 + $0x788] sm:$0xff]
    %v2859 = vld [vmem:[#allocation4 + $0x790] sm:$0xff]
    %v2860 = vld [vmem:[#allocation4 + $0x798] sm:$0xff]
    %v2861 = vld [vmem:[#allocation4 + $0x7a0] sm:$0xff]
    %v2862 = vld [vmem:[#allocation4 + $0x7a8] sm:$0xff]
    %v2863 = vld [vmem:[#allocation4 + $0x7b0] sm:$0xff]
    %v2864 = vld [vmem:[#allocation4 + $0x7b8] sm:$0xff]
    %v2865 = vld [vmem:[#allocation4 + $0x7c0] sm:$0xff]
    %v2866 = vld [vmem:[#allocation4 + $0x7c8] sm:$0xff]
    %v2867 = vld [vmem:[#allocation4 + $0x7d0] sm:$0xff]
    %v2868 = vld [vmem:[#allocation4 + $0x7d8] sm:$0xff]
    %v2869 = vld [vmem:[#allocation4 + $0x7e0] sm:$0xff]
    %v2870 = vld [vmem:[#allocation4 + $0x7e8] sm:$0xff]
    %v2871 = vld [vmem:[#allocation4 + $0x7f0] sm:$0xff]
    %v2872 = vld [vmem:[#allocation4 + $0x7f8] sm:$0xff]
    %v2873 = vld [vmem:[#allocation30] sm:$0x3]
    %v2875 = vperm.slane %v2873, 0
    %v2876 = vperm.slane %v2873, 1
    %2879 = vmatpush.msra.mxu0 %v2647
    %2880 = vmatpush.msra.mxu0 %v2645
    %2881 = vmatpush.msra.mxu0 %v2643
    %2882 = vmatpush.msra.mxu0 %v2641
    %2883 = vmatpush.msra.mxu0 %v2639
    %2884 = vmatpush.msra.mxu0 %v2637
    %2885 = vmatpush.msra.mxu0 %v2635
    %2886 = vmatpush.msra.mxu0 %v2633
    %2887 = vmatpush.msra.mxu0 %v2631
    %2888 = vmatpush.msra.mxu0 %v2629
    %2889 = vmatpush.msra.mxu0 %v2627
    %2890 = vmatpush.msra.mxu0 %v2625
    %2891 = vmatpush.msra.mxu0 %v2623
    %2892 = vmatpush.msra.mxu0 %v2621
    %2893 = vmatpush.msra.mxu0 %v2619
    %2894 = vmatpush.msra.mxu0 %v2617
    %2895 = vmatmul.f32.gmra.mxu0 %v2605
    %v2896 = vpop.f32.mrf.mxu0
    %v2897 = vadd.f32 %v2875, %v2896
    %2898 = vdwg.mxu0
    %2899 = vmatpush.msra.mxu0 %v2679
    %2900 = vmatpush.msra.mxu0 %v2677
    %2901 = vmatpush.msra.mxu0 %v2675
    %2902 = vmatpush.msra.mxu0 %v2673
    %2903 = vmatpush.msra.mxu0 %v2671
    %2904 = vmatpush.msra.mxu0 %v2669
    %2905 = vmatpush.msra.mxu0 %v2667
    %2906 = vmatpush.msra.mxu0 %v2665
    %2907 = vmatpush.msra.mxu0 %v2663
    %2908 = vmatpush.msra.mxu0 %v2661
    %2909 = vmatpush.msra.mxu0 %v2659
    %2910 = vmatpush.msra.mxu0 %v2657
    %2911 = vmatpush.msra.mxu0 %v2655
    %2912 = vmatpush.msra.mxu0 %v2653
    %2913 = vmatpush.msra.mxu0 %v2651
    %2914 = vmatpush.msra.mxu0 %v2649
    %2915 = vmatmul.f32.gmra.mxu0 %v2606
    %v2916 = vpop.f32.mrf.mxu0
    %v2917 = vadd.f32 %v2897, %v2916
    %2918 = vdwg.mxu0
    %2919 = vmatpush.msra.mxu0 %v2711
    %2920 = vmatpush.msra.mxu0 %v2709
    %2921 = vmatpush.msra.mxu0 %v2707
    %2922 = vmatpush.msra.mxu0 %v2705
    %2923 = vmatpush.msra.mxu0 %v2703
    %2924 = vmatpush.msra.mxu0 %v2701
    %2925 = vmatpush.msra.mxu0 %v2699
    %2926 = vmatpush.msra.mxu0 %v2697
    %2927 = vmatpush.msra.mxu0 %v2695
    %2928 = vmatpush.msra.mxu0 %v2693
    %2929 = vmatpush.msra.mxu0 %v2691
    %2930 = vmatpush.msra.mxu0 %v2689
    %2931 = vmatpush.msra.mxu0 %v2687
    %2932 = vmatpush.msra.mxu0 %v2685
    %2933 = vmatpush.msra.mxu0 %v2683
    %2934 = vmatpush.msra.mxu0 %v2681
    %2935 = vmatmul.f32.gmra.mxu0 %v2607
    %v2936 = vpop.f32.mrf.mxu0
    %v2937 = vadd.f32 %v2917, %v2936
    %2938 = vdwg.mxu0
    %2939 = vmatpush.msra.mxu0 %v2743
    %2940 = vmatpush.msra.mxu0 %v2741
    %2941 = vmatpush.msra.mxu0 %v2739
    %2942 = vmatpush.msra.mxu0 %v2737
    %2943 = vmatpush.msra.mxu0 %v2735
    %2944 = vmatpush.msra.mxu0 %v2733
    %2945 = vmatpush.msra.mxu0 %v2731
    %2946 = vmatpush.msra.mxu0 %v2729
    %2947 = vmatpush.msra.mxu0 %v2727
    %2948 = vmatpush.msra.mxu0 %v2725
    %2949 = vmatpush.msra.mxu0 %v2723
    %2950 = vmatpush.msra.mxu0 %v2721
    %2951 = vmatpush.msra.mxu0 %v2719
    %2952 = vmatpush.msra.mxu0 %v2717
    %2953 = vmatpush.msra.mxu0 %v2715
    %2954 = vmatpush.msra.mxu0 %v2713
    %2955 = vmatmul.f32.gmra.mxu0 %v2608
    %v2956 = vpop.f32.mrf.mxu0
    %v2957 = vadd.f32 %v2937, %v2956
    %2958 = vdwg.mxu0
    %2959 = vmatpush.msra.mxu0 %v2775
    %2960 = vmatpush.msra.mxu0 %v2773
    %2961 = vmatpush.msra.mxu0 %v2771
    %2962 = vmatpush.msra.mxu0 %v2769
    %2963 = vmatpush.msra.mxu0 %v2767
    %2964 = vmatpush.msra.mxu0 %v2765
    %2965 = vmatpush.msra.mxu0 %v2763
    %2966 = vmatpush.msra.mxu0 %v2761
    %2967 = vmatpush.msra.mxu0 %v2759
    %2968 = vmatpush.msra.mxu0 %v2757
    %2969 = vmatpush.msra.mxu0 %v2755
    %2970 = vmatpush.msra.mxu0 %v2753
    %2971 = vmatpush.msra.mxu0 %v2751
    %2972 = vmatpush.msra.mxu0 %v2749
    %2973 = vmatpush.msra.mxu0 %v2747
    %2974 = vmatpush.msra.mxu0 %v2745
    %2975 = vmatmul.f32.gmra.mxu0 %v2609
    %v2976 = vpop.f32.mrf.mxu0
    %v2977 = vadd.f32 %v2957, %v2976
    %2978 = vdwg.mxu0
    %2979 = vmatpush.msra.mxu0 %v2807
    %2980 = vmatpush.msra.mxu0 %v2805
    %2981 = vmatpush.msra.mxu0 %v2803
    %2982 = vmatpush.msra.mxu0 %v2801
    %2983 = vmatpush.msra.mxu0 %v2799
    %2984 = vmatpush.msra.mxu0 %v2797
    %2985 = vmatpush.msra.mxu0 %v2795
    %2986 = vmatpush.msra.mxu0 %v2793
    %2987 = vmatpush.msra.mxu0 %v2791
    %2988 = vmatpush.msra.mxu0 %v2789
    %2989 = vmatpush.msra.mxu0 %v2787
    %2990 = vmatpush.msra.mxu0 %v2785
    %2991 = vmatpush.msra.mxu0 %v2783
    %2992 = vmatpush.msra.mxu0 %v2781
    %2993 = vmatpush.msra.mxu0 %v2779
    %2994 = vmatpush.msra.mxu0 %v2777
    %2995 = vmatmul.f32.gmra.mxu0 %v2610
    %v2996 = vpop.f32.mrf.mxu0
    %v2997 = vadd.f32 %v2977, %v2996
    %2998 = vdwg.mxu0
    %2999 = vmatpush.msra.mxu0 %v2839
    %3000 = vmatpush.msra.mxu0 %v2837
    %3001 = vmatpush.msra.mxu0 %v2835
    %3002 = vmatpush.msra.mxu0 %v2833
    %3003 = vmatpush.msra.mxu0 %v2831
    %3004 = vmatpush.msra.mxu0 %v2829
    %3005 = vmatpush.msra.mxu0 %v2827
    %3006 = vmatpush.msra.mxu0 %v2825
    %3007 = vmatpush.msra.mxu0 %v2823
    %3008 = vmatpush.msra.mxu0 %v2821
    %3009 = vmatpush.msra.mxu0 %v2819
    %3010 = vmatpush.msra.mxu0 %v2817
    %3011 = vmatpush.msra.mxu0 %v2815
    %3012 = vmatpush.msra.mxu0 %v2813
    %3013 = vmatpush.msra.mxu0 %v2811
    %3014 = vmatpush.msra.mxu0 %v2809
    %3015 = vmatmul.f32.gmra.mxu0 %v2611
    %v3016 = vpop.f32.mrf.mxu0
    %v3017 = vadd.f32 %v2997, %v3016
    %3018 = vdwg.mxu0
    %3019 = vmatpush.msra.mxu0 %v2871
    %3020 = vmatpush.msra.mxu0 %v2869
    %3021 = vmatpush.msra.mxu0 %v2867
    %3022 = vmatpush.msra.mxu0 %v2865
    %3023 = vmatpush.msra.mxu0 %v2863
    %3024 = vmatpush.msra.mxu0 %v2861
    %3025 = vmatpush.msra.mxu0 %v2859
    %3026 = vmatpush.msra.mxu0 %v2857
    %3027 = vmatpush.msra.mxu0 %v2855
    %3028 = vmatpush.msra.mxu0 %v2853
    %3029 = vmatpush.msra.mxu0 %v2851
    %3030 = vmatpush.msra.mxu0 %v2849
    %3031 = vmatpush.msra.mxu0 %v2847
    %3032 = vmatpush.msra.mxu0 %v2845
    %3033 = vmatpush.msra.mxu0 %v2843
    %3034 = vmatpush.msra.mxu0 %v2841
    %3035 = vmatmul.f32.gmra.mxu0 %v2612
    %v3036 = vpop.f32.mrf.mxu0
    %v3037 = vadd.f32 %v3017, %v3036
    %3038 = vdwg.mxu0
    %3039 = vmatpush.msra.mxu0 %v2648
    %3040 = vmatpush.msra.mxu0 %v2646
    %3041 = vmatpush.msra.mxu0 %v2644
    %3042 = vmatpush.msra.mxu0 %v2642
    %3043 = vmatpush.msra.mxu0 %v2640
    %3044 = vmatpush.msra.mxu0 %v2638
    %3045 = vmatpush.msra.mxu0 %v2636
    %3046 = vmatpush.msra.mxu0 %v2634
    %3047 = vmatpush.msra.mxu0 %v2632
    %3048 = vmatpush.msra.mxu0 %v2630
    %3049 = vmatpush.msra.mxu0 %v2628
    %3050 = vmatpush.msra.mxu0 %v2626
    %3051 = vmatpush.msra.mxu0 %v2624
    %3052 = vmatpush.msra.mxu0 %v2622
    %3053 = vmatpush.msra.mxu0 %v2620
    %3054 = vmatpush.msra.mxu0 %v2618
    %3055 = vmatmul.f32.gmra.mxu0 %v2605
    %v3056 = vpop.f32.mrf.mxu0
    %v3057 = vadd.f32 %v2876, %v3056
    %3058 = vdwg.mxu0
    %3059 = vmatpush.msra.mxu0 %v2680
    %3060 = vmatpush.msra.mxu0 %v2678
    %3061 = vmatpush.msra.mxu0 %v2676
    %3062 = vmatpush.msra.mxu0 %v2674
    %3063 = vmatpush.msra.mxu0 %v2672
    %3064 = vmatpush.msra.mxu0 %v2670
    %3065 = vmatpush.msra.mxu0 %v2668
    %3066 = vmatpush.msra.mxu0 %v2666
    %3067 = vmatpush.msra.mxu0 %v2664
    %3068 = vmatpush.msra.mxu0 %v2662
    %3069 = vmatpush.msra.mxu0 %v2660
    %3070 = vmatpush.msra.mxu0 %v2658
    %3071 = vmatpush.msra.mxu0 %v2656
    %3072 = vmatpush.msra.mxu0 %v2654
    %3073 = vmatpush.msra.mxu0 %v2652
    %3074 = vmatpush.msra.mxu0 %v2650
    %3075 = vmatmul.f32.gmra.mxu0 %v2606
    %v3076 = vpop.f32.mrf.mxu0
    %v3077 = vadd.f32 %v3057, %v3076
    %3078 = vdwg.mxu0
    %3079 = vmatpush.msra.mxu0 %v2712
    %3080 = vmatpush.msra.mxu0 %v2710
    %3081 = vmatpush.msra.mxu0 %v2708
    %3082 = vmatpush.msra.mxu0 %v2706
    %3083 = vmatpush.msra.mxu0 %v2704
    %3084 = vmatpush.msra.mxu0 %v2702
    %3085 = vmatpush.msra.mxu0 %v2700
    %3086 = vmatpush.msra.mxu0 %v2698
    %3087 = vmatpush.msra.mxu0 %v2696
    %3088 = vmatpush.msra.mxu0 %v2694
    %3089 = vmatpush.msra.mxu0 %v2692
    %3090 = vmatpush.msra.mxu0 %v2690
    %3091 = vmatpush.msra.mxu0 %v2688
    %3092 = vmatpush.msra.mxu0 %v2686
    %3093 = vmatpush.msra.mxu0 %v2684
    %3094 = vmatpush.msra.mxu0 %v2682
    %3095 = vmatmul.f32.gmra.mxu0 %v2607
    %v3096 = vpop.f32.mrf.mxu0
    %v3097 = vadd.f32 %v3077, %v3096
    %3098 = vdwg.mxu0
    %3099 = vmatpush.msra.mxu0 %v2744
    %3100 = vmatpush.msra.mxu0 %v2742
    %3101 = vmatpush.msra.mxu0 %v2740
    %3102 = vmatpush.msra.mxu0 %v2738
    %3103 = vmatpush.msra.mxu0 %v2736
    %3104 = vmatpush.msra.mxu0 %v2734
    %3105 = vmatpush.msra.mxu0 %v2732
    %3106 = vmatpush.msra.mxu0 %v2730
    %3107 = vmatpush.msra.mxu0 %v2728
    %3108 = vmatpush.msra.mxu0 %v2726
    %3109 = vmatpush.msra.mxu0 %v2724
    %3110 = vmatpush.msra.mxu0 %v2722
    %3111 = vmatpush.msra.mxu0 %v2720
    %3112 = vmatpush.msra.mxu0 %v2718
    %3113 = vmatpush.msra.mxu0 %v2716
    %3114 = vmatpush.msra.mxu0 %v2714
    %3115 = vmatmul.f32.gmra.mxu0 %v2608
    %v3116 = vpop.f32.mrf.mxu0
    %v3117 = vadd.f32 %v3097, %v3116
    %3118 = vdwg.mxu0
    %3119 = vmatpush.msra.mxu0 %v2776
    %3120 = vmatpush.msra.mxu0 %v2774
    %3121 = vmatpush.msra.mxu0 %v2772
    %3122 = vmatpush.msra.mxu0 %v2770
    %3123 = vmatpush.msra.mxu0 %v2768
    %3124 = vmatpush.msra.mxu0 %v2766
    %3125 = vmatpush.msra.mxu0 %v2764
    %3126 = vmatpush.msra.mxu0 %v2762
    %3127 = vmatpush.msra.mxu0 %v2760
    %3128 = vmatpush.msra.mxu0 %v2758
    %3129 = vmatpush.msra.mxu0 %v2756
    %3130 = vmatpush.msra.mxu0 %v2754
    %3131 = vmatpush.msra.mxu0 %v2752
    %3132 = vmatpush.msra.mxu0 %v2750
    %3133 = vmatpush.msra.mxu0 %v2748
    %3134 = vmatpush.msra.mxu0 %v2746
    %3135 = vmatmul.f32.gmra.mxu0 %v2609
    %v3136 = vpop.f32.mrf.mxu0
    %v3137 = vadd.f32 %v3117, %v3136
    %3138 = vdwg.mxu0
    %3139 = vmatpush.msra.mxu0 %v2808
    %3140 = vmatpush.msra.mxu0 %v2806
    %3141 = vmatpush.msra.mxu0 %v2804
    %3142 = vmatpush.msra.mxu0 %v2802
    %3143 = vmatpush.msra.mxu0 %v2800
    %3144 = vmatpush.msra.mxu0 %v2798
    %3145 = vmatpush.msra.mxu0 %v2796
    %3146 = vmatpush.msra.mxu0 %v2794
    %3147 = vmatpush.msra.mxu0 %v2792
    %3148 = vmatpush.msra.mxu0 %v2790
    %3149 = vmatpush.msra.mxu0 %v2788
    %3150 = vmatpush.msra.mxu0 %v2786
    %3151 = vmatpush.msra.mxu0 %v2784
    %3152 = vmatpush.msra.mxu0 %v2782
    %3153 = vmatpush.msra.mxu0 %v2780
    %3154 = vmatpush.msra.mxu0 %v2778
    %3155 = vmatmul.f32.gmra.mxu0 %v2610
    %v3156 = vpop.f32.mrf.mxu0
    %v3157 = vadd.f32 %v3137, %v3156
    %3158 = vdwg.mxu0
    %3159 = vmatpush.msra.mxu0 %v2840
    %3160 = vmatpush.msra.mxu0 %v2838
    %3161 = vmatpush.msra.mxu0 %v2836
    %3162 = vmatpush.msra.mxu0 %v2834
    %3163 = vmatpush.msra.mxu0 %v2832
    %3164 = vmatpush.msra.mxu0 %v2830
    %3165 = vmatpush.msra.mxu0 %v2828
    %3166 = vmatpush.msra.mxu0 %v2826
    %3167 = vmatpush.msra.mxu0 %v2824
    %3168 = vmatpush.msra.mxu0 %v2822
    %3169 = vmatpush.msra.mxu0 %v2820
    %3170 = vmatpush.msra.mxu0 %v2818
    %3171 = vmatpush.msra.mxu0 %v2816
    %3172 = vmatpush.msra.mxu0 %v2814
    %3173 = vmatpush.msra.mxu0 %v2812
    %3174 = vmatpush.msra.mxu0 %v2810
    %3175 = vmatmul.f32.gmra.mxu0 %v2611
    %v3176 = vpop.f32.mrf.mxu0
    %v3177 = vadd.f32 %v3157, %v3176
    %3178 = vdwg.mxu0
    %3179 = vmatpush.msra.mxu0 %v2872
    %3180 = vmatpush.msra.mxu0 %v2870
    %3181 = vmatpush.msra.mxu0 %v2868
    %3182 = vmatpush.msra.mxu0 %v2866
    %3183 = vmatpush.msra.mxu0 %v2864
    %3184 = vmatpush.msra.mxu0 %v2862
    %3185 = vmatpush.msra.mxu0 %v2860
    %3186 = vmatpush.msra.mxu0 %v2858
    %3187 = vmatpush.msra.mxu0 %v2856
    %3188 = vmatpush.msra.mxu0 %v2854
    %3189 = vmatpush.msra.mxu0 %v2852
    %3190 = vmatpush.msra.mxu0 %v2850
    %3191 = vmatpush.msra.mxu0 %v2848
    %3192 = vmatpush.msra.mxu0 %v2846
    %3193 = vmatpush.msra.mxu0 %v2844
    %3194 = vmatpush.msra.mxu0 %v2842
    %3195 = vmatmul.f32.gmra.mxu0 %v2612
    %v3196 = vpop.f32.mrf.mxu0
    %v3197 = vadd.f32 %v3177, %v3196
    %3198 = vdwg.mxu0
    %v3199 = vtanh.pop %v3037
    %v3200 = vtanh.pop %v3197
    %3201 = vst [vmem:[#allocation32] sm:$0xff] %v3199
    %3202 = vst [vmem:[#allocation32 + $0x8] sm:$0xff] %v3200
    // Predicated region
    $region142: #{tpu_custom_call.1} parent=1 // pred_check
      _
    $region143: #{tpu_custom_call.1} parent=1 // pred_check_branch
      %3204 = sbr.rel (0) target = $region145
    $region144: #{tpu_custom_call.1} parent=1 // pred_region
      %3206 = vsyncadd [#allocation8], 0
      %s3208 = sshll.u32 [#allocation32], 4
      %s3209 = int_to_ptr.vmem [resolvable:$true] %s3208
      %s3210 = sshll.u32 %s19, 4
      %s3211 = int_to_ptr.hbm [resolvable:$true] %s3210
      %3213 = dma.vmem_to_hbm [thread:$0]  %s3209, 256, %s3211, [#allocation8]
    $region145: #{tpu_custom_call.1} parent=1 // pred_fallthru
      _
    // Predicated region
    $region146: #{tpu_custom_call.1} parent=1 // pred_check
      _
    $region147: #{tpu_custom_call.1} parent=1 // pred_check_branch
      %3215 = sbr.rel (0) target = $region149
    $region148: #{tpu_custom_call.1} parent=1 // pred_region
      %3217 = dma.done [#allocation8], 256
    $region149: #{tpu_custom_call.1} parent=1 // pred_fallthru
      _
    %3218 = vsyncpa [#allocation7], 1
    %3219 = vsyncpa [#allocation10], 1
    %3220 = vsyncpa [#allocation13], 1
    %3221 = vsyncpa [#allocation16], 1
    %3222 = vsyncpa [#allocation19], 1
    %3223 = vsyncpa [#allocation22], 1
    %3224 = vsyncpa [#allocation25], 1
    %3225 = vsyncpa [#allocation28], 1
    %3226 = vsyncpa [#allocation31], 1
    %3227 = vsyncpa [#allocation8], 1
  %3228 = vsyncmov [#allocation5]
  %s3229 = vpop.sfrf %3228
  %p3230 = scmp.eq.s32.totalorder %s3229, 0
  %p3231 = pneg %p3230
  %3233 = shalt.err (%p3231)
  %s3234 = scalar_lea.sflag [#allocation5], 1
  %3235 = vsyncmov %s3234
  %s3236 = vpop.sfrf %3235
  %p3237 = scmp.eq.s32.totalorder %s3236, 0
  %p3238 = pneg %p3237
  %3240 = shalt.err (%p3238)
  %s3241 = scalar_lea.sflag [#allocation5], 2
  %3242 = vsyncmov %s3241
  %s3243 = vpop.sfrf %3242
  %p3244 = scmp.eq.s32.totalorder %s3243, 0
  %p3245 = pneg %p3244
  %3247 = shalt.err (%p3245)

</llo_original>
